<compile_context>
chip_gen: v6e
topology: v6e:2x2x1
jax: 0.10.0
libtpu: 0.0.40
codegen_flags: <defaults>
</compile_context>

<pallas_src>
import jax
import jax.numpy as jnp
import numpy as np
from jax import lax
from jax.experimental import pallas as pl
from jax.experimental.pallas import tpu as pltpu


def _bilinear_matrix(out_size, in_size):
    """Row-interpolation matrix R (out, in): up = R @ src, torch bilinear,
    align_corners=False (modern F.upsample / F.interpolate default)."""
    if out_size == in_size:
        return np.eye(out_size, dtype=np.float64)
    scale = in_size / out_size
    dst = np.arange(out_size, dtype=np.float64)
    src = np.maximum((dst + 0.5) * scale - 0.5, 0.0)
    i0 = np.minimum(np.floor(src).astype(np.int64), in_size - 1)
    i1 = np.minimum(i0 + 1, in_size - 1)
    frac = src - i0
    R = np.zeros((out_size, in_size), dtype=np.float64)
    R[np.arange(out_size), i0] += 1.0 - frac
    R[np.arange(out_size), i1] += frac
    return R


def _m_decoder_kernel(xb_ref, xs_ref, rhb_ref, rwt_ref, mask_ref,
                      w1_ref, w2_ref, w3_ref, o_ref, pad_ref, col_ref):
    # xb_ref  : (1, Cb, H*W)        x_big, flattened spatial (lane dense)
    # xs_ref  : (1, Cx, h, w)       low-res input to be upsampled
    # rhb_ref : (Cx*H, Cx*h)        kron(I_Cx, R_h)   (f32)
    # rwt_ref : (w, W)              R_w^T             (f32)
    # mask_ref: (1, Lq)             1.0 where flat index maps to a valid column
    # w*_ref  : (Cout, 9*Cin)       conv weights, taps folded into contraction
    # o_ref   : (1, Cout, H*W)      output, flattened spatial (lane dense)
    # pad_ref : (Cw, Hp*Wp)         flat zero-padded activation scratch
    # col_ref : (9*Cw, Lq)          im2col scratch
    _, Cx, h, w_in = xs_ref.shape
    _, Cb, _ = xb_ref.shape
    Cout = o_ref.shape[1]
    W = rwt_ref.shape[1]
    H = rhb_ref.shape[0] // Cx
    Cin1 = Cb + Cx
    Wp = W + 2
    Lq = col_ref.shape[1]                      # == (H - 1) * Wp + W
    pdt = pad_ref.dtype

    # Zero the padded scratch once: this supplies the conv zero-padding ring for
    # every stage (interior positions are fully overwritten each stage).
    pad_ref[...] = jnp.zeros(pad_ref.shape, pdt)

    # ---- bilinear upsample of x to (Cx, H, W): two small MXU matmuls --------
    xs = xs_ref[0].astype(jnp.float32)                              # (Cx, h, w)
    t = jnp.dot(xs.reshape(Cx * h, w_in), rwt_ref[...],
                preferred_element_type=jnp.float32)                 # (Cx*h, W)
    up = jnp.dot(rhb_ref[...], t,
                 preferred_element_type=jnp.float32)                # (Cx*H, W)
    up = up.reshape(Cx, H, W)

    # ---- concat([x_big, upsample(x)], channel) into the padded scratch ------
    for i in range(H):
        s = (i + 1) * Wp + 1                                        # interior row i
        pad_ref[0:Cb, s:s + W] = xb_ref[0, :, i * W:(i + 1) * W].astype(pdt)
        pad_ref[Cb:Cin1, s:s + W] = up[:, i].astype(pdt)

    # ---- conv3x3 (no bias) + ReLU: taps folded into one im2col matmul -------
    def conv_stage(cin, w_ref):
        for tap in range(9):
            off = (tap // 3) * Wp + (tap % 3)
            col_ref[tap * cin:(tap + 1) * cin, :] = pad_ref[0:cin, off:off + Lq]
        y = jnp.dot(w_ref[...], col_ref[0:9 * cin, :],
                    preferred_element_type=jnp.float32)             # (Cout, Lq) f32
        return jnp.maximum(y, 0.0)

    # Stages 1 & 2: write back into the scratch interior as one lane-dense
    # store; the mask zeroes lanes that fall on padding columns.
    y = conv_stage(Cin1, w1_ref) * mask_ref[...]
    pad_ref[0:Cout, Wp + 1:Wp + 1 + Lq] = y.astype(pdt)
    y = conv_stage(Cout, w2_ref) * mask_ref[...]
    pad_ref[0:Cout, Wp + 1:Wp + 1 + Lq] = y.astype(pdt)

    # Stage 3: extract the valid W lanes of each row into the flat output.
    y = conv_stage(Cout, w3_ref)
    for i in range(H):
        o_ref[0, :, i * W:(i + 1) * W] = y[:, i * Wp:i * Wp + W].astype(o_ref.dtype)


def m_decoder_forward(x_big, x, w1, w2, w3, *, compute_dtype=jnp.float32):
    """M_Decoder.forward: upsample(x) -> cat([x_big, up]) -> 3x (conv3x3+ReLU)."""
    N, Cb, H, W = x_big.shape
    Nx, Cx, h, w = x.shape
    assert Nx == N
    Cout, Cin1 = w1.shape[0], w1.shape[1]
    assert Cin1 == Cb + Cx and w1.shape[2:] == (3, 3)
    assert w2.shape == (Cout, Cout, 3, 3) and w3.shape == (Cout, Cout, 3, 3)

    Hp, Wp = H + 2, W + 2
    Lq = (H - 1) * Wp + W
    Cw = max(Cin1, Cout)

    # Host-side constants (tiny): separable bilinear matrices + validity mask.
    Rh = _bilinear_matrix(H, h)
    Rw = _bilinear_matrix(W, w)
    rhb = jnp.asarray(np.kron(np.eye(Cx), Rh), dtype=jnp.float32)    # (Cx*H, Cx*h)
    rwt = jnp.asarray(Rw.T, dtype=jnp.float32)                       # (w, W)
    q = np.arange(Lq)
    mask = jnp.asarray(((q % Wp) < W).astype(np.float32)[None, :])   # (1, Lq)

    def flat_w(wt):
        co, ci = wt.shape[0], wt.shape[1]
        # (Cout, Cin, 3, 3) -> (Cout, 9*Cin), columns ordered tap-major.
        return jnp.transpose(wt, (0, 2, 3, 1)).reshape(co, 9 * ci).astype(compute_dtype)

    xb_flat = x_big.reshape(N, Cb, H * W).astype(compute_dtype)
    xs = x.astype(compute_dtype)
    w1f, w2f, w3f = flat_w(w1), flat_w(w2), flat_w(w3)

    itemsize = jnp.dtype(compute_dtype).itemsize
    flops_per_img = (2 * (Cx * h) * w * W + 2 * (Cx * H) * (Cx * h) * W
                     + 2 * Cout * 9 * Cin1 * Lq + 2 * 2 * Cout * 9 * Cout * Lq)
    bytes_accessed = int((xb_flat.size + xs.size
                          + w1f.size + w2f.size + w3f.size) * itemsize
                         + (rhb.size + rwt.size + mask.size) * 4
                         + N * Cout * H * W * 4)

    out_flat = pl.pallas_call(
        _m_decoder_kernel,
        out_shape=jax.ShapeDtypeStruct((N, Cout, H * W), jnp.float32),
        grid_spec=pltpu.PrefetchScalarGridSpec(
            num_scalar_prefetch=0,
            grid=(N,),
            in_specs=[
                pl.BlockSpec((1, Cb, H * W), lambda n: (n, 0, 0)),
                pl.BlockSpec((1, Cx, h, w), lambda n: (n, 0, 0, 0)),
                pl.BlockSpec((Cx * H, Cx * h), lambda n: (0, 0)),
                pl.BlockSpec((w, W), lambda n: (0, 0)),
                pl.BlockSpec((1, Lq), lambda n: (0, 0)),
                pl.BlockSpec((Cout, 9 * Cin1), lambda n: (0, 0)),
                pl.BlockSpec((Cout, 9 * Cout), lambda n: (0, 0)),
                pl.BlockSpec((Cout, 9 * Cout), lambda n: (0, 0)),
            ],
            out_specs=pl.BlockSpec((1, Cout, H * W), lambda n: (n, 0, 0)),
            scratch_shapes=[
                pltpu.VMEM((Cw, Hp * Wp), compute_dtype),
                pltpu.VMEM((9 * Cw, Lq), compute_dtype),
            ],
        ),
        compiler_params=pltpu.CompilerParams(dimension_semantics=("parallel",)),
        cost_estimate=pl.CostEstimate(flops=N * flops_per_img, transcendentals=0,
                                      bytes_accessed=bytes_accessed),
    )(xb_flat, xs, rhb, rwt, mask, w1f, w2f, w3f)

    # Free row-major reshape back to NCHW.
    return out_flat.reshape(N, Cout, H, W)


if __name__ == "__main__":
    # Small shapes consistent with M_Decoder.forward(x_big, x).
    N, Cbig, H, W = 2, 4, 16, 16
    Cx, h, w = 4, 8, 8
    Cout = 8
    Cin1 = Cbig + Cx

    key = jax.random.PRNGKey(0)
    k1, k2, k3, k4, k5 = jax.random.split(key, 5)
    x_big = jax.random.normal(k1, (N, Cbig, H, W), jnp.float32)
    x = jax.random.normal(k2, (N, Cx, h, w), jnp.float32)

    def init_w(k, co, ci):
        bound = 1.0 / np.sqrt(ci * 9)
        return jax.random.uniform(k, (co, ci, 3, 3), jnp.float32, -bound, bound)

    w1 = init_w(k3, Cout, Cin1)
    w2 = init_w(k4, Cout, Cout)
    w3 = init_w(k5, Cout, Cout)

    out = jax.block_until_ready(m_decoder_forward(x_big, x, w1, w2, w3))

    # Reference (plain XLA): bilinear upsample + concat + 3x conv3x3(+ReLU).
    Rh = jnp.asarray(_bilinear_matrix(H, h), jnp.float32)
    Rw = jnp.asarray(_bilinear_matrix(W, w), jnp.float32)
    up_ref = jnp.einsum("Hh,nchw,Ww->ncHW", Rh, x, Rw,
                        precision=lax.Precision.HIGHEST)
    z = jnp.concatenate([x_big, up_ref], axis=1)
    for wt in (w1, w2, w3):
        z = lax.conv_general_dilated(z, wt, (1, 1), ((1, 1), (1, 1)),
                                     dimension_numbers=("NCHW", "OIHW", "NCHW"),
                                     precision=lax.Precision.HIGHEST)
        z = jnp.maximum(z, 0.0)

    assert out.shape == (N, Cout, H, W)
    assert jnp.allclose(out, z, atol=5e-3, rtol=5e-3), "f32 kernel mismatch vs reference"

    # bf16 operand path (v6e/v7x MXU recommendation); accumulation stays f32.
    out_bf16 = jax.block_until_ready(
        m_decoder_forward(x_big, x, w1, w2, w3, compute_dtype=jnp.bfloat16))
    assert jnp.allclose(out_bf16, z, atol=5e-2, rtol=5e-2), "bf16 kernel mismatch vs reference"

    print("KERNEL_OK")
</pallas_src>

<mosaic_0001>
module attributes {stable_mosaic.version = 11 : i64} {
  func.func @_m_decoder_kernel(%arg0: i32, %arg1: memref<1x4x256xf32, #tpu.memory_space<vmem>>, %arg2: memref<1x4x8x8xf32, #tpu.memory_space<vmem>>, %arg3: memref<64x32xf32, #tpu.memory_space<vmem>>, %arg4: memref<8x16xf32, #tpu.memory_space<vmem>>, %arg5: memref<1x286xf32, #tpu.memory_space<vmem>>, %arg6: memref<8x72xf32, #tpu.memory_space<vmem>>, %arg7: memref<8x72xf32, #tpu.memory_space<vmem>>, %arg8: memref<8x72xf32, #tpu.memory_space<vmem>>, %arg9: memref<1x8x256xf32, #tpu.memory_space<vmem>>, %arg10: memref<8x324xf32, #tpu.memory_space<vmem>>, %arg11: memref<72x286xf32, #tpu.memory_space<vmem>>) attributes {dimension_semantics = [#tpu.dimension_semantics<parallel>], iteration_bounds = array<i64: 2>, scalar_prefetch = 0 : i64, scratch_operands = 2 : i64, tpu.core_type = #tpu.core_type<tc>, window_params = [{transform_indices = @transform_0, window_bounds = array<i64: 1, 4, 256>}, {transform_indices = @transform_1, window_bounds = array<i64: 1, 4, 8, 8>}, {pipeline_mode = #tpu.pipeline_mode<synchronous>, transform_indices = @transform_2, window_bounds = array<i64: 64, 32>}, {pipeline_mode = #tpu.pipeline_mode<synchronous>, transform_indices = @transform_3, window_bounds = array<i64: 8, 16>}, {pipeline_mode = #tpu.pipeline_mode<synchronous>, transform_indices = @transform_4, window_bounds = array<i64: 1, 286>}, {pipeline_mode = #tpu.pipeline_mode<synchronous>, transform_indices = @transform_5, window_bounds = array<i64: 8, 72>}, {pipeline_mode = #tpu.pipeline_mode<synchronous>, transform_indices = @transform_6, window_bounds = array<i64: 8, 72>}, {pipeline_mode = #tpu.pipeline_mode<synchronous>, transform_indices = @transform_7, window_bounds = array<i64: 8, 72>}, {transform_indices = @transform_8, window_bounds = array<i64: 1, 8, 256>}]} {
    %cst = arith.constant 0.000000e+00 : f32
    %0 = vector.broadcast %cst : f32 to vector<8x324xf32>
    %c0 = arith.constant 0 : index
    %c0_0 = arith.constant 0 : index
    %1 = vector.load %arg10[%c0, %c0_0] : memref<8x324xf32, #tpu.memory_space<vmem>>, vector<8x324xf32>
    tpu.vector_store %arg10[%c0, %c0_0], %0 {strides = array<i32>} : memref<8x324xf32, #tpu.memory_space<vmem>>, vector<8x324xf32>,
    %c0_1 = arith.constant 0 : index
    %c0_2 = arith.constant 0 : index
    %c0_3 = arith.constant 0 : index
    %c0_4 = arith.constant 0 : index
    %2 = vector.load %arg2[%c0_1, %c0_2, %c0_3, %c0_4] : memref<1x4x8x8xf32, #tpu.memory_space<vmem>>, vector<1x4x8x8xf32>
    %3 = vector.shape_cast %2 : vector<1x4x8x8xf32> to vector<4x8x8xf32>
    %4 = vector.shape_cast %3 : vector<4x8x8xf32> to vector<32x8xf32>
    %c0_5 = arith.constant 0 : index
    %c0_6 = arith.constant 0 : index
    %5 = vector.load %arg4[%c0_5, %c0_6] : memref<8x16xf32, #tpu.memory_space<vmem>>, vector<8x16xf32>
    %cst_7 = arith.constant dense<0.000000e+00> : vector<32x16xf32>
    %6 = tpu.matmul %4, %5, %cst_7 {dimension_numbers = #tpu.dot_dimension_numbers<[1], [0], [0], [1], [0, 0, 1, 1], [], []>} : vector<32x8xf32>, vector<8x16xf32>, vector<32x16xf32> -> vector<32x16xf32>
    %c0_8 = arith.constant 0 : index
    %c0_9 = arith.constant 0 : index
    %7 = vector.load %arg3[%c0_8, %c0_9] : memref<64x32xf32, #tpu.memory_space<vmem>>, vector<64x32xf32>
    %cst_10 = arith.constant dense<0.000000e+00> : vector<64x16xf32>
    %8 = tpu.matmul %7, %6, %cst_10 {dimension_numbers = #tpu.dot_dimension_numbers<[1], [0], [0], [1], [0, 0, 1, 1], [], []>} : vector<64x32xf32>, vector<32x16xf32>, vector<64x16xf32> -> vector<64x16xf32>
    %9 = vector.shape_cast %8 : vector<64x16xf32> to vector<4x16x16xf32>
    %c0_11 = arith.constant 0 : index
    %c0_12 = arith.constant 0 : index
    %c0_13 = arith.constant 0 : index
    %10 = vector.load %arg1[%c0_11, %c0_12, %c0_13] : memref<1x4x256xf32, #tpu.memory_space<vmem>>, vector<1x4x16xf32>
    %11 = vector.shape_cast %10 : vector<1x4x16xf32> to vector<4x16xf32>
    %c0_14 = arith.constant 0 : index
    %c19 = arith.constant 19 : index
    %12 = vector.load %arg10[%c0_14, %c19] : memref<8x324xf32, #tpu.memory_space<vmem>>, vector<4x16xf32>
    tpu.vector_store %arg10[%c0_14, %c19], %11 {strides = array<i32>} : memref<8x324xf32, #tpu.memory_space<vmem>>, vector<4x16xf32>,
    %13 = vector.extract_strided_slice %9 {offsets = [0, 0, 0], sizes = [4, 1, 16], strides = [1, 1, 1]} : vector<4x16x16xf32> to vector<4x1x16xf32>
    %14 = vector.shape_cast %13 : vector<4x1x16xf32> to vector<4x16xf32>
    %c4 = arith.constant 4 : index
    %c19_15 = arith.constant 19 : index
    %15 = vector.load %arg10[%c4, %c19_15] : memref<8x324xf32, #tpu.memory_space<vmem>>, vector<4x16xf32>
    tpu.vector_store %arg10[%c4, %c19_15], %14 {strides = array<i32>} : memref<8x324xf32, #tpu.memory_space<vmem>>, vector<4x16xf32>,
    %c0_16 = arith.constant 0 : index
    %c0_17 = arith.constant 0 : index
    %c16 = arith.constant 16 : index
    %16 = vector.load %arg1[%c0_16, %c0_17, %c16] : memref<1x4x256xf32, #tpu.memory_space<vmem>>, vector<1x4x16xf32>
    %17 = vector.shape_cast %16 : vector<1x4x16xf32> to vector<4x16xf32>
    %c0_18 = arith.constant 0 : index
    %c37 = arith.constant 37 : index
    %18 = vector.load %arg10[%c0_18, %c37] : memref<8x324xf32, #tpu.memory_space<vmem>>, vector<4x16xf32>
    tpu.vector_store %arg10[%c0_18, %c37], %17 {strides = array<i32>} : memref<8x324xf32, #tpu.memory_space<vmem>>, vector<4x16xf32>,
    %19 = vector.extract_strided_slice %9 {offsets = [0, 1, 0], sizes = [4, 1, 16], strides = [1, 1, 1]} : vector<4x16x16xf32> to vector<4x1x16xf32>
    %20 = vector.shape_cast %19 : vector<4x1x16xf32> to vector<4x16xf32>
    %c4_19 = arith.constant 4 : index
    %c37_20 = arith.constant 37 : index
    %21 = vector.load %arg10[%c4_19, %c37_20] : memref<8x324xf32, #tpu.memory_space<vmem>>, vector<4x16xf32>
    tpu.vector_store %arg10[%c4_19, %c37_20], %20 {strides = array<i32>} : memref<8x324xf32, #tpu.memory_space<vmem>>, vector<4x16xf32>,
    %c0_21 = arith.constant 0 : index
    %c0_22 = arith.constant 0 : index
    %c32 = arith.constant 32 : index
    %22 = vector.load %arg1[%c0_21, %c0_22, %c32] : memref<1x4x256xf32, #tpu.memory_space<vmem>>, vector<1x4x16xf32>
    %23 = vector.shape_cast %22 : vector<1x4x16xf32> to vector<4x16xf32>
    %c0_23 = arith.constant 0 : index
    %c55 = arith.constant 55 : index
    %24 = vector.load %arg10[%c0_23, %c55] : memref<8x324xf32, #tpu.memory_space<vmem>>, vector<4x16xf32>
    tpu.vector_store %arg10[%c0_23, %c55], %23 {strides = array<i32>} : memref<8x324xf32, #tpu.memory_space<vmem>>, vector<4x16xf32>,
    %25 = vector.extract_strided_slice %9 {offsets = [0, 2, 0], sizes = [4, 1, 16], strides = [1, 1, 1]} : vector<4x16x16xf32> to vector<4x1x16xf32>
    %26 = vector.shape_cast %25 : vector<4x1x16xf32> to vector<4x16xf32>
    %c4_24 = arith.constant 4 : index
    %c55_25 = arith.constant 55 : index
    %27 = vector.load %arg10[%c4_24, %c55_25] : memref<8x324xf32, #tpu.memory_space<vmem>>, vector<4x16xf32>
    tpu.vector_store %arg10[%c4_24, %c55_25], %26 {strides = array<i32>} : memref<8x324xf32, #tpu.memory_space<vmem>>, vector<4x16xf32>,
    %c0_26 = arith.constant 0 : index
    %c0_27 = arith.constant 0 : index
    %c48 = arith.constant 48 : index
    %28 = vector.load %arg1[%c0_26, %c0_27, %c48] : memref<1x4x256xf32, #tpu.memory_space<vmem>>, vector<1x4x16xf32>
    %29 = vector.shape_cast %28 : vector<1x4x16xf32> to vector<4x16xf32>
    %c0_28 = arith.constant 0 : index
    %c73 = arith.constant 73 : index
    %30 = vector.load %arg10[%c0_28, %c73] : memref<8x324xf32, #tpu.memory_space<vmem>>, vector<4x16xf32>
    tpu.vector_store %arg10[%c0_28, %c73], %29 {strides = array<i32>} : memref<8x324xf32, #tpu.memory_space<vmem>>, vector<4x16xf32>,
    %31 = vector.extract_strided_slice %9 {offsets = [0, 3, 0], sizes = [4, 1, 16], strides = [1, 1, 1]} : vector<4x16x16xf32> to vector<4x1x16xf32>
    %32 = vector.shape_cast %31 : vector<4x1x16xf32> to vector<4x16xf32>
    %c4_29 = arith.constant 4 : index
    %c73_30 = arith.constant 73 : index
    %33 = vector.load %arg10[%c4_29, %c73_30] : memref<8x324xf32, #tpu.memory_space<vmem>>, vector<4x16xf32>
    tpu.vector_store %arg10[%c4_29, %c73_30], %32 {strides = array<i32>} : memref<8x324xf32, #tpu.memory_space<vmem>>, vector<4x16xf32>,
    %c0_31 = arith.constant 0 : index
    %c0_32 = arith.constant 0 : index
    %c64 = arith.constant 64 : index
    %34 = vector.load %arg1[%c0_31, %c0_32, %c64] : memref<1x4x256xf32, #tpu.memory_space<vmem>>, vector<1x4x16xf32>
    %35 = vector.shape_cast %34 : vector<1x4x16xf32> to vector<4x16xf32>
    %c0_33 = arith.constant 0 : index
    %c91 = arith.constant 91 : index
    %36 = vector.load %arg10[%c0_33, %c91] : memref<8x324xf32, #tpu.memory_space<vmem>>, vector<4x16xf32>
    tpu.vector_store %arg10[%c0_33, %c91], %35 {strides = array<i32>} : memref<8x324xf32, #tpu.memory_space<vmem>>, vector<4x16xf32>,
    %37 = vector.extract_strided_slice %9 {offsets = [0, 4, 0], sizes = [4, 1, 16], strides = [1, 1, 1]} : vector<4x16x16xf32> to vector<4x1x16xf32>
    %38 = vector.shape_cast %37 : vector<4x1x16xf32> to vector<4x16xf32>
    %c4_34 = arith.constant 4 : index
    %c91_35 = arith.constant 91 : index
    %39 = vector.load %arg10[%c4_34, %c91_35] : memref<8x324xf32, #tpu.memory_space<vmem>>, vector<4x16xf32>
    tpu.vector_store %arg10[%c4_34, %c91_35], %38 {strides = array<i32>} : memref<8x324xf32, #tpu.memory_space<vmem>>, vector<4x16xf32>,
    %c0_36 = arith.constant 0 : index
    %c0_37 = arith.constant 0 : index
    %c80 = arith.constant 80 : index
    %40 = vector.load %arg1[%c0_36, %c0_37, %c80] : memref<1x4x256xf32, #tpu.memory_space<vmem>>, vector<1x4x16xf32>
    %41 = vector.shape_cast %40 : vector<1x4x16xf32> to vector<4x16xf32>
    %c0_38 = arith.constant 0 : index
    %c109 = arith.constant 109 : index
    %42 = vector.load %arg10[%c0_38, %c109] : memref<8x324xf32, #tpu.memory_space<vmem>>, vector<4x16xf32>
    tpu.vector_store %arg10[%c0_38, %c109], %41 {strides = array<i32>} : memref<8x324xf32, #tpu.memory_space<vmem>>, vector<4x16xf32>,
    %43 = vector.extract_strided_slice %9 {offsets = [0, 5, 0], sizes = [4, 1, 16], strides = [1, 1, 1]} : vector<4x16x16xf32> to vector<4x1x16xf32>
    %44 = vector.shape_cast %43 : vector<4x1x16xf32> to vector<4x16xf32>
    %c4_39 = arith.constant 4 : index
    %c109_40 = arith.constant 109 : index
    %45 = vector.load %arg10[%c4_39, %c109_40] : memref<8x324xf32, #tpu.memory_space<vmem>>, vector<4x16xf32>
    tpu.vector_store %arg10[%c4_39, %c109_40], %44 {strides = array<i32>} : memref<8x324xf32, #tpu.memory_space<vmem>>, vector<4x16xf32>,
    %c0_41 = arith.constant 0 : index
    %c0_42 = arith.constant 0 : index
    %c96 = arith.constant 96 : index
    %46 = vector.load %arg1[%c0_41, %c0_42, %c96] : memref<1x4x256xf32, #tpu.memory_space<vmem>>, vector<1x4x16xf32>
    %47 = vector.shape_cast %46 : vector<1x4x16xf32> to vector<4x16xf32>
    %c0_43 = arith.constant 0 : index
    %c127 = arith.constant 127 : index
    %48 = vector.load %arg10[%c0_43, %c127] : memref<8x324xf32, #tpu.memory_space<vmem>>, vector<4x16xf32>
    tpu.vector_store %arg10[%c0_43, %c127], %47 {strides = array<i32>} : memref<8x324xf32, #tpu.memory_space<vmem>>, vector<4x16xf32>,
    %49 = vector.extract_strided_slice %9 {offsets = [0, 6, 0], sizes = [4, 1, 16], strides = [1, 1, 1]} : vector<4x16x16xf32> to vector<4x1x16xf32>
    %50 = vector.shape_cast %49 : vector<4x1x16xf32> to vector<4x16xf32>
    %c4_44 = arith.constant 4 : index
    %c127_45 = arith.constant 127 : index
    %51 = vector.load %arg10[%c4_44, %c127_45] : memref<8x324xf32, #tpu.memory_space<vmem>>, vector<4x16xf32>
    tpu.vector_store %arg10[%c4_44, %c127_45], %50 {strides = array<i32>} : memref<8x324xf32, #tpu.memory_space<vmem>>, vector<4x16xf32>,
    %c0_46 = arith.constant 0 : index
    %c0_47 = arith.constant 0 : index
    %c112 = arith.constant 112 : index
    %52 = vector.load %arg1[%c0_46, %c0_47, %c112] : memref<1x4x256xf32, #tpu.memory_space<vmem>>, vector<1x4x16xf32>
    %53 = vector.shape_cast %52 : vector<1x4x16xf32> to vector<4x16xf32>
    %c0_48 = arith.constant 0 : index
    %c145 = arith.constant 145 : index
    %54 = vector.load %arg10[%c0_48, %c145] : memref<8x324xf32, #tpu.memory_space<vmem>>, vector<4x16xf32>
    tpu.vector_store %arg10[%c0_48, %c145], %53 {strides = array<i32>} : memref<8x324xf32, #tpu.memory_space<vmem>>, vector<4x16xf32>,
    %55 = vector.extract_strided_slice %9 {offsets = [0, 7, 0], sizes = [4, 1, 16], strides = [1, 1, 1]} : vector<4x16x16xf32> to vector<4x1x16xf32>
    %56 = vector.shape_cast %55 : vector<4x1x16xf32> to vector<4x16xf32>
    %c4_49 = arith.constant 4 : index
    %c145_50 = arith.constant 145 : index
    %57 = vector.load %arg10[%c4_49, %c145_50] : memref<8x324xf32, #tpu.memory_space<vmem>>, vector<4x16xf32>
    tpu.vector_store %arg10[%c4_49, %c145_50], %56 {strides = array<i32>} : memref<8x324xf32, #tpu.memory_space<vmem>>, vector<4x16xf32>,
    %c0_51 = arith.constant 0 : index
    %c0_52 = arith.constant 0 : index
    %c128 = arith.constant 128 : index
    %58 = vector.load %arg1[%c0_51, %c0_52, %c128] : memref<1x4x256xf32, #tpu.memory_space<vmem>>, vector<1x4x16xf32>
    %59 = vector.shape_cast %58 : vector<1x4x16xf32> to vector<4x16xf32>
    %c0_53 = arith.constant 0 : index
    %c163 = arith.constant 163 : index
    %60 = vector.load %arg10[%c0_53, %c163] : memref<8x324xf32, #tpu.memory_space<vmem>>, vector<4x16xf32>
    tpu.vector_store %arg10[%c0_53, %c163], %59 {strides = array<i32>} : memref<8x324xf32, #tpu.memory_space<vmem>>, vector<4x16xf32>,
    %61 = vector.extract_strided_slice %9 {offsets = [0, 8, 0], sizes = [4, 1, 16], strides = [1, 1, 1]} : vector<4x16x16xf32> to vector<4x1x16xf32>
    %62 = vector.shape_cast %61 : vector<4x1x16xf32> to vector<4x16xf32>
    %c4_54 = arith.constant 4 : index
    %c163_55 = arith.constant 163 : index
    %63 = vector.load %arg10[%c4_54, %c163_55] : memref<8x324xf32, #tpu.memory_space<vmem>>, vector<4x16xf32>
    tpu.vector_store %arg10[%c4_54, %c163_55], %62 {strides = array<i32>} : memref<8x324xf32, #tpu.memory_space<vmem>>, vector<4x16xf32>,
    %c0_56 = arith.constant 0 : index
    %c0_57 = arith.constant 0 : index
    %c144 = arith.constant 144 : index
    %64 = vector.load %arg1[%c0_56, %c0_57, %c144] : memref<1x4x256xf32, #tpu.memory_space<vmem>>, vector<1x4x16xf32>
    %65 = vector.shape_cast %64 : vector<1x4x16xf32> to vector<4x16xf32>
    %c0_58 = arith.constant 0 : index
    %c181 = arith.constant 181 : index
    %66 = vector.load %arg10[%c0_58, %c181] : memref<8x324xf32, #tpu.memory_space<vmem>>, vector<4x16xf32>
    tpu.vector_store %arg10[%c0_58, %c181], %65 {strides = array<i32>} : memref<8x324xf32, #tpu.memory_space<vmem>>, vector<4x16xf32>,
    %67 = vector.extract_strided_slice %9 {offsets = [0, 9, 0], sizes = [4, 1, 16], strides = [1, 1, 1]} : vector<4x16x16xf32> to vector<4x1x16xf32>
    %68 = vector.shape_cast %67 : vector<4x1x16xf32> to vector<4x16xf32>
    %c4_59 = arith.constant 4 : index
    %c181_60 = arith.constant 181 : index
    %69 = vector.load %arg10[%c4_59, %c181_60] : memref<8x324xf32, #tpu.memory_space<vmem>>, vector<4x16xf32>
    tpu.vector_store %arg10[%c4_59, %c181_60], %68 {strides = array<i32>} : memref<8x324xf32, #tpu.memory_space<vmem>>, vector<4x16xf32>,
    %c0_61 = arith.constant 0 : index
    %c0_62 = arith.constant 0 : index
    %c160 = arith.constant 160 : index
    %70 = vector.load %arg1[%c0_61, %c0_62, %c160] : memref<1x4x256xf32, #tpu.memory_space<vmem>>, vector<1x4x16xf32>
    %71 = vector.shape_cast %70 : vector<1x4x16xf32> to vector<4x16xf32>
    %c0_63 = arith.constant 0 : index
    %c199 = arith.constant 199 : index
    %72 = vector.load %arg10[%c0_63, %c199] : memref<8x324xf32, #tpu.memory_space<vmem>>, vector<4x16xf32>
    tpu.vector_store %arg10[%c0_63, %c199], %71 {strides = array<i32>} : memref<8x324xf32, #tpu.memory_space<vmem>>, vector<4x16xf32>,
    %73 = vector.extract_strided_slice %9 {offsets = [0, 10, 0], sizes = [4, 1, 16], strides = [1, 1, 1]} : vector<4x16x16xf32> to vector<4x1x16xf32>
    %74 = vector.shape_cast %73 : vector<4x1x16xf32> to vector<4x16xf32>
    %c4_64 = arith.constant 4 : index
    %c199_65 = arith.constant 199 : index
    %75 = vector.load %arg10[%c4_64, %c199_65] : memref<8x324xf32, #tpu.memory_space<vmem>>, vector<4x16xf32>
    tpu.vector_store %arg10[%c4_64, %c199_65], %74 {strides = array<i32>} : memref<8x324xf32, #tpu.memory_space<vmem>>, vector<4x16xf32>,
    %c0_66 = arith.constant 0 : index
    %c0_67 = arith.constant 0 : index
    %c176 = arith.constant 176 : index
    %76 = vector.load %arg1[%c0_66, %c0_67, %c176] : memref<1x4x256xf32, #tpu.memory_space<vmem>>, vector<1x4x16xf32>
    %77 = vector.shape_cast %76 : vector<1x4x16xf32> to vector<4x16xf32>
    %c0_68 = arith.constant 0 : index
    %c217 = arith.constant 217 : index
    %78 = vector.load %arg10[%c0_68, %c217] : memref<8x324xf32, #tpu.memory_space<vmem>>, vector<4x16xf32>
    tpu.vector_store %arg10[%c0_68, %c217], %77 {strides = array<i32>} : memref<8x324xf32, #tpu.memory_space<vmem>>, vector<4x16xf32>,
    %79 = vector.extract_strided_slice %9 {offsets = [0, 11, 0], sizes = [4, 1, 16], strides = [1, 1, 1]} : vector<4x16x16xf32> to vector<4x1x16xf32>
    %80 = vector.shape_cast %79 : vector<4x1x16xf32> to vector<4x16xf32>
    %c4_69 = arith.constant 4 : index
    %c217_70 = arith.constant 217 : index
    %81 = vector.load %arg10[%c4_69, %c217_70] : memref<8x324xf32, #tpu.memory_space<vmem>>, vector<4x16xf32>
    tpu.vector_store %arg10[%c4_69, %c217_70], %80 {strides = array<i32>} : memref<8x324xf32, #tpu.memory_space<vmem>>, vector<4x16xf32>,
    %c0_71 = arith.constant 0 : index
    %c0_72 = arith.constant 0 : index
    %c192 = arith.constant 192 : index
    %82 = vector.load %arg1[%c0_71, %c0_72, %c192] : memref<1x4x256xf32, #tpu.memory_space<vmem>>, vector<1x4x16xf32>
    %83 = vector.shape_cast %82 : vector<1x4x16xf32> to vector<4x16xf32>
    %c0_73 = arith.constant 0 : index
    %c235 = arith.constant 235 : index
    %84 = vector.load %arg10[%c0_73, %c235] : memref<8x324xf32, #tpu.memory_space<vmem>>, vector<4x16xf32>
    tpu.vector_store %arg10[%c0_73, %c235], %83 {strides = array<i32>} : memref<8x324xf32, #tpu.memory_space<vmem>>, vector<4x16xf32>,
    %85 = vector.extract_strided_slice %9 {offsets = [0, 12, 0], sizes = [4, 1, 16], strides = [1, 1, 1]} : vector<4x16x16xf32> to vector<4x1x16xf32>
    %86 = vector.shape_cast %85 : vector<4x1x16xf32> to vector<4x16xf32>
    %c4_74 = arith.constant 4 : index
    %c235_75 = arith.constant 235 : index
    %87 = vector.load %arg10[%c4_74, %c235_75] : memref<8x324xf32, #tpu.memory_space<vmem>>, vector<4x16xf32>
    tpu.vector_store %arg10[%c4_74, %c235_75], %86 {strides = array<i32>} : memref<8x324xf32, #tpu.memory_space<vmem>>, vector<4x16xf32>,
    %c0_76 = arith.constant 0 : index
    %c0_77 = arith.constant 0 : index
    %c208 = arith.constant 208 : index
    %88 = vector.load %arg1[%c0_76, %c0_77, %c208] : memref<1x4x256xf32, #tpu.memory_space<vmem>>, vector<1x4x16xf32>
    %89 = vector.shape_cast %88 : vector<1x4x16xf32> to vector<4x16xf32>
    %c0_78 = arith.constant 0 : index
    %c253 = arith.constant 253 : index
    %90 = vector.load %arg10[%c0_78, %c253] : memref<8x324xf32, #tpu.memory_space<vmem>>, vector<4x16xf32>
    tpu.vector_store %arg10[%c0_78, %c253], %89 {strides = array<i32>} : memref<8x324xf32, #tpu.memory_space<vmem>>, vector<4x16xf32>,
    %91 = vector.extract_strided_slice %9 {offsets = [0, 13, 0], sizes = [4, 1, 16], strides = [1, 1, 1]} : vector<4x16x16xf32> to vector<4x1x16xf32>
    %92 = vector.shape_cast %91 : vector<4x1x16xf32> to vector<4x16xf32>
    %c4_79 = arith.constant 4 : index
    %c253_80 = arith.constant 253 : index
    %93 = vector.load %arg10[%c4_79, %c253_80] : memref<8x324xf32, #tpu.memory_space<vmem>>, vector<4x16xf32>
    tpu.vector_store %arg10[%c4_79, %c253_80], %92 {strides = array<i32>} : memref<8x324xf32, #tpu.memory_space<vmem>>, vector<4x16xf32>,
    %c0_81 = arith.constant 0 : index
    %c0_82 = arith.constant 0 : index
    %c224 = arith.constant 224 : index
    %94 = vector.load %arg1[%c0_81, %c0_82, %c224] : memref<1x4x256xf32, #tpu.memory_space<vmem>>, vector<1x4x16xf32>
    %95 = vector.shape_cast %94 : vector<1x4x16xf32> to vector<4x16xf32>
    %c0_83 = arith.constant 0 : index
    %c271 = arith.constant 271 : index
    %96 = vector.load %arg10[%c0_83, %c271] : memref<8x324xf32, #tpu.memory_space<vmem>>, vector<4x16xf32>
    tpu.vector_store %arg10[%c0_83, %c271], %95 {strides = array<i32>} : memref<8x324xf32, #tpu.memory_space<vmem>>, vector<4x16xf32>,
    %97 = vector.extract_strided_slice %9 {offsets = [0, 14, 0], sizes = [4, 1, 16], strides = [1, 1, 1]} : vector<4x16x16xf32> to vector<4x1x16xf32>
    %98 = vector.shape_cast %97 : vector<4x1x16xf32> to vector<4x16xf32>
    %c4_84 = arith.constant 4 : index
    %c271_85 = arith.constant 271 : index
    %99 = vector.load %arg10[%c4_84, %c271_85] : memref<8x324xf32, #tpu.memory_space<vmem>>, vector<4x16xf32>
    tpu.vector_store %arg10[%c4_84, %c271_85], %98 {strides = array<i32>} : memref<8x324xf32, #tpu.memory_space<vmem>>, vector<4x16xf32>,
    %c0_86 = arith.constant 0 : index
    %c0_87 = arith.constant 0 : index
    %c240 = arith.constant 240 : index
    %100 = vector.load %arg1[%c0_86, %c0_87, %c240] : memref<1x4x256xf32, #tpu.memory_space<vmem>>, vector<1x4x16xf32>
    %101 = vector.shape_cast %100 : vector<1x4x16xf32> to vector<4x16xf32>
    %c0_88 = arith.constant 0 : index
    %c289 = arith.constant 289 : index
    %102 = vector.load %arg10[%c0_88, %c289] : memref<8x324xf32, #tpu.memory_space<vmem>>, vector<4x16xf32>
    tpu.vector_store %arg10[%c0_88, %c289], %101 {strides = array<i32>} : memref<8x324xf32, #tpu.memory_space<vmem>>, vector<4x16xf32>,
    %103 = vector.extract_strided_slice %9 {offsets = [0, 15, 0], sizes = [4, 1, 16], strides = [1, 1, 1]} : vector<4x16x16xf32> to vector<4x1x16xf32>
    %104 = vector.shape_cast %103 : vector<4x1x16xf32> to vector<4x16xf32>
    %c4_89 = arith.constant 4 : index
    %c289_90 = arith.constant 289 : index
    %105 = vector.load %arg10[%c4_89, %c289_90] : memref<8x324xf32, #tpu.memory_space<vmem>>, vector<4x16xf32>
    tpu.vector_store %arg10[%c4_89, %c289_90], %104 {strides = array<i32>} : memref<8x324xf32, #tpu.memory_space<vmem>>, vector<4x16xf32>,
    %c0_91 = arith.constant 0 : index
    %c0_92 = arith.constant 0 : index
    %106 = vector.load %arg10[%c0_91, %c0_92] : memref<8x324xf32, #tpu.memory_space<vmem>>, vector<8x286xf32>
    %c0_93 = arith.constant 0 : index
    %c0_94 = arith.constant 0 : index
    %107 = vector.load %arg11[%c0_93, %c0_94] : memref<72x286xf32, #tpu.memory_space<vmem>>, vector<8x286xf32>
    tpu.vector_store %arg11[%c0_93, %c0_94], %106 {strides = array<i32>} : memref<72x286xf32, #tpu.memory_space<vmem>>, vector<8x286xf32>,
    %c0_95 = arith.constant 0 : index
    %c1 = arith.constant 1 : index
    %108 = vector.load %arg10[%c0_95, %c1] : memref<8x324xf32, #tpu.memory_space<vmem>>, vector<8x286xf32>
    %c8 = arith.constant 8 : index
    %c0_96 = arith.constant 0 : index
    %109 = vector.load %arg11[%c8, %c0_96] : memref<72x286xf32, #tpu.memory_space<vmem>>, vector<8x286xf32>
    tpu.vector_store %arg11[%c8, %c0_96], %108 {strides = array<i32>} : memref<72x286xf32, #tpu.memory_space<vmem>>, vector<8x286xf32>,
    %c0_97 = arith.constant 0 : index
    %c2 = arith.constant 2 : index
    %110 = vector.load %arg10[%c0_97, %c2] : memref<8x324xf32, #tpu.memory_space<vmem>>, vector<8x286xf32>
    %c16_98 = arith.constant 16 : index
    %c0_99 = arith.constant 0 : index
    %111 = vector.load %arg11[%c16_98, %c0_99] : memref<72x286xf32, #tpu.memory_space<vmem>>, vector<8x286xf32>
    tpu.vector_store %arg11[%c16_98, %c0_99], %110 {strides = array<i32>} : memref<72x286xf32, #tpu.memory_space<vmem>>, vector<8x286xf32>,
    %c0_100 = arith.constant 0 : index
    %c18 = arith.constant 18 : index
    %112 = vector.load %arg10[%c0_100, %c18] : memref<8x324xf32, #tpu.memory_space<vmem>>, vector<8x286xf32>
    %c24 = arith.constant 24 : index
    %c0_101 = arith.constant 0 : index
    %113 = vector.load %arg11[%c24, %c0_101] : memref<72x286xf32, #tpu.memory_space<vmem>>, vector<8x286xf32>
    tpu.vector_store %arg11[%c24, %c0_101], %112 {strides = array<i32>} : memref<72x286xf32, #tpu.memory_space<vmem>>, vector<8x286xf32>,
    %c0_102 = arith.constant 0 : index
    %c19_103 = arith.constant 19 : index
    %114 = vector.load %arg10[%c0_102, %c19_103] : memref<8x324xf32, #tpu.memory_space<vmem>>, vector<8x286xf32>
    %c32_104 = arith.constant 32 : index
    %c0_105 = arith.constant 0 : index
    %115 = vector.load %arg11[%c32_104, %c0_105] : memref<72x286xf32, #tpu.memory_space<vmem>>, vector<8x286xf32>
    tpu.vector_store %arg11[%c32_104, %c0_105], %114 {strides = array<i32>} : memref<72x286xf32, #tpu.memory_space<vmem>>, vector<8x286xf32>,
    %c0_106 = arith.constant 0 : index
    %c20 = arith.constant 20 : index
    %116 = vector.load %arg10[%c0_106, %c20] : memref<8x324xf32, #tpu.memory_space<vmem>>, vector<8x286xf32>
    %c40 = arith.constant 40 : index
    %c0_107 = arith.constant 0 : index
    %117 = vector.load %arg11[%c40, %c0_107] : memref<72x286xf32, #tpu.memory_space<vmem>>, vector<8x286xf32>
    tpu.vector_store %arg11[%c40, %c0_107], %116 {strides = array<i32>} : memref<72x286xf32, #tpu.memory_space<vmem>>, vector<8x286xf32>,
    %c0_108 = arith.constant 0 : index
    %c36 = arith.constant 36 : index
    %118 = vector.load %arg10[%c0_108, %c36] : memref<8x324xf32, #tpu.memory_space<vmem>>, vector<8x286xf32>
    %c48_109 = arith.constant 48 : index
    %c0_110 = arith.constant 0 : index
    %119 = vector.load %arg11[%c48_109, %c0_110] : memref<72x286xf32, #tpu.memory_space<vmem>>, vector<8x286xf32>
    tpu.vector_store %arg11[%c48_109, %c0_110], %118 {strides = array<i32>} : memref<72x286xf32, #tpu.memory_space<vmem>>, vector<8x286xf32>,
    %c0_111 = arith.constant 0 : index
    %c37_112 = arith.constant 37 : index
    %120 = vector.load %arg10[%c0_111, %c37_112] : memref<8x324xf32, #tpu.memory_space<vmem>>, vector<8x286xf32>
    %c56 = arith.constant 56 : index
    %c0_113 = arith.constant 0 : index
    %121 = vector.load %arg11[%c56, %c0_113] : memref<72x286xf32, #tpu.memory_space<vmem>>, vector<8x286xf32>
    tpu.vector_store %arg11[%c56, %c0_113], %120 {strides = array<i32>} : memref<72x286xf32, #tpu.memory_space<vmem>>, vector<8x286xf32>,
    %c0_114 = arith.constant 0 : index
    %c38 = arith.constant 38 : index
    %122 = vector.load %arg10[%c0_114, %c38] : memref<8x324xf32, #tpu.memory_space<vmem>>, vector<8x286xf32>
    %c64_115 = arith.constant 64 : index
    %c0_116 = arith.constant 0 : index
    %123 = vector.load %arg11[%c64_115, %c0_116] : memref<72x286xf32, #tpu.memory_space<vmem>>, vector<8x286xf32>
    tpu.vector_store %arg11[%c64_115, %c0_116], %122 {strides = array<i32>} : memref<72x286xf32, #tpu.memory_space<vmem>>, vector<8x286xf32>,
    %c0_117 = arith.constant 0 : index
    %c0_118 = arith.constant 0 : index
    %124 = vector.load %arg6[%c0_117, %c0_118] : memref<8x72xf32, #tpu.memory_space<vmem>>, vector<8x72xf32>
    %c0_119 = arith.constant 0 : index
    %c0_120 = arith.constant 0 : index
    %125 = vector.load %arg11[%c0_119, %c0_120] : memref<72x286xf32, #tpu.memory_space<vmem>>, vector<72x286xf32>
    %cst_121 = arith.constant dense<0.000000e+00> : vector<8x286xf32>
    %126 = tpu.matmul %124, %125, %cst_121 {dimension_numbers = #tpu.dot_dimension_numbers<[1], [0], [0], [1], [0, 0, 1, 1], [], []>} : vector<8x72xf32>, vector<72x286xf32>, vector<8x286xf32> -> vector<8x286xf32>
    %cst_122 = arith.constant 0.000000e+00 : f32
    %127 = vector.broadcast %cst_122 : f32 to vector<8x286xf32>
    %128 = arith.maximumf %126, %127 : vector<8x286xf32>
    %c0_123 = arith.constant 0 : index
    %c0_124 = arith.constant 0 : index
    %129 = vector.load %arg5[%c0_123, %c0_124] : memref<1x286xf32, #tpu.memory_space<vmem>>, vector<1x286xf32>
    %130 = vector.broadcast %129 : vector<1x286xf32> to vector<8x286xf32>
    %131 = arith.mulf %128, %130 : vector<8x286xf32>
    %c0_125 = arith.constant 0 : index
    %c19_126 = arith.constant 19 : index
    %132 = vector.load %arg10[%c0_125, %c19_126] : memref<8x324xf32, #tpu.memory_space<vmem>>, vector<8x286xf32>
    tpu.vector_store %arg10[%c0_125, %c19_126], %131 {strides = array<i32>} : memref<8x324xf32, #tpu.memory_space<vmem>>, vector<8x286xf32>,
    %c0_127 = arith.constant 0 : index
    %c0_128 = arith.constant 0 : index
    %133 = vector.load %arg10[%c0_127, %c0_128] : memref<8x324xf32, #tpu.memory_space<vmem>>, vector<8x286xf32>
    %c0_129 = arith.constant 0 : index
    %c0_130 = arith.constant 0 : index
    %134 = vector.load %arg11[%c0_129, %c0_130] : memref<72x286xf32, #tpu.memory_space<vmem>>, vector<8x286xf32>
    tpu.vector_store %arg11[%c0_129, %c0_130], %133 {strides = array<i32>} : memref<72x286xf32, #tpu.memory_space<vmem>>, vector<8x286xf32>,
    %c0_131 = arith.constant 0 : index
    %c1_132 = arith.constant 1 : index
    %135 = vector.load %arg10[%c0_131, %c1_132] : memref<8x324xf32, #tpu.memory_space<vmem>>, vector<8x286xf32>
    %c8_133 = arith.constant 8 : index
    %c0_134 = arith.constant 0 : index
    %136 = vector.load %arg11[%c8_133, %c0_134] : memref<72x286xf32, #tpu.memory_space<vmem>>, vector<8x286xf32>
    tpu.vector_store %arg11[%c8_133, %c0_134], %135 {strides = array<i32>} : memref<72x286xf32, #tpu.memory_space<vmem>>, vector<8x286xf32>,
    %c0_135 = arith.constant 0 : index
    %c2_136 = arith.constant 2 : index
    %137 = vector.load %arg10[%c0_135, %c2_136] : memref<8x324xf32, #tpu.memory_space<vmem>>, vector<8x286xf32>
    %c16_137 = arith.constant 16 : index
    %c0_138 = arith.constant 0 : index
    %138 = vector.load %arg11[%c16_137, %c0_138] : memref<72x286xf32, #tpu.memory_space<vmem>>, vector<8x286xf32>
    tpu.vector_store %arg11[%c16_137, %c0_138], %137 {strides = array<i32>} : memref<72x286xf32, #tpu.memory_space<vmem>>, vector<8x286xf32>,
    %c0_139 = arith.constant 0 : index
    %c18_140 = arith.constant 18 : index
    %139 = vector.load %arg10[%c0_139, %c18_140] : memref<8x324xf32, #tpu.memory_space<vmem>>, vector<8x286xf32>
    %c24_141 = arith.constant 24 : index
    %c0_142 = arith.constant 0 : index
    %140 = vector.load %arg11[%c24_141, %c0_142] : memref<72x286xf32, #tpu.memory_space<vmem>>, vector<8x286xf32>
    tpu.vector_store %arg11[%c24_141, %c0_142], %139 {strides = array<i32>} : memref<72x286xf32, #tpu.memory_space<vmem>>, vector<8x286xf32>,
    %c0_143 = arith.constant 0 : index
    %c19_144 = arith.constant 19 : index
    %141 = vector.load %arg10[%c0_143, %c19_144] : memref<8x324xf32, #tpu.memory_space<vmem>>, vector<8x286xf32>
    %c32_145 = arith.constant 32 : index
    %c0_146 = arith.constant 0 : index
    %142 = vector.load %arg11[%c32_145, %c0_146] : memref<72x286xf32, #tpu.memory_space<vmem>>, vector<8x286xf32>
    tpu.vector_store %arg11[%c32_145, %c0_146], %141 {strides = array<i32>} : memref<72x286xf32, #tpu.memory_space<vmem>>, vector<8x286xf32>,
    %c0_147 = arith.constant 0 : index
    %c20_148 = arith.constant 20 : index
    %143 = vector.load %arg10[%c0_147, %c20_148] : memref<8x324xf32, #tpu.memory_space<vmem>>, vector<8x286xf32>
    %c40_149 = arith.constant 40 : index
    %c0_150 = arith.constant 0 : index
    %144 = vector.load %arg11[%c40_149, %c0_150] : memref<72x286xf32, #tpu.memory_space<vmem>>, vector<8x286xf32>
    tpu.vector_store %arg11[%c40_149, %c0_150], %143 {strides = array<i32>} : memref<72x286xf32, #tpu.memory_space<vmem>>, vector<8x286xf32>,
    %c0_151 = arith.constant 0 : index
    %c36_152 = arith.constant 36 : index
    %145 = vector.load %arg10[%c0_151, %c36_152] : memref<8x324xf32, #tpu.memory_space<vmem>>, vector<8x286xf32>
    %c48_153 = arith.constant 48 : index
    %c0_154 = arith.constant 0 : index
    %146 = vector.load %arg11[%c48_153, %c0_154] : memref<72x286xf32, #tpu.memory_space<vmem>>, vector<8x286xf32>
    tpu.vector_store %arg11[%c48_153, %c0_154], %145 {strides = array<i32>} : memref<72x286xf32, #tpu.memory_space<vmem>>, vector<8x286xf32>,
    %c0_155 = arith.constant 0 : index
    %c37_156 = arith.constant 37 : index
    %147 = vector.load %arg10[%c0_155, %c37_156] : memref<8x324xf32, #tpu.memory_space<vmem>>, vector<8x286xf32>
    %c56_157 = arith.constant 56 : index
    %c0_158 = arith.constant 0 : index
    %148 = vector.load %arg11[%c56_157, %c0_158] : memref<72x286xf32, #tpu.memory_space<vmem>>, vector<8x286xf32>
    tpu.vector_store %arg11[%c56_157, %c0_158], %147 {strides = array<i32>} : memref<72x286xf32, #tpu.memory_space<vmem>>, vector<8x286xf32>,
    %c0_159 = arith.constant 0 : index
    %c38_160 = arith.constant 38 : index
    %149 = vector.load %arg10[%c0_159, %c38_160] : memref<8x324xf32, #tpu.memory_space<vmem>>, vector<8x286xf32>
    %c64_161 = arith.constant 64 : index
    %c0_162 = arith.constant 0 : index
    %150 = vector.load %arg11[%c64_161, %c0_162] : memref<72x286xf32, #tpu.memory_space<vmem>>, vector<8x286xf32>
    tpu.vector_store %arg11[%c64_161, %c0_162], %149 {strides = array<i32>} : memref<72x286xf32, #tpu.memory_space<vmem>>, vector<8x286xf32>,
    %c0_163 = arith.constant 0 : index
    %c0_164 = arith.constant 0 : index
    %151 = vector.load %arg7[%c0_163, %c0_164] : memref<8x72xf32, #tpu.memory_space<vmem>>, vector<8x72xf32>
    %c0_165 = arith.constant 0 : index
    %c0_166 = arith.constant 0 : index
    %152 = vector.load %arg11[%c0_165, %c0_166] : memref<72x286xf32, #tpu.memory_space<vmem>>, vector<72x286xf32>
    %cst_167 = arith.constant dense<0.000000e+00> : vector<8x286xf32>
    %153 = tpu.matmul %151, %152, %cst_167 {dimension_numbers = #tpu.dot_dimension_numbers<[1], [0], [0], [1], [0, 0, 1, 1], [], []>} : vector<8x72xf32>, vector<72x286xf32>, vector<8x286xf32> -> vector<8x286xf32>
    %cst_168 = arith.constant 0.000000e+00 : f32
    %154 = vector.broadcast %cst_168 : f32 to vector<8x286xf32>
    %155 = arith.maximumf %153, %154 : vector<8x286xf32>
    %c0_169 = arith.constant 0 : index
    %c0_170 = arith.constant 0 : index
    %156 = vector.load %arg5[%c0_169, %c0_170] : memref<1x286xf32, #tpu.memory_space<vmem>>, vector<1x286xf32>
    %157 = vector.broadcast %156 : vector<1x286xf32> to vector<8x286xf32>
    %158 = arith.mulf %155, %157 : vector<8x286xf32>
    %c0_171 = arith.constant 0 : index
    %c19_172 = arith.constant 19 : index
    %159 = vector.load %arg10[%c0_171, %c19_172] : memref<8x324xf32, #tpu.memory_space<vmem>>, vector<8x286xf32>
    tpu.vector_store %arg10[%c0_171, %c19_172], %158 {strides = array<i32>} : memref<8x324xf32, #tpu.memory_space<vmem>>, vector<8x286xf32>,
    %c0_173 = arith.constant 0 : index
    %c0_174 = arith.constant 0 : index
    %160 = vector.load %arg10[%c0_173, %c0_174] : memref<8x324xf32, #tpu.memory_space<vmem>>, vector<8x286xf32>
    %c0_175 = arith.constant 0 : index
    %c0_176 = arith.constant 0 : index
    %161 = vector.load %arg11[%c0_175, %c0_176] : memref<72x286xf32, #tpu.memory_space<vmem>>, vector<8x286xf32>
    tpu.vector_store %arg11[%c0_175, %c0_176], %160 {strides = array<i32>} : memref<72x286xf32, #tpu.memory_space<vmem>>, vector<8x286xf32>,
    %c0_177 = arith.constant 0 : index
    %c1_178 = arith.constant 1 : index
    %162 = vector.load %arg10[%c0_177, %c1_178] : memref<8x324xf32, #tpu.memory_space<vmem>>, vector<8x286xf32>
    %c8_179 = arith.constant 8 : index
    %c0_180 = arith.constant 0 : index
    %163 = vector.load %arg11[%c8_179, %c0_180] : memref<72x286xf32, #tpu.memory_space<vmem>>, vector<8x286xf32>
    tpu.vector_store %arg11[%c8_179, %c0_180], %162 {strides = array<i32>} : memref<72x286xf32, #tpu.memory_space<vmem>>, vector<8x286xf32>,
    %c0_181 = arith.constant 0 : index
    %c2_182 = arith.constant 2 : index
    %164 = vector.load %arg10[%c0_181, %c2_182] : memref<8x324xf32, #tpu.memory_space<vmem>>, vector<8x286xf32>
    %c16_183 = arith.constant 16 : index
    %c0_184 = arith.constant 0 : index
    %165 = vector.load %arg11[%c16_183, %c0_184] : memref<72x286xf32, #tpu.memory_space<vmem>>, vector<8x286xf32>
    tpu.vector_store %arg11[%c16_183, %c0_184], %164 {strides = array<i32>} : memref<72x286xf32, #tpu.memory_space<vmem>>, vector<8x286xf32>,
    %c0_185 = arith.constant 0 : index
    %c18_186 = arith.constant 18 : index
    %166 = vector.load %arg10[%c0_185, %c18_186] : memref<8x324xf32, #tpu.memory_space<vmem>>, vector<8x286xf32>
    %c24_187 = arith.constant 24 : index
    %c0_188 = arith.constant 0 : index
    %167 = vector.load %arg11[%c24_187, %c0_188] : memref<72x286xf32, #tpu.memory_space<vmem>>, vector<8x286xf32>
    tpu.vector_store %arg11[%c24_187, %c0_188], %166 {strides = array<i32>} : memref<72x286xf32, #tpu.memory_space<vmem>>, vector<8x286xf32>,
    %c0_189 = arith.constant 0 : index
    %c19_190 = arith.constant 19 : index
    %168 = vector.load %arg10[%c0_189, %c19_190] : memref<8x324xf32, #tpu.memory_space<vmem>>, vector<8x286xf32>
    %c32_191 = arith.constant 32 : index
    %c0_192 = arith.constant 0 : index
    %169 = vector.load %arg11[%c32_191, %c0_192] : memref<72x286xf32, #tpu.memory_space<vmem>>, vector<8x286xf32>
    tpu.vector_store %arg11[%c32_191, %c0_192], %168 {strides = array<i32>} : memref<72x286xf32, #tpu.memory_space<vmem>>, vector<8x286xf32>,
    %c0_193 = arith.constant 0 : index
    %c20_194 = arith.constant 20 : index
    %170 = vector.load %arg10[%c0_193, %c20_194] : memref<8x324xf32, #tpu.memory_space<vmem>>, vector<8x286xf32>
    %c40_195 = arith.constant 40 : index
    %c0_196 = arith.constant 0 : index
    %171 = vector.load %arg11[%c40_195, %c0_196] : memref<72x286xf32, #tpu.memory_space<vmem>>, vector<8x286xf32>
    tpu.vector_store %arg11[%c40_195, %c0_196], %170 {strides = array<i32>} : memref<72x286xf32, #tpu.memory_space<vmem>>, vector<8x286xf32>,
    %c0_197 = arith.constant 0 : index
    %c36_198 = arith.constant 36 : index
    %172 = vector.load %arg10[%c0_197, %c36_198] : memref<8x324xf32, #tpu.memory_space<vmem>>, vector<8x286xf32>
    %c48_199 = arith.constant 48 : index
    %c0_200 = arith.constant 0 : index
    %173 = vector.load %arg11[%c48_199, %c0_200] : memref<72x286xf32, #tpu.memory_space<vmem>>, vector<8x286xf32>
    tpu.vector_store %arg11[%c48_199, %c0_200], %172 {strides = array<i32>} : memref<72x286xf32, #tpu.memory_space<vmem>>, vector<8x286xf32>,
    %c0_201 = arith.constant 0 : index
    %c37_202 = arith.constant 37 : index
    %174 = vector.load %arg10[%c0_201, %c37_202] : memref<8x324xf32, #tpu.memory_space<vmem>>, vector<8x286xf32>
    %c56_203 = arith.constant 56 : index
    %c0_204 = arith.constant 0 : index
    %175 = vector.load %arg11[%c56_203, %c0_204] : memref<72x286xf32, #tpu.memory_space<vmem>>, vector<8x286xf32>
    tpu.vector_store %arg11[%c56_203, %c0_204], %174 {strides = array<i32>} : memref<72x286xf32, #tpu.memory_space<vmem>>, vector<8x286xf32>,
    %c0_205 = arith.constant 0 : index
    %c38_206 = arith.constant 38 : index
    %176 = vector.load %arg10[%c0_205, %c38_206] : memref<8x324xf32, #tpu.memory_space<vmem>>, vector<8x286xf32>
    %c64_207 = arith.constant 64 : index
    %c0_208 = arith.constant 0 : index
    %177 = vector.load %arg11[%c64_207, %c0_208] : memref<72x286xf32, #tpu.memory_space<vmem>>, vector<8x286xf32>
    tpu.vector_store %arg11[%c64_207, %c0_208], %176 {strides = array<i32>} : memref<72x286xf32, #tpu.memory_space<vmem>>, vector<8x286xf32>,
    %c0_209 = arith.constant 0 : index
    %c0_210 = arith.constant 0 : index
    %178 = vector.load %arg8[%c0_209, %c0_210] : memref<8x72xf32, #tpu.memory_space<vmem>>, vector<8x72xf32>
    %c0_211 = arith.constant 0 : index
    %c0_212 = arith.constant 0 : index
    %179 = vector.load %arg11[%c0_211, %c0_212] : memref<72x286xf32, #tpu.memory_space<vmem>>, vector<72x286xf32>
    %cst_213 = arith.constant dense<0.000000e+00> : vector<8x286xf32>
    %180 = tpu.matmul %178, %179, %cst_213 {dimension_numbers = #tpu.dot_dimension_numbers<[1], [0], [0], [1], [0, 0, 1, 1], [], []>} : vector<8x72xf32>, vector<72x286xf32>, vector<8x286xf32> -> vector<8x286xf32>
    %cst_214 = arith.constant 0.000000e+00 : f32
    %181 = vector.broadcast %cst_214 : f32 to vector<8x286xf32>
    %182 = arith.maximumf %180, %181 : vector<8x286xf32>
    %183 = vector.extract_strided_slice %182 {offsets = [0, 0], sizes = [8, 16], strides = [1, 1]} : vector<8x286xf32> to vector<8x16xf32>
    %c0_215 = arith.constant 0 : index
    %c0_216 = arith.constant 0 : index
    %c0_217 = arith.constant 0 : index
    %184 = vector.load %arg9[%c0_215, %c0_216, %c0_217] : memref<1x8x256xf32, #tpu.memory_space<vmem>>, vector<1x8x16xf32>
    %185 = vector.shape_cast %184 : vector<1x8x16xf32> to vector<8x16xf32>
    %186 = vector.shape_cast %183 : vector<8x16xf32> to vector<1x8x16xf32>
    tpu.vector_store %arg9[%c0_215, %c0_216, %c0_217], %186 {strides = array<i32>} : memref<1x8x256xf32, #tpu.memory_space<vmem>>, vector<1x8x16xf32>,
    %187 = vector.extract_strided_slice %182 {offsets = [0, 18], sizes = [8, 16], strides = [1, 1]} : vector<8x286xf32> to vector<8x16xf32>
    %c0_218 = arith.constant 0 : index
    %c0_219 = arith.constant 0 : index
    %c16_220 = arith.constant 16 : index
    %188 = vector.load %arg9[%c0_218, %c0_219, %c16_220] : memref<1x8x256xf32, #tpu.memory_space<vmem>>, vector<1x8x16xf32>
    %189 = vector.shape_cast %188 : vector<1x8x16xf32> to vector<8x16xf32>
    %190 = vector.shape_cast %187 : vector<8x16xf32> to vector<1x8x16xf32>
    tpu.vector_store %arg9[%c0_218, %c0_219, %c16_220], %190 {strides = array<i32>} : memref<1x8x256xf32, #tpu.memory_space<vmem>>, vector<1x8x16xf32>,
    %191 = vector.extract_strided_slice %182 {offsets = [0, 36], sizes = [8, 16], strides = [1, 1]} : vector<8x286xf32> to vector<8x16xf32>
    %c0_221 = arith.constant 0 : index
    %c0_222 = arith.constant 0 : index
    %c32_223 = arith.constant 32 : index
    %192 = vector.load %arg9[%c0_221, %c0_222, %c32_223] : memref<1x8x256xf32, #tpu.memory_space<vmem>>, vector<1x8x16xf32>
    %193 = vector.shape_cast %192 : vector<1x8x16xf32> to vector<8x16xf32>
    %194 = vector.shape_cast %191 : vector<8x16xf32> to vector<1x8x16xf32>
    tpu.vector_store %arg9[%c0_221, %c0_222, %c32_223], %194 {strides = array<i32>} : memref<1x8x256xf32, #tpu.memory_space<vmem>>, vector<1x8x16xf32>,
    %195 = vector.extract_strided_slice %182 {offsets = [0, 54], sizes = [8, 16], strides = [1, 1]} : vector<8x286xf32> to vector<8x16xf32>
    %c0_224 = arith.constant 0 : index
    %c0_225 = arith.constant 0 : index
    %c48_226 = arith.constant 48 : index
    %196 = vector.load %arg9[%c0_224, %c0_225, %c48_226] : memref<1x8x256xf32, #tpu.memory_space<vmem>>, vector<1x8x16xf32>
    %197 = vector.shape_cast %196 : vector<1x8x16xf32> to vector<8x16xf32>
    %198 = vector.shape_cast %195 : vector<8x16xf32> to vector<1x8x16xf32>
    tpu.vector_store %arg9[%c0_224, %c0_225, %c48_226], %198 {strides = array<i32>} : memref<1x8x256xf32, #tpu.memory_space<vmem>>, vector<1x8x16xf32>,
    %199 = vector.extract_strided_slice %182 {offsets = [0, 72], sizes = [8, 16], strides = [1, 1]} : vector<8x286xf32> to vector<8x16xf32>
    %c0_227 = arith.constant 0 : index
    %c0_228 = arith.constant 0 : index
    %c64_229 = arith.constant 64 : index
    %200 = vector.load %arg9[%c0_227, %c0_228, %c64_229] : memref<1x8x256xf32, #tpu.memory_space<vmem>>, vector<1x8x16xf32>
    %201 = vector.shape_cast %200 : vector<1x8x16xf32> to vector<8x16xf32>
    %202 = vector.shape_cast %199 : vector<8x16xf32> to vector<1x8x16xf32>
    tpu.vector_store %arg9[%c0_227, %c0_228, %c64_229], %202 {strides = array<i32>} : memref<1x8x256xf32, #tpu.memory_space<vmem>>, vector<1x8x16xf32>,
    %203 = vector.extract_strided_slice %182 {offsets = [0, 90], sizes = [8, 16], strides = [1, 1]} : vector<8x286xf32> to vector<8x16xf32>
    %c0_230 = arith.constant 0 : index
    %c0_231 = arith.constant 0 : index
    %c80_232 = arith.constant 80 : index
    %204 = vector.load %arg9[%c0_230, %c0_231, %c80_232] : memref<1x8x256xf32, #tpu.memory_space<vmem>>, vector<1x8x16xf32>
    %205 = vector.shape_cast %204 : vector<1x8x16xf32> to vector<8x16xf32>
    %206 = vector.shape_cast %203 : vector<8x16xf32> to vector<1x8x16xf32>
    tpu.vector_store %arg9[%c0_230, %c0_231, %c80_232], %206 {strides = array<i32>} : memref<1x8x256xf32, #tpu.memory_space<vmem>>, vector<1x8x16xf32>,
    %207 = vector.extract_strided_slice %182 {offsets = [0, 108], sizes = [8, 16], strides = [1, 1]} : vector<8x286xf32> to vector<8x16xf32>
    %c0_233 = arith.constant 0 : index
    %c0_234 = arith.constant 0 : index
    %c96_235 = arith.constant 96 : index
    %208 = vector.load %arg9[%c0_233, %c0_234, %c96_235] : memref<1x8x256xf32, #tpu.memory_space<vmem>>, vector<1x8x16xf32>
    %209 = vector.shape_cast %208 : vector<1x8x16xf32> to vector<8x16xf32>
    %210 = vector.shape_cast %207 : vector<8x16xf32> to vector<1x8x16xf32>
    tpu.vector_store %arg9[%c0_233, %c0_234, %c96_235], %210 {strides = array<i32>} : memref<1x8x256xf32, #tpu.memory_space<vmem>>, vector<1x8x16xf32>,
    %211 = vector.extract_strided_slice %182 {offsets = [0, 126], sizes = [8, 16], strides = [1, 1]} : vector<8x286xf32> to vector<8x16xf32>
    %c0_236 = arith.constant 0 : index
    %c0_237 = arith.constant 0 : index
    %c112_238 = arith.constant 112 : index
    %212 = vector.load %arg9[%c0_236, %c0_237, %c112_238] : memref<1x8x256xf32, #tpu.memory_space<vmem>>, vector<1x8x16xf32>
    %213 = vector.shape_cast %212 : vector<1x8x16xf32> to vector<8x16xf32>
    %214 = vector.shape_cast %211 : vector<8x16xf32> to vector<1x8x16xf32>
    tpu.vector_store %arg9[%c0_236, %c0_237, %c112_238], %214 {strides = array<i32>} : memref<1x8x256xf32, #tpu.memory_space<vmem>>, vector<1x8x16xf32>,
    %215 = vector.extract_strided_slice %182 {offsets = [0, 144], sizes = [8, 16], strides = [1, 1]} : vector<8x286xf32> to vector<8x16xf32>
    %c0_239 = arith.constant 0 : index
    %c0_240 = arith.constant 0 : index
    %c128_241 = arith.constant 128 : index
    %216 = vector.load %arg9[%c0_239, %c0_240, %c128_241] : memref<1x8x256xf32, #tpu.memory_space<vmem>>, vector<1x8x16xf32>
    %217 = vector.shape_cast %216 : vector<1x8x16xf32> to vector<8x16xf32>
    %218 = vector.shape_cast %215 : vector<8x16xf32> to vector<1x8x16xf32>
    tpu.vector_store %arg9[%c0_239, %c0_240, %c128_241], %218 {strides = array<i32>} : memref<1x8x256xf32, #tpu.memory_space<vmem>>, vector<1x8x16xf32>,
    %219 = vector.extract_strided_slice %182 {offsets = [0, 162], sizes = [8, 16], strides = [1, 1]} : vector<8x286xf32> to vector<8x16xf32>
    %c0_242 = arith.constant 0 : index
    %c0_243 = arith.constant 0 : index
    %c144_244 = arith.constant 144 : index
    %220 = vector.load %arg9[%c0_242, %c0_243, %c144_244] : memref<1x8x256xf32, #tpu.memory_space<vmem>>, vector<1x8x16xf32>
    %221 = vector.shape_cast %220 : vector<1x8x16xf32> to vector<8x16xf32>
    %222 = vector.shape_cast %219 : vector<8x16xf32> to vector<1x8x16xf32>
    tpu.vector_store %arg9[%c0_242, %c0_243, %c144_244], %222 {strides = array<i32>} : memref<1x8x256xf32, #tpu.memory_space<vmem>>, vector<1x8x16xf32>,
    %223 = vector.extract_strided_slice %182 {offsets = [0, 180], sizes = [8, 16], strides = [1, 1]} : vector<8x286xf32> to vector<8x16xf32>
    %c0_245 = arith.constant 0 : index
    %c0_246 = arith.constant 0 : index
    %c160_247 = arith.constant 160 : index
    %224 = vector.load %arg9[%c0_245, %c0_246, %c160_247] : memref<1x8x256xf32, #tpu.memory_space<vmem>>, vector<1x8x16xf32>
    %225 = vector.shape_cast %224 : vector<1x8x16xf32> to vector<8x16xf32>
    %226 = vector.shape_cast %223 : vector<8x16xf32> to vector<1x8x16xf32>
    tpu.vector_store %arg9[%c0_245, %c0_246, %c160_247], %226 {strides = array<i32>} : memref<1x8x256xf32, #tpu.memory_space<vmem>>, vector<1x8x16xf32>,
    %227 = vector.extract_strided_slice %182 {offsets = [0, 198], sizes = [8, 16], strides = [1, 1]} : vector<8x286xf32> to vector<8x16xf32>
    %c0_248 = arith.constant 0 : index
    %c0_249 = arith.constant 0 : index
    %c176_250 = arith.constant 176 : index
    %228 = vector.load %arg9[%c0_248, %c0_249, %c176_250] : memref<1x8x256xf32, #tpu.memory_space<vmem>>, vector<1x8x16xf32>
    %229 = vector.shape_cast %228 : vector<1x8x16xf32> to vector<8x16xf32>
    %230 = vector.shape_cast %227 : vector<8x16xf32> to vector<1x8x16xf32>
    tpu.vector_store %arg9[%c0_248, %c0_249, %c176_250], %230 {strides = array<i32>} : memref<1x8x256xf32, #tpu.memory_space<vmem>>, vector<1x8x16xf32>,
    %231 = vector.extract_strided_slice %182 {offsets = [0, 216], sizes = [8, 16], strides = [1, 1]} : vector<8x286xf32> to vector<8x16xf32>
    %c0_251 = arith.constant 0 : index
    %c0_252 = arith.constant 0 : index
    %c192_253 = arith.constant 192 : index
    %232 = vector.load %arg9[%c0_251, %c0_252, %c192_253] : memref<1x8x256xf32, #tpu.memory_space<vmem>>, vector<1x8x16xf32>
    %233 = vector.shape_cast %232 : vector<1x8x16xf32> to vector<8x16xf32>
    %234 = vector.shape_cast %231 : vector<8x16xf32> to vector<1x8x16xf32>
    tpu.vector_store %arg9[%c0_251, %c0_252, %c192_253], %234 {strides = array<i32>} : memref<1x8x256xf32, #tpu.memory_space<vmem>>, vector<1x8x16xf32>,
    %235 = vector.extract_strided_slice %182 {offsets = [0, 234], sizes = [8, 16], strides = [1, 1]} : vector<8x286xf32> to vector<8x16xf32>
    %c0_254 = arith.constant 0 : index
    %c0_255 = arith.constant 0 : index
    %c208_256 = arith.constant 208 : index
    %236 = vector.load %arg9[%c0_254, %c0_255, %c208_256] : memref<1x8x256xf32, #tpu.memory_space<vmem>>, vector<1x8x16xf32>
    %237 = vector.shape_cast %236 : vector<1x8x16xf32> to vector<8x16xf32>
    %238 = vector.shape_cast %235 : vector<8x16xf32> to vector<1x8x16xf32>
    tpu.vector_store %arg9[%c0_254, %c0_255, %c208_256], %238 {strides = array<i32>} : memref<1x8x256xf32, #tpu.memory_space<vmem>>, vector<1x8x16xf32>,
    %239 = vector.extract_strided_slice %182 {offsets = [0, 252], sizes = [8, 16], strides = [1, 1]} : vector<8x286xf32> to vector<8x16xf32>
    %c0_257 = arith.constant 0 : index
    %c0_258 = arith.constant 0 : index
    %c224_259 = arith.constant 224 : index
    %240 = vector.load %arg9[%c0_257, %c0_258, %c224_259] : memref<1x8x256xf32, #tpu.memory_space<vmem>>, vector<1x8x16xf32>
    %241 = vector.shape_cast %240 : vector<1x8x16xf32> to vector<8x16xf32>
    %242 = vector.shape_cast %239 : vector<8x16xf32> to vector<1x8x16xf32>
    tpu.vector_store %arg9[%c0_257, %c0_258, %c224_259], %242 {strides = array<i32>} : memref<1x8x256xf32, #tpu.memory_space<vmem>>, vector<1x8x16xf32>,
    %243 = vector.extract_strided_slice %182 {offsets = [0, 270], sizes = [8, 16], strides = [1, 1]} : vector<8x286xf32> to vector<8x16xf32>
    %c0_260 = arith.constant 0 : index
    %c0_261 = arith.constant 0 : index
    %c240_262 = arith.constant 240 : index
    %244 = vector.load %arg9[%c0_260, %c0_261, %c240_262] : memref<1x8x256xf32, #tpu.memory_space<vmem>>, vector<1x8x16xf32>
    %245 = vector.shape_cast %244 : vector<1x8x16xf32> to vector<8x16xf32>
    %246 = vector.shape_cast %243 : vector<8x16xf32> to vector<1x8x16xf32>
    tpu.vector_store %arg9[%c0_260, %c0_261, %c240_262], %246 {strides = array<i32>} : memref<1x8x256xf32, #tpu.memory_space<vmem>>, vector<1x8x16xf32>,
    return
  }
  func.func @transform_0(%arg0: i32) -> (i32, i32, i32) {
    %c0_i32 = arith.constant 0 : i32
    %c0_i32_0 = arith.constant 0 : i32
    %c0_i32_1 = arith.constant 0 : i32
    return %arg0, %c0_i32, %c0_i32_0 : i32, i32, i32
  }
  func.func @transform_1(%arg0: i32) -> (i32, i32, i32, i32) {
    %c0_i32 = arith.constant 0 : i32
    %c0_i32_0 = arith.constant 0 : i32
    %c0_i32_1 = arith.constant 0 : i32
    %c0_i32_2 = arith.constant 0 : i32
    return %arg0, %c0_i32, %c0_i32_0, %c0_i32_1 : i32, i32, i32, i32
  }
  func.func @transform_2(%arg0: i32) -> (i32, i32) {
    %c0_i32 = arith.constant 0 : i32
    %c0_i32_0 = arith.constant 0 : i32
    %c0_i32_1 = arith.constant 0 : i32
    return %c0_i32, %c0_i32_0 : i32, i32
  }
  func.func @transform_3(%arg0: i32) -> (i32, i32) {
    %c0_i32 = arith.constant 0 : i32
    %c0_i32_0 = arith.constant 0 : i32
    %c0_i32_1 = arith.constant 0 : i32
    return %c0_i32, %c0_i32_0 : i32, i32
  }
  func.func @transform_4(%arg0: i32) -> (i32, i32) {
    %c0_i32 = arith.constant 0 : i32
    %c0_i32_0 = arith.constant 0 : i32
    %c0_i32_1 = arith.constant 0 : i32
    return %c0_i32, %c0_i32_0 : i32, i32
  }
  func.func @transform_5(%arg0: i32) -> (i32, i32) {
    %c0_i32 = arith.constant 0 : i32
    %c0_i32_0 = arith.constant 0 : i32
    %c0_i32_1 = arith.constant 0 : i32
    return %c0_i32, %c0_i32_0 : i32, i32
  }
  func.func @transform_6(%arg0: i32) -> (i32, i32) {
    %c0_i32 = arith.constant 0 : i32
    %c0_i32_0 = arith.constant 0 : i32
    %c0_i32_1 = arith.constant 0 : i32
    return %c0_i32, %c0_i32_0 : i32, i32
  }
  func.func @transform_7(%arg0: i32) -> (i32, i32) {
    %c0_i32 = arith.constant 0 : i32
    %c0_i32_0 = arith.constant 0 : i32
    %c0_i32_1 = arith.constant 0 : i32
    return %c0_i32, %c0_i32_0 : i32, i32
  }
  func.func @transform_8(%arg0: i32) -> (i32, i32, i32) {
    %c0_i32 = arith.constant 0 : i32
    %c0_i32_0 = arith.constant 0 : i32
    %c0_i32_1 = arith.constant 0 : i32
    return %arg0, %c0_i32, %c0_i32_0 : i32, i32, i32
  }
}

</mosaic_0001>

<llo_original>
// kernel: tpu_custom_call.1
$region0: #{tpu_custom_call.1}
  #allocation0 [shape = 'u32[]', space=smem, size = 0x4, offset = 0x4, fixed_abs, tag = 'smem constant byte address 0x4 - core index']
  #allocation1 [shape = 'u32[144,128]{1,0:T(1,128)}', space=vmem, size = 0x12000, scoped, tag = 'internal scratch']
  #allocation2 [shape = 'f32[8,324]{1,0:T(8,128)}', space=vmem, size = 0x3000, scoped, tag = 'scratch operand']
  #allocation3 [shape = 'f32[72,286]{1,0:T(8,128)}', space=vmem, size = 0x1b000, scoped, tag = 'scratch operand']
  %s0 = inlined_call_operand.vmem [shape: f32[2,4,256], index: 0, kind: input, shape index: {}]
  %s1 = inlined_call_operand.vmem [shape: f32[2,4,8,8], index: 1, kind: input, shape index: {}]
  %s2 = inlined_call_operand.vmem [shape: f32[64,32], index: 2, kind: input, shape index: {}]
  %s3 = inlined_call_operand.vmem [shape: f32[8,16], index: 3, kind: input, shape index: {}]
  %s4 = inlined_call_operand.hbm [shape: f32[1,286], index: 4, kind: input, shape index: {}]
  %s5 = inlined_call_operand.vmem [shape: f32[8,72], index: 5, kind: input, shape index: {}]
  %s6 = inlined_call_operand.vmem [shape: f32[8,72], index: 6, kind: input, shape index: {}]
  %s7 = inlined_call_operand.hbm [shape: f32[8,72], index: 7, kind: input, shape index: {}]
  %s8 = inlined_call_operand.hbm [shape: f32[2,8,256], index: 8, kind: output, shape index: {}]
  %s9 = sld [smem:[#allocation0]]
  $region73: #{tpu_custom_call.1} parent=0
    _
  %s11 = ssub.s32 1, %s9
  %s12 = scalar_select 0, %s11, %s9
  $region1: #{tpu_custom_call.1} parent=0
    #allocation4 [shape = 'u8[1536]{0}', space=vmem, size = 0x800, scoped, tag = 'input window, operand 4, single buffered']
    #allocation5 [shape = 's32[2]{0}', space=sflag, size = 0x8, scoped, tag = 'scoped memory for tpu_custom_call.1']
    #allocation6 [shape = 's32[2]{0}', space=sflag, size = 0x8, scoped, tag = 'scoped memory for tpu_custom_call.1']
    #allocation7 [shape = 'u8[4096]{0}', space=vmem, size = 0x1000, scoped, tag = 'input window, operand 7, single buffered']
    #allocation8 [shape = 's32[1]{0}', space=sflag, size = 0x4, scoped, tag = 'scoped memory for tpu_custom_call.1']
    #allocation9 [shape = 'u8[16384]{0}', space=vmem, size = 0x4000, scoped, tag = 'output window, operand 0']
    %13 = vsyncpa [#allocation5], 0
    %14 = vsyncpa [#allocation8], 0
    %15 = vsyncpa [#allocation6], 0
    %s16 = scalar_lea.sflag [#allocation6], 1
    %17 = vsyncpa %s16, 0
    loop: start=0, step=1, limit=4
    $region2: #{tpu_custom_call.1} parent=1 // loop_pre_header
      _
    $region3: #{tpu_custom_call.1} parent=1 // loop_header
      %s19 = sphi 0, %s23
      %p20 = scmp.ge.s32.totalorder %s19, 4
      %s29 = sphi 0, %s31
      %s32 = sphi 0, %s29
      %s33 = sphi 0, %s32
      %s49 = sphi 0, %s33
      %s55 = sphi 0, %s57
      %s58 = sphi 0, %s55
      %s59 = sphi 0, %s58
      %s75 = sphi 0, %s59
      %s79 = sphi 0, %s79
      %s81 = sphi 0, %s79
      %s82 = sphi 0, %s81
      %s96 = sphi 0, %s82
      %s100 = sphi 0, %s100
      %s102 = sphi 0, %s100
      %s103 = sphi 0, %s102
      %s117 = sphi 0, %s103
      %s121 = sphi 0, %s121
      %s123 = sphi 0, %s121
      %s124 = sphi 0, %s123
      %s138 = sphi 0, %s124
      %s142 = sphi 0, %s142
      %s144 = sphi 0, %s142
      %s145 = sphi 0, %s144
      %s159 = sphi 0, %s145
      %s163 = sphi 0, %s163
      %s165 = sphi 0, %s163
      %s166 = sphi 0, %s165
      %s180 = sphi 0, %s166
      %s184 = sphi 0, %s184
      %s186 = sphi 0, %s184
      %s187 = sphi 0, %s186
      %s201 = sphi 0, %s187
      %s207 = sphi 0, %s209
      %s210 = sphi 0, %s207
      %s211 = sphi 0, %s210
      %s227 = sphi 0, %s211
    $region4: #{tpu_custom_call.1} parent=1 // loop_header_branch
      %22 = sbr.rel (%p20) target = $region8
    $region5: #{tpu_custom_call.1} parent=1 // loop_body
      %s24 = ssub.s32 %s19, 1
      %s25 = ssub.s32 %s19, 2
      %s26 = sadd.s32 %s19, 1
      %s27 = ssub.s32 %s19, %s26
      %p28 = scmp.eq.s32.totalorder %s27, 0
      %s30 = sadd.s32 %s29, 1
      %s31 = scalar_select %p28, %s29, %s30
      %p34 = pneg %p28
      %p35 = scmp.eq.s32.totalorder %s19, 1
      %p36 = por %p34, %p35
      %p37 = scmp.ne.s32.totalorder %s29, %s32
      %p38 = scmp.eq.s32.totalorder %s19, 0
      %p39 = por %p37, %p38
      %p40 = scmp.ne.s32.totalorder %s29, %s32
      %p41 = scmp.eq.s32.totalorder %s24, 1
      %p42 = por %p40, %p41
      %p43 = scmp.ne.s32.totalorder %s32, %s33
      %p44 = scmp.eq.s32.totalorder %s24, 0
      %p45 = por %p43, %p44
      %p46 = scmp.ne.s32.totalorder %s32, %s33
      %p47 = scmp.eq.s32.totalorder %s25, 1
      %p48 = por %p46, %p47
      %p50 = scmp.ne.s32.totalorder %s33, %s49
      %p51 = scmp.eq.s32.totalorder %s25, 0
      %p52 = por %p50, %p51
      %s53 = ssub.s32 %s19, %s26
      %p54 = scmp.eq.s32.totalorder %s53, 0
      %s56 = sadd.s32 %s55, 1
      %s57 = scalar_select %p54, %s55, %s56
      %p60 = pneg %p54
      %p61 = scmp.eq.s32.totalorder %s19, 1
      %p62 = por %p60, %p61
      %p63 = scmp.ne.s32.totalorder %s55, %s58
      %p64 = scmp.eq.s32.totalorder %s19, 0
      %p65 = por %p63, %p64
      %p66 = scmp.ne.s32.totalorder %s55, %s58
      %p67 = scmp.eq.s32.totalorder %s24, 1
      %p68 = por %p66, %p67
      %p69 = scmp.ne.s32.totalorder %s58, %s59
      %p70 = scmp.eq.s32.totalorder %s24, 0
      %p71 = por %p69, %p70
      %p72 = scmp.ne.s32.totalorder %s58, %s59
      %p73 = scmp.eq.s32.totalorder %s25, 1
      %p74 = por %p72, %p73
      %p76 = scmp.ne.s32.totalorder %s59, %s75
      %p77 = scmp.eq.s32.totalorder %s25, 0
      %p78 = por %p76, %p77
      %s80 = sadd.s32 %s79, 1
      %p83 = scmp.eq.s32.totalorder %s19, 1
      %p84 = scmp.ne.s32.totalorder %s79, %s81
      %p85 = scmp.eq.s32.totalorder %s19, 0
      %p86 = por %p84, %p85
      %p87 = scmp.ne.s32.totalorder %s79, %s81
      %p88 = scmp.eq.s32.totalorder %s24, 1
      %p89 = por %p87, %p88
      %p90 = scmp.ne.s32.totalorder %s81, %s82
      %p91 = scmp.eq.s32.totalorder %s24, 0
      %p92 = por %p90, %p91
      %p93 = scmp.ne.s32.totalorder %s81, %s82
      %p94 = scmp.eq.s32.totalorder %s25, 1
      %p95 = por %p93, %p94
      %p97 = scmp.ne.s32.totalorder %s82, %s96
      %p98 = scmp.eq.s32.totalorder %s25, 0
      %p99 = por %p97, %p98
      %s101 = sadd.s32 %s100, 1
      %p104 = scmp.eq.s32.totalorder %s19, 1
      %p105 = scmp.ne.s32.totalorder %s100, %s102
      %p106 = scmp.eq.s32.totalorder %s19, 0
      %p107 = por %p105, %p106
      %p108 = scmp.ne.s32.totalorder %s100, %s102
      %p109 = scmp.eq.s32.totalorder %s24, 1
      %p110 = por %p108, %p109
      %p111 = scmp.ne.s32.totalorder %s102, %s103
      %p112 = scmp.eq.s32.totalorder %s24, 0
      %p113 = por %p111, %p112
      %p114 = scmp.ne.s32.totalorder %s102, %s103
      %p115 = scmp.eq.s32.totalorder %s25, 1
      %p116 = por %p114, %p115
      %p118 = scmp.ne.s32.totalorder %s103, %s117
      %p119 = scmp.eq.s32.totalorder %s25, 0
      %p120 = por %p118, %p119
      %s122 = sadd.s32 %s121, 1
      %p125 = scmp.eq.s32.totalorder %s19, 1
      %p126 = scmp.ne.s32.totalorder %s121, %s123
      %p127 = scmp.eq.s32.totalorder %s19, 0
      %p128 = por %p126, %p127
      %p129 = scmp.ne.s32.totalorder %s121, %s123
      %p130 = scmp.eq.s32.totalorder %s24, 1
      %p131 = por %p129, %p130
      %p132 = scmp.ne.s32.totalorder %s123, %s124
      %p133 = scmp.eq.s32.totalorder %s24, 0
      %p134 = por %p132, %p133
      %p135 = scmp.ne.s32.totalorder %s123, %s124
      %p136 = scmp.eq.s32.totalorder %s25, 1
      %p137 = por %p135, %p136
      %p139 = scmp.ne.s32.totalorder %s124, %s138
      %p140 = scmp.eq.s32.totalorder %s25, 0
      %p141 = por %p139, %p140
      %s143 = sadd.s32 %s142, 1
      %p146 = scmp.eq.s32.totalorder %s19, 1
      %p147 = scmp.ne.s32.totalorder %s142, %s144
      %p148 = scmp.eq.s32.totalorder %s19, 0
      %p149 = por %p147, %p148
      %p150 = scmp.ne.s32.totalorder %s142, %s144
      %p151 = scmp.eq.s32.totalorder %s24, 1
      %p152 = por %p150, %p151
      %p153 = scmp.ne.s32.totalorder %s144, %s145
      %p154 = scmp.eq.s32.totalorder %s24, 0
      %p155 = por %p153, %p154
      %p156 = scmp.ne.s32.totalorder %s144, %s145
      %p157 = scmp.eq.s32.totalorder %s25, 1
      %p158 = por %p156, %p157
      %p160 = scmp.ne.s32.totalorder %s145, %s159
      %p161 = scmp.eq.s32.totalorder %s25, 0
      %p162 = por %p160, %p161
      %s164 = sadd.s32 %s163, 1
      %p167 = scmp.eq.s32.totalorder %s19, 1
      %p168 = scmp.ne.s32.totalorder %s163, %s165
      %p169 = scmp.eq.s32.totalorder %s19, 0
      %p170 = por %p168, %p169
      %p171 = scmp.ne.s32.totalorder %s163, %s165
      %p172 = scmp.eq.s32.totalorder %s24, 1
      %p173 = por %p171, %p172
      %p174 = scmp.ne.s32.totalorder %s165, %s166
      %p175 = scmp.eq.s32.totalorder %s24, 0
      %p176 = por %p174, %p175
      %p177 = scmp.ne.s32.totalorder %s165, %s166
      %p178 = scmp.eq.s32.totalorder %s25, 1
      %p179 = por %p177, %p178
      %p181 = scmp.ne.s32.totalorder %s166, %s180
      %p182 = scmp.eq.s32.totalorder %s25, 0
      %p183 = por %p181, %p182
      %s185 = sadd.s32 %s184, 1
      %p188 = scmp.eq.s32.totalorder %s19, 1
      %p189 = scmp.ne.s32.totalorder %s184, %s186
      %p190 = scmp.eq.s32.totalorder %s19, 0
      %p191 = por %p189, %p190
      %p192 = scmp.ne.s32.totalorder %s184, %s186
      %p193 = scmp.eq.s32.totalorder %s24, 1
      %p194 = por %p192, %p193
      %p195 = scmp.ne.s32.totalorder %s186, %s187
      %p196 = scmp.eq.s32.totalorder %s24, 0
      %p197 = por %p195, %p196
      %p198 = scmp.ne.s32.totalorder %s186, %s187
      %p199 = scmp.eq.s32.totalorder %s25, 1
      %p200 = por %p198, %p199
      %p202 = scmp.ne.s32.totalorder %s187, %s201
      %p203 = scmp.eq.s32.totalorder %s25, 0
      %p204 = por %p202, %p203
      %s205 = ssub.s32 %s19, %s26
      %p206 = scmp.eq.s32.totalorder %s205, 0
      %s208 = sadd.s32 %s207, 1
      %s209 = scalar_select %p206, %s207, %s208
      %p212 = pneg %p206
      %p213 = scmp.eq.s32.totalorder %s19, 1
      %p214 = por %p212, %p213
      %p215 = scmp.ne.s32.totalorder %s207, %s210
      %p216 = scmp.eq.s32.totalorder %s19, 0
      %p217 = por %p215, %p216
      %p218 = scmp.ne.s32.totalorder %s207, %s210
      %p219 = scmp.eq.s32.totalorder %s24, 1
      %p220 = por %p218, %p219
      %p221 = scmp.ne.s32.totalorder %s210, %s211
      %p222 = scmp.eq.s32.totalorder %s24, 0
      %p223 = por %p221, %p222
      %p224 = scmp.ne.s32.totalorder %s210, %s211
      %p225 = scmp.eq.s32.totalorder %s25, 1
      %p226 = por %p224, %p225
      %p228 = scmp.ne.s32.totalorder %s211, %s227
      %p229 = scmp.eq.s32.totalorder %s25, 0
      %p230 = por %p228, %p229
      %p231 = scmp.le.s32.totalorder 1, %s19
      %p232 = scmp.lt.s32.totalorder %s19, 3
      %p233 = pnand %p231, %p232
      %p234 = pneg %p233
      // Predicated region
      $region9: #{tpu_custom_call.1} parent=5 // pred_check
        _
      $region10: #{tpu_custom_call.1} parent=5 // pred_check_branch
        %236 = sbr.rel (%p233) target = $region12
      $region11: #{tpu_custom_call.1} parent=5 // pred_region
        %s237 = ssub.s32 %s19, 1
        // Predicated region
        $region13: #{tpu_custom_call.1} parent=11 // pred_check
          %p238 = pneg %p92
        $region14: #{tpu_custom_call.1} parent=11 // pred_check_branch
          %240 = sbr.rel (%p238) target = $region16
        $region15: #{tpu_custom_call.1} parent=11 // pred_region
          _
        $region16: #{tpu_custom_call.1} parent=11 // pred_fallthru
          _
        // Predicated region
        $region17: #{tpu_custom_call.1} parent=11 // pred_check
          %p241 = pneg %p113
        $region18: #{tpu_custom_call.1} parent=11 // pred_check_branch
          %243 = sbr.rel (%p241) target = $region20
        $region19: #{tpu_custom_call.1} parent=11 // pred_region
          _
        $region20: #{tpu_custom_call.1} parent=11 // pred_fallthru
          _
        // Predicated region
        $region21: #{tpu_custom_call.1} parent=11 // pred_check
          %p244 = pneg %p134
        $region22: #{tpu_custom_call.1} parent=11 // pred_check_branch
          %246 = sbr.rel (%p244) target = $region24
        $region23: #{tpu_custom_call.1} parent=11 // pred_region
          %s248 = ssub.s32 48, 48
          %249 = vsyncadd [#allocation5], %s248
          %s251 = sshll.u32 [#allocation4], 4
          %s252 = int_to_ptr.vmem [resolvable:$true] %s251
          %254 = dma.hbm_to_vmem [thread:$0]  %s4, 48, %s252, [#allocation5]
        $region24: #{tpu_custom_call.1} parent=11 // pred_fallthru
          _
        // Predicated region
        $region25: #{tpu_custom_call.1} parent=11 // pred_check
          %p255 = pneg %p155
        $region26: #{tpu_custom_call.1} parent=11 // pred_check_branch
          %257 = sbr.rel (%p255) target = $region28
        $region27: #{tpu_custom_call.1} parent=11 // pred_region
          _
        $region28: #{tpu_custom_call.1} parent=11 // pred_fallthru
          _
        // Predicated region
        $region29: #{tpu_custom_call.1} parent=11 // pred_check
          %p258 = pneg %p176
        $region30: #{tpu_custom_call.1} parent=11 // pred_check_branch
          %260 = sbr.rel (%p258) target = $region32
        $region31: #{tpu_custom_call.1} parent=11 // pred_region
          _
        $region32: #{tpu_custom_call.1} parent=11 // pred_fallthru
          _
        // Predicated region
        $region33: #{tpu_custom_call.1} parent=11 // pred_check
          %p261 = pneg %p197
        $region34: #{tpu_custom_call.1} parent=11 // pred_check_branch
          %263 = sbr.rel (%p261) target = $region36
        $region35: #{tpu_custom_call.1} parent=11 // pred_region
          %s265 = ssub.s32 128, 128
          %266 = vsyncadd [#allocation8], %s265
          %s268 = sshll.u32 [#allocation7], 4
          %s269 = int_to_ptr.vmem [resolvable:$true] %s268
          %271 = dma.hbm_to_vmem [thread:$0]  %s7, 128, %s269, [#allocation8]
        $region36: #{tpu_custom_call.1} parent=11 // pred_fallthru
          _
      $region12: #{tpu_custom_call.1} parent=5 // pred_fallthru
        _
      %p272 = scmp.lt.s32.totalorder %s19, 2
      // Predicated region
      $region37: #{tpu_custom_call.1} parent=5 // pred_check
        %p273 = pneg %p272
      $region38: #{tpu_custom_call.1} parent=5 // pred_check_branch
        %275 = sbr.rel (%p273) target = $region40
      $region39: #{tpu_custom_call.1} parent=5 // pred_region
        // Predicated region
        $region41: #{tpu_custom_call.1} parent=39 // pred_check
          %p276 = pneg %p39
        $region42: #{tpu_custom_call.1} parent=39 // pred_check_branch
          %278 = sbr.rel (%p276) target = $region44
        $region43: #{tpu_custom_call.1} parent=39 // pred_region
          %p279 = scmp.lt.s32.totalorder %s19, 1
          %s280 = scalar_select %p279, %s19, 1
          %s281 = smul.addr %s280, 2
          %s282 = smul.addr %s281, 4
          %s283 = scalar_lea.vmem %s0, %s282
        $region44: #{tpu_custom_call.1} parent=39 // pred_fallthru
          _
        // Predicated region
        $region45: #{tpu_custom_call.1} parent=39 // pred_check
          %p284 = pneg %p65
        $region46: #{tpu_custom_call.1} parent=39 // pred_check_branch
          %286 = sbr.rel (%p284) target = $region48
        $region47: #{tpu_custom_call.1} parent=39 // pred_region
          %p287 = scmp.lt.s32.totalorder %s19, 1
          %s288 = scalar_select %p287, %s19, 1
          %s289 = smul.addr %s288, 4
          %s290 = smul.addr %s289, 8
          %s291 = scalar_lea.vmem %s1, %s290
        $region48: #{tpu_custom_call.1} parent=39 // pred_fallthru
          _
      $region40: #{tpu_custom_call.1} parent=5 // pred_fallthru
        _
      %p292 = scmp.le.s32.totalorder 1, %s19
      %p293 = scmp.lt.s32.totalorder %s19, 3
      %p294 = pnand %p292, %p293
      %p295 = pneg %p294
      // Predicated region
      $region49: #{tpu_custom_call.1} parent=5 // pred_check
        _
      $region50: #{tpu_custom_call.1} parent=5 // pred_check_branch
        %297 = sbr.rel (%p294) target = $region52
      $region51: #{tpu_custom_call.1} parent=5 // pred_region
        %s298 = ssub.s32 %s19, 1
        // Predicated region
        $region53: #{tpu_custom_call.1} parent=51 // pred_check
          %p299 = pneg %p134
        $region54: #{tpu_custom_call.1} parent=51 // pred_check_branch
          %301 = sbr.rel (%p299) target = $region56
        $region55: #{tpu_custom_call.1} parent=51 // pred_region
          %302 = dma.done [#allocation5], 48
        $region56: #{tpu_custom_call.1} parent=51 // pred_fallthru
          _
        // Predicated region
        $region57: #{tpu_custom_call.1} parent=51 // pred_check
          %p303 = pneg %p197
        $region58: #{tpu_custom_call.1} parent=51 // pred_check_branch
          %305 = sbr.rel (%p303) target = $region60
        $region59: #{tpu_custom_call.1} parent=51 // pred_region
          %306 = dma.done [#allocation8], 128
        $region60: #{tpu_custom_call.1} parent=51 // pred_fallthru
          _
        %p307 = scmp.lt.s32.totalorder %s24, 1
        %s308 = scalar_select %p307, %s24, 1
        %s309 = smul.addr %s308, 2
        %s310 = smul.addr %s309, 4
        %s311 = scalar_lea.vmem %s0, %s310
        %p312 = pneg %p45
        %p313 = pneg %p42
        %p314 = scmp.lt.s32.totalorder %s24, 1
        %s315 = scalar_select %p314, %s24, 1
        %s316 = smul.addr %s315, 4
        %s317 = smul.addr %s316, 8
        %s318 = scalar_lea.vmem %s1, %s317
        %p319 = pneg %p71
        %p320 = pneg %p68
        %p321 = pneg %p92
        %p322 = pneg %p89
        %p323 = pneg %p113
        %p324 = pneg %p110
        %p325 = pneg %p134
        %p326 = pneg %p131
        %p327 = pneg %p155
        %p328 = pneg %p152
        %p329 = pneg %p176
        %p330 = pneg %p173
        %p331 = pneg %p197
        %p332 = pneg %p194
        %p333 = pneg %p223
        %p334 = pneg %p220
        %s335 = sand.u32 %s210, 1
        %s336 = scalar_lea.sflag [#allocation6], %s335
        %s337 = sand.u32 %s210, 1
        %s338 = smul.addr %s337, 16
        %s339 = scalar_lea.vmem [#allocation9], %s338
        %p340 = scmp.lt.s32.totalorder %s24, 1
        %s341 = scalar_select %p340, %s24, 1
        %s342 = smul.addr %s341, 2
        %s343 = smul.addr %s342, 4
        %s344 = scalar_lea.vmem %s0, %s343
        %p345 = scmp.lt.s32.totalorder %s24, 1
        %s346 = scalar_select %p345, %s24, 1
        %s347 = smul.addr %s346, 4
        %s348 = smul.addr %s347, 8
        %s349 = scalar_lea.vmem %s1, %s348
        %350 = vst [vmem:[#allocation2] sm:$0xff] 0.0
        %351 = vst [vmem:[#allocation2 + $0x8] sm:$0xff] 0.0
        %vm352 = vcmask 556032
        %353 = vst.msk [vmem:[#allocation2 + $0x10] sm:$0xff] %vm352, 0.0
        %v354 = vld [vmem:[%s349] sm:$0xff]
        %v355 = vld [vmem:[%s349 + $0x8] sm:$0xff]
        %v356 = vld [vmem:[%s349 + $0x10] sm:$0xff]
        %v357 = vld [vmem:[%s349 + $0x18] sm:$0xff]
        %v358 = vld [vmem:[%s3] sm:$0xff]
        %vm359 = vcmask 64512
        %v361 = vsel %vm359, %v354, 0
        %v364 = vsel %vm359, %v355, 0
        %v367 = vsel %vm359, %v356, 0
        %v370 = vsel %vm359, %v357, 0
        %372 = vmatprep.subr.mxu0 0.0
        %373 = vmatpush1.msra.mxu0 0.0
        %374 = vmatprep.subr.mxu0 0.0
        %375 = vmatpush1.msra.mxu0 0.0
        %376 = vmatprep.subr.mxu0 0.0
        %377 = vmatpush1.msra.mxu0 0.0
        %378 = vmatprep.subr.mxu0 0.0
        %379 = vmatpush1.msra.mxu0 0.0
        %380 = vmatprep.subr.mxu0 0.0
        %381 = vmatpush1.msra.mxu0 0.0
        %382 = vmatprep.subr.mxu0 0.0
        %383 = vmatpush1.msra.mxu0 0.0
        %384 = vmatprep.subr.mxu0 0.0
        %385 = vmatpush1.msra.mxu0 0.0
        %386 = vmatprep.subr.mxu0 0.0
        %387 = vmatpush1.msra.mxu0 0.0
        %388 = vmatprep.subr.mxu0 0.0
        %389 = vmatpush1.msra.mxu0 0.0
        %390 = vmatprep.subr.mxu0 0.0
        %391 = vmatpush1.msra.mxu0 0.0
        %392 = vmatprep.subr.mxu0 0.0
        %393 = vmatpush1.msra.mxu0 0.0
        %394 = vmatprep.subr.mxu0 0.0
        %395 = vmatpush1.msra.mxu0 0.0
        %396 = vmatprep.subr.mxu0 0.0
        %397 = vmatpush1.msra.mxu0 0.0
        %398 = vmatprep.subr.mxu0 0.0
        %399 = vmatpush1.msra.mxu0 0.0
        %400 = vmatprep.subr.mxu0 0.0
        %401 = vmatpush1.msra.mxu0 0.0
        %402 = vmatprep.subr.mxu0 0.0
        %403 = vmatpush1.msra.mxu0 %v358
        %404 = vmatprep.subr.mxu0 0.0
        %405 = vmatpush2.msra.mxu0 0.0
        %406 = vmatprep.subr.mxu0 0.0
        %407 = vmatpush2.msra.mxu0 0.0
        %408 = vmatprep.subr.mxu0 0.0
        %409 = vmatpush2.msra.mxu0 0.0
        %410 = vmatprep.subr.mxu0 0.0
        %411 = vmatpush2.msra.mxu0 0.0
        %412 = vmatprep.subr.mxu0 0.0
        %413 = vmatpush2.msra.mxu0 0.0
        %414 = vmatprep.subr.mxu0 0.0
        %415 = vmatpush2.msra.mxu0 0.0
        %416 = vmatprep.subr.mxu0 0.0
        %417 = vmatpush2.msra.mxu0 0.0
        %418 = vmatprep.subr.mxu0 0.0
        %419 = vmatpush2.msra.mxu0 0.0
        %420 = vmatprep.subr.mxu0 0.0
        %421 = vmatpush2.msra.mxu0 0.0
        %422 = vmatprep.subr.mxu0 0.0
        %423 = vmatpush2.msra.mxu0 0.0
        %424 = vmatprep.subr.mxu0 0.0
        %425 = vmatpush2.msra.mxu0 0.0
        %426 = vmatprep.subr.mxu0 0.0
        %427 = vmatpush2.msra.mxu0 0.0
        %428 = vmatprep.subr.mxu0 0.0
        %429 = vmatpush2.msra.mxu0 0.0
        %430 = vmatprep.subr.mxu0 0.0
        %431 = vmatpush2.msra.mxu0 0.0
        %432 = vmatprep.subr.mxu0 0.0
        %433 = vmatpush2.msra.mxu0 0.0
        %434 = vmatprep.subr.mxu0 0.0
        %435 = vmatpush2.msra.mxu0 0.0
        %436 = vmatprep.mubr.f32.mxu0 0.0
        %437 = vmatmul.mubr.f32.gmra.mxu0 %v361
        %v438 = vpop.f32.mrf.mxu0
        %v439 = vadd.f32 0.0, %v438
        %v440 = vpop.f32.mrf.mxu0
        %441 = vmatprep.mubr.f32.mxu0 0.0
        %442 = vmatmul.mubr.f32.gmra.mxu0 %v364
        %v443 = vpop.f32.mrf.mxu0
        %v444 = vadd.f32 0.0, %v443
        %v445 = vpop.f32.mrf.mxu0
        %446 = vmatprep.mubr.f32.mxu0 0.0
        %447 = vmatmul.mubr.f32.gmra.mxu0 %v367
        %v448 = vpop.f32.mrf.mxu0
        %v449 = vadd.f32 0.0, %v448
        %v450 = vpop.f32.mrf.mxu0
        %451 = vmatprep.mubr.f32.mxu0 0.0
        %452 = vmatmul.mubr.f32.gmra.mxu0 %v370
        %v453 = vpop.f32.mrf.mxu0
        %v454 = vadd.f32 0.0, %v453
        %v455 = vpop.f32.mrf.mxu0
        %456 = vdwg.mxu0
        %v457 = vld [vmem:[%s2] sm:$0xff]
        %v458 = vld [vmem:[%s2 + $0x8] sm:$0xff]
        %v459 = vld [vmem:[%s2 + $0x10] sm:$0xff]
        %v460 = vld [vmem:[%s2 + $0x18] sm:$0xff]
        %v461 = vld [vmem:[%s2 + $0x20] sm:$0xff]
        %v462 = vld [vmem:[%s2 + $0x28] sm:$0xff]
        %v463 = vld [vmem:[%s2 + $0x30] sm:$0xff]
        %v464 = vld [vmem:[%s2 + $0x38] sm:$0xff]
        %vm465 = vcmask 261120
        %v467 = vsel %vm465, %v457, 0
        %v470 = vsel %vm465, %v458, 0
        %v473 = vsel %vm465, %v459, 0
        %v476 = vsel %vm465, %v460, 0
        %v479 = vsel %vm465, %v461, 0
        %v482 = vsel %vm465, %v462, 0
        %v485 = vsel %vm465, %v463, 0
        %v488 = vsel %vm465, %v464, 0
        %490 = vmatprep.subr.mxu0 0.0
        %491 = vmatpush1.msra.mxu0 0.0
        %492 = vmatprep.subr.mxu0 0.0
        %493 = vmatpush1.msra.mxu0 0.0
        %494 = vmatprep.subr.mxu0 0.0
        %495 = vmatpush1.msra.mxu0 0.0
        %496 = vmatprep.subr.mxu0 0.0
        %497 = vmatpush1.msra.mxu0 0.0
        %498 = vmatprep.subr.mxu0 0.0
        %499 = vmatpush1.msra.mxu0 0.0
        %500 = vmatprep.subr.mxu0 0.0
        %501 = vmatpush1.msra.mxu0 0.0
        %502 = vmatprep.subr.mxu0 0.0
        %503 = vmatpush1.msra.mxu0 0.0
        %504 = vmatprep.subr.mxu0 0.0
        %505 = vmatpush1.msra.mxu0 0.0
        %506 = vmatprep.subr.mxu0 0.0
        %507 = vmatpush1.msra.mxu0 0.0
        %508 = vmatprep.subr.mxu0 0.0
        %509 = vmatpush1.msra.mxu0 0.0
        %510 = vmatprep.subr.mxu0 0.0
        %511 = vmatpush1.msra.mxu0 0.0
        %512 = vmatprep.subr.mxu0 0.0
        %513 = vmatpush1.msra.mxu0 0.0
        %514 = vmatprep.subr.mxu0 0.0
        %515 = vmatpush1.msra.mxu0 %v454
        %516 = vmatprep.subr.mxu0 0.0
        %517 = vmatpush1.msra.mxu0 %v449
        %518 = vmatprep.subr.mxu0 0.0
        %519 = vmatpush1.msra.mxu0 %v444
        %520 = vmatprep.subr.mxu0 0.0
        %521 = vmatpush1.msra.mxu0 %v439
        %522 = vmatprep.subr.mxu0 0.0
        %523 = vmatpush2.msra.mxu0 0.0
        %524 = vmatprep.subr.mxu0 0.0
        %525 = vmatpush2.msra.mxu0 0.0
        %526 = vmatprep.subr.mxu0 0.0
        %527 = vmatpush2.msra.mxu0 0.0
        %528 = vmatprep.subr.mxu0 0.0
        %529 = vmatpush2.msra.mxu0 0.0
        %530 = vmatprep.subr.mxu0 0.0
        %531 = vmatpush2.msra.mxu0 0.0
        %532 = vmatprep.subr.mxu0 0.0
        %533 = vmatpush2.msra.mxu0 0.0
        %534 = vmatprep.subr.mxu0 0.0
        %535 = vmatpush2.msra.mxu0 0.0
        %536 = vmatprep.subr.mxu0 0.0
        %537 = vmatpush2.msra.mxu0 0.0
        %538 = vmatprep.subr.mxu0 0.0
        %539 = vmatpush2.msra.mxu0 0.0
        %540 = vmatprep.subr.mxu0 0.0
        %541 = vmatpush2.msra.mxu0 0.0
        %542 = vmatprep.subr.mxu0 0.0
        %543 = vmatpush2.msra.mxu0 0.0
        %544 = vmatprep.subr.mxu0 0.0
        %545 = vmatpush2.msra.mxu0 0.0
        %546 = vmatprep.subr.mxu0 0.0
        %547 = vmatpush2.msra.mxu0 0.0
        %548 = vmatprep.subr.mxu0 0.0
        %549 = vmatpush2.msra.mxu0 0.0
        %550 = vmatprep.subr.mxu0 0.0
        %551 = vmatpush2.msra.mxu0 0.0
        %552 = vmatprep.subr.mxu0 0.0
        %553 = vmatpush2.msra.mxu0 0.0
        %554 = vmatprep.mubr.f32.mxu0 0.0
        %555 = vmatmul.mubr.f32.gmra.mxu0 %v467
        %v556 = vpop.f32.mrf.mxu0
        %v557 = vadd.f32 0.0, %v556
        %v558 = vpop.f32.mrf.mxu0
        %559 = vmatprep.mubr.f32.mxu0 0.0
        %560 = vmatmul.mubr.f32.gmra.mxu0 %v470
        %v561 = vpop.f32.mrf.mxu0
        %v562 = vadd.f32 0.0, %v561
        %v563 = vpop.f32.mrf.mxu0
        %564 = vmatprep.mubr.f32.mxu0 0.0
        %565 = vmatmul.mubr.f32.gmra.mxu0 %v473
        %v566 = vpop.f32.mrf.mxu0
        %v567 = vadd.f32 0.0, %v566
        %v568 = vpop.f32.mrf.mxu0
        %569 = vmatprep.mubr.f32.mxu0 0.0
        %570 = vmatmul.mubr.f32.gmra.mxu0 %v476
        %v571 = vpop.f32.mrf.mxu0
        %v572 = vadd.f32 0.0, %v571
        %v573 = vpop.f32.mrf.mxu0
        %574 = vmatprep.mubr.f32.mxu0 0.0
        %575 = vmatmul.mubr.f32.gmra.mxu0 %v479
        %v576 = vpop.f32.mrf.mxu0
        %v577 = vadd.f32 0.0, %v576
        %v578 = vpop.f32.mrf.mxu0
        %579 = vmatprep.mubr.f32.mxu0 0.0
        %580 = vmatmul.mubr.f32.gmra.mxu0 %v482
        %v581 = vpop.f32.mrf.mxu0
        %v582 = vadd.f32 0.0, %v581
        %v583 = vpop.f32.mrf.mxu0
        %584 = vmatprep.mubr.f32.mxu0 0.0
        %585 = vmatmul.mubr.f32.gmra.mxu0 %v485
        %v586 = vpop.f32.mrf.mxu0
        %v587 = vadd.f32 0.0, %v586
        %v588 = vpop.f32.mrf.mxu0
        %589 = vmatprep.mubr.f32.mxu0 0.0
        %590 = vmatmul.mubr.f32.gmra.mxu0 %v488
        %v591 = vpop.f32.mrf.mxu0
        %v592 = vadd.f32 0.0, %v591
        %v593 = vpop.f32.mrf.mxu0
        %594 = vdwg.mxu0
        %v595 = vld [vmem:[%s344] sm:$0xf]
        %597 = vrot.lane.b32.xlu0 %v595, 19
        %v598 = vpop.permute.xlu0 %597
        %vm600 = vcmask 281752
        %601 = vst.msk [vmem:[#allocation2] sm:$0xf] %vm600, %v598
        %v606 = vrot.slane %v557, 4
        %v607 = vrot.slane %v567, 3
        %vm608 = vcmask 1045509
        %v609 = vsel %vm608, %v607, %v606
        %v610 = vrot.slane %v577, 2
        %vm611 = vcmask 1046534
        %v612 = vsel %vm611, %v610, %v609
        %v613 = vrot.slane %v587, 1
        %vm614 = vcmask 1047559
        %v615 = vsel %vm614, %v613, %v612
        %616 = vrot.lane.b32.xlu0 %v615, 19
        %v617 = vpop.permute.xlu0 %616
        %vm619 = vcmask 285852
        %620 = vst.msk [vmem:[#allocation2] sm:$0xf0] %vm619, %v617
        %v621 = vld [vmem:[%s344] sm:$0xf]
        %623 = vrot.lane.b32.xlu0 %v621, 21
        %v624 = vpop.permute.xlu0 %623
        %vm626 = vcmask 429352
        %627 = vst.msk [vmem:[#allocation2] sm:$0xf] %vm626, %v624
        %v628 = vrot.slane %v557, 5
        %v629 = vrot.slane %v567, 4
        %v630 = vsel %vm608, %v629, %v628
        %v631 = vrot.slane %v577, 3
        %v632 = vsel %vm611, %v631, %v630
        %v633 = vrot.slane %v587, 2
        %v634 = vsel %vm614, %v633, %v632
        %635 = vrot.lane.b32.xlu0 %v634, 37
        %v636 = vpop.permute.xlu0 %635
        %vm638 = vcmask 433452
        %639 = vst.msk [vmem:[#allocation2] sm:$0xf0] %vm638, %v636
        %v640 = vld [vmem:[%s344] sm:$0xf]
        %642 = vrot.lane.b32.xlu0 %v640, 23
        %v643 = vpop.permute.xlu0 %642
        %vm645 = vcmask 576952
        %646 = vst.msk [vmem:[#allocation2] sm:$0xf] %vm645, %v643
        %v647 = vrot.slane %v557, 6
        %v648 = vrot.slane %v567, 5
        %v649 = vsel %vm608, %v648, %v647
        %v650 = vrot.slane %v577, 4
        %v651 = vsel %vm611, %v650, %v649
        %v652 = vrot.slane %v587, 3
        %v653 = vsel %vm614, %v652, %v651
        %654 = vrot.lane.b32.xlu0 %v653, 55
        %v655 = vpop.permute.xlu0 %654
        %vm657 = vcmask 581052
        %658 = vst.msk [vmem:[#allocation2] sm:$0xf0] %vm657, %v655
        %v659 = vld [vmem:[%s344] sm:$0xf]
        %661 = vrot.lane.b32.xlu0 %v659, 25
        %v662 = vpop.permute.xlu0 %661
        %vm664 = vcmask 724552
        %665 = vst.msk [vmem:[#allocation2] sm:$0xf] %vm664, %v662
        %v666 = vrot.slane %v557, 7
        %v667 = vrot.slane %v567, 6
        %v668 = vsel %vm608, %v667, %v666
        %v669 = vrot.slane %v577, 5
        %v670 = vsel %vm611, %v669, %v668
        %v671 = vrot.slane %v587, 4
        %v672 = vsel %vm614, %v671, %v670
        %673 = vrot.lane.b32.xlu0 %v672, 73
        %v674 = vpop.permute.xlu0 %673
        %vm676 = vcmask 728652
        %677 = vst.msk [vmem:[#allocation2] sm:$0xf0] %vm676, %v674
        %v678 = vld [vmem:[%s344] sm:$0xf]
        %680 = vrot.lane.b32.xlu0 %v678, 27
        %v681 = vpop.permute.xlu0 %680
        %vm683 = vcmask 872152
        %684 = vst.msk [vmem:[#allocation2] sm:$0xf] %vm683, %v681
        %v685 = vrot.slane %v567, 7
        %v686 = vsel %vm608, %v685, %v557
        %v687 = vrot.slane %v577, 6
        %v688 = vsel %vm611, %v687, %v686
        %v689 = vrot.slane %v587, 5
        %v690 = vsel %vm614, %v689, %v688
        %691 = vrot.lane.b32.xlu0 %v690, 91
        %v692 = vpop.permute.xlu0 %691
        %vm694 = vcmask 876252
        %695 = vst.msk [vmem:[#allocation2] sm:$0xf0] %vm694, %v692
        %v696 = vld [vmem:[%s344] sm:$0xf]
        %698 = vrot.lane.b32.xlu0 %v696, 29
        %v699 = vpop.permute.xlu0 %698
        %vm701 = vcmask 1019752
        %702 = vst.msk [vmem:[#allocation2] sm:$0xf] %vm701, %v699
        %v703 = vrot.slane %v557, 1
        %v704 = vsel %vm608, %v567, %v703
        %v705 = vrot.slane %v577, 7
        %v706 = vsel %vm611, %v705, %v704
        %v707 = vrot.slane %v587, 6
        %v708 = vsel %vm614, %v707, %v706
        %709 = vrot.lane.b32.xlu0 %v708, 109
        %v710 = vpop.permute.xlu0 %709
        %vm712 = vcmask 1023852
        %713 = vst.msk [vmem:[#allocation2] sm:$0xf0] %vm712, %v710
        %v714 = vld [vmem:[%s344] sm:$0xf]
        %716 = vrot.lane.b32.xlu0 %v714, 31
        %v717 = vpop.permute.xlu0 %716
        %vm719 = vcmask 1044472
        %720 = vst.msk [vmem:[#allocation2] sm:$0xf] %vm719, %v717
        %vm721 = vcmask 117760
        %722 = vst.msk [vmem:[#allocation2 + $0x8] sm:$0xf] %vm721, %v717
        %v723 = vrot.slane %v557, 2
        %v724 = vrot.slane %v567, 1
        %v725 = vsel %vm608, %v724, %v723
        %v726 = vsel %vm611, %v577, %v725
        %v727 = vrot.slane %v587, 7
        %v728 = vsel %vm614, %v727, %v726
        %729 = vrot.lane.b32.xlu0 %v728, 127
        %v730 = vpop.permute.xlu0 %729
        %vm732 = vcmask 1048572
        %733 = vst.msk [vmem:[#allocation2] sm:$0xf0] %vm732, %v730
        %vm734 = vcmask 121860
        %735 = vst.msk [vmem:[#allocation2 + $0x8] sm:$0xf0] %vm734, %v730
        %v736 = vld [vmem:[%s344] sm:$0xf]
        %738 = vrot.lane.b32.xlu0 %v736, 33
        %v739 = vpop.permute.xlu0 %738
        %vm741 = vcmask 265352
        %742 = vst.msk [vmem:[#allocation2 + $0x8] sm:$0xf] %vm741, %v739
        %v743 = vrot.slane %v557, 3
        %v744 = vrot.slane %v567, 2
        %v745 = vsel %vm608, %v744, %v743
        %v746 = vrot.slane %v577, 1
        %v747 = vsel %vm611, %v746, %v745
        %v748 = vsel %vm614, %v587, %v747
        %749 = vrot.lane.b32.xlu0 %v748, 17
        %v750 = vpop.permute.xlu0 %749
        %vm752 = vcmask 269452
        %753 = vst.msk [vmem:[#allocation2 + $0x8] sm:$0xf0] %vm752, %v750
        %v754 = vld [vmem:[%s344 + $0x4] sm:$0xf]
        %756 = vrot.lane.b32.xlu0 %v754, 35
        %v757 = vpop.permute.xlu0 %756
        %vm759 = vcmask 412952
        %760 = vst.msk [vmem:[#allocation2 + $0x8] sm:$0xf] %vm759, %v757
        %v765 = vrot.slane %v562, 4
        %v766 = vrot.slane %v572, 3
        %v767 = vsel %vm608, %v766, %v765
        %v768 = vrot.slane %v582, 2
        %v769 = vsel %vm611, %v768, %v767
        %v770 = vrot.slane %v592, 1
        %v771 = vsel %vm614, %v770, %v769
        %772 = vrot.lane.b32.xlu0 %v771, 35
        %v773 = vpop.permute.xlu0 %772
        %vm775 = vcmask 417052
        %776 = vst.msk [vmem:[#allocation2 + $0x8] sm:$0xf0] %vm775, %v773
        %v777 = vld [vmem:[%s344 + $0x4] sm:$0xf]
        %779 = vrot.lane.b32.xlu0 %v777, 37
        %v780 = vpop.permute.xlu0 %779
        %vm782 = vcmask 560552
        %783 = vst.msk [vmem:[#allocation2 + $0x8] sm:$0xf] %vm782, %v780
        %v784 = vrot.slane %v562, 5
        %v785 = vrot.slane %v572, 4
        %v786 = vsel %vm608, %v785, %v784
        %v787 = vrot.slane %v582, 3
        %v788 = vsel %vm611, %v787, %v786
        %v789 = vrot.slane %v592, 2
        %v790 = vsel %vm614, %v789, %v788
        %791 = vrot.lane.b32.xlu0 %v790, 53
        %v792 = vpop.permute.xlu0 %791
        %vm794 = vcmask 564652
        %795 = vst.msk [vmem:[#allocation2 + $0x8] sm:$0xf0] %vm794, %v792
        %v796 = vld [vmem:[%s344 + $0x4] sm:$0xf]
        %798 = vrot.lane.b32.xlu0 %v796, 39
        %v799 = vpop.permute.xlu0 %798
        %vm801 = vcmask 708152
        %802 = vst.msk [vmem:[#allocation2 + $0x8] sm:$0xf] %vm801, %v799
        %v803 = vrot.slane %v562, 6
        %v804 = vrot.slane %v572, 5
        %v805 = vsel %vm608, %v804, %v803
        %v806 = vrot.slane %v582, 4
        %v807 = vsel %vm611, %v806, %v805
        %v808 = vrot.slane %v592, 3
        %v809 = vsel %vm614, %v808, %v807
        %810 = vrot.lane.b32.xlu0 %v809, 71
        %v811 = vpop.permute.xlu0 %810
        %vm813 = vcmask 712252
        %814 = vst.msk [vmem:[#allocation2 + $0x8] sm:$0xf0] %vm813, %v811
        %v815 = vld [vmem:[%s344 + $0x4] sm:$0xf]
        %817 = vrot.lane.b32.xlu0 %v815, 41
        %v818 = vpop.permute.xlu0 %817
        %vm820 = vcmask 855752
        %821 = vst.msk [vmem:[#allocation2 + $0x8] sm:$0xf] %vm820, %v818
        %v822 = vrot.slane %v562, 7
        %v823 = vrot.slane %v572, 6
        %v824 = vsel %vm608, %v823, %v822
        %v825 = vrot.slane %v582, 5
        %v826 = vsel %vm611, %v825, %v824
        %v827 = vrot.slane %v592, 4
        %v828 = vsel %vm614, %v827, %v826
        %829 = vrot.lane.b32.xlu0 %v828, 89
        %v830 = vpop.permute.xlu0 %829
        %vm832 = vcmask 859852
        %833 = vst.msk [vmem:[#allocation2 + $0x8] sm:$0xf0] %vm832, %v830
        %v834 = vld [vmem:[%s344 + $0x4] sm:$0xf]
        %836 = vrot.lane.b32.xlu0 %v834, 43
        %v837 = vpop.permute.xlu0 %836
        %vm839 = vcmask 1003352
        %840 = vst.msk [vmem:[#allocation2 + $0x8] sm:$0xf] %vm839, %v837
        %v841 = vrot.slane %v572, 7
        %v842 = vsel %vm608, %v841, %v562
        %v843 = vrot.slane %v582, 6
        %v844 = vsel %vm611, %v843, %v842
        %v845 = vrot.slane %v592, 5
        %v846 = vsel %vm614, %v845, %v844
        %847 = vrot.lane.b32.xlu0 %v846, 107
        %v848 = vpop.permute.xlu0 %847
        %vm850 = vcmask 1007452
        %851 = vst.msk [vmem:[#allocation2 + $0x8] sm:$0xf0] %vm850, %v848
        %v852 = vld [vmem:[%s344 + $0x4] sm:$0xf]
        %854 = vrot.lane.b32.xlu0 %v852, 45
        %v855 = vpop.permute.xlu0 %854
        %vm857 = vcmask 1044456
        %858 = vst.msk [vmem:[#allocation2 + $0x8] sm:$0xf] %vm857, %v855
        %vm859 = vcmask 101376
        %860 = vst.msk [vmem:[#allocation2 + $0x10] sm:$0xf] %vm859, %v855
        %v861 = vrot.slane %v562, 1
        %v862 = vsel %vm608, %v572, %v861
        %v863 = vrot.slane %v582, 7
        %v864 = vsel %vm611, %v863, %v862
        %v865 = vrot.slane %v592, 6
        %v866 = vsel %vm614, %v865, %v864
        %867 = vrot.lane.b32.xlu0 %v866, 125
        %v868 = vpop.permute.xlu0 %867
        %vm870 = vcmask 1048556
        %871 = vst.msk [vmem:[#allocation2 + $0x8] sm:$0xf0] %vm870, %v868
        %vm872 = vcmask 105476
        %873 = vst.msk [vmem:[#allocation2 + $0x10] sm:$0xf0] %vm872, %v868
        %v874 = vld [vmem:[%s344 + $0x4] sm:$0xf]
        %876 = vrot.lane.b32.xlu0 %v874, 47
        %v877 = vpop.permute.xlu0 %876
        %vm879 = vcmask 248952
        %880 = vst.msk [vmem:[#allocation2 + $0x10] sm:$0xf] %vm879, %v877
        %v881 = vrot.slane %v562, 2
        %v882 = vrot.slane %v572, 1
        %v883 = vsel %vm608, %v882, %v881
        %v884 = vsel %vm611, %v582, %v883
        %v885 = vrot.slane %v592, 7
        %v886 = vsel %vm614, %v885, %v884
        %887 = vrot.lane.b32.xlu0 %v886, 15
        %v888 = vpop.permute.xlu0 %887
        %vm890 = vcmask 253052
        %891 = vst.msk [vmem:[#allocation2 + $0x10] sm:$0xf0] %vm890, %v888
        %v892 = vld [vmem:[%s344 + $0x4] sm:$0xf]
        %894 = vrot.lane.b32.xlu0 %v892, 49
        %v895 = vpop.permute.xlu0 %894
        %vm897 = vcmask 396552
        %898 = vst.msk [vmem:[#allocation2 + $0x10] sm:$0xf] %vm897, %v895
        %v899 = vrot.slane %v562, 3
        %v900 = vrot.slane %v572, 2
        %v901 = vsel %vm608, %v900, %v899
        %v902 = vrot.slane %v582, 1
        %v903 = vsel %vm611, %v902, %v901
        %v904 = vsel %vm614, %v592, %v903
        %905 = vrot.lane.b32.xlu0 %v904, 33
        %v906 = vpop.permute.xlu0 %905
        %vm908 = vcmask 400652
        %909 = vst.msk [vmem:[#allocation2 + $0x10] sm:$0xf0] %vm908, %v906
        %v910 = vld [vmem:[#allocation2] sm:$0xff]
        %v911 = vld [vmem:[#allocation2 + $0x8] sm:$0xff]
        %v912 = vld [vmem:[#allocation2 + $0x10] sm:$0xff]
        %913 = vst [vmem:[#allocation3] sm:$0xff] %v910
        %914 = vst [vmem:[#allocation3 + $0x8] sm:$0xff] %v911
        %vm915 = vcmask 244736
        %916 = vst.msk [vmem:[#allocation3 + $0x10] sm:$0xff] %vm915, %v912
        %v917 = vld [vmem:[#allocation2] sm:$0xff]
        %v918 = vld [vmem:[#allocation2 + $0x8] sm:$0xff]
        %v919 = vld [vmem:[#allocation2 + $0x10] sm:$0xff]
        %923 = vrot.lane.b32.xlu0 %v917, 127
        %v924 = vpop.permute.xlu0 %923
        %925 = vrot.lane.b32.xlu0 %v918, 127
        %v926 = vpop.permute.xlu0 %925
        %927 = vrot.lane.b32.xlu0 %v919, 127
        %v928 = vpop.permute.xlu0 %927
        %vm929 = vcmask 1039360
        %v930 = vsel %vm929, %v924, %v926
        %v931 = vsel %vm929, %v926, %v928
        %935 = vst [vmem:[#allocation3 + $0x18] sm:$0xff] %v930
        %936 = vst [vmem:[#allocation3 + $0x20] sm:$0xff] %v931
        %937 = vst.msk [vmem:[#allocation3 + $0x28] sm:$0xff] %vm915, %v928
        %v938 = vld [vmem:[#allocation2] sm:$0xff]
        %v939 = vld [vmem:[#allocation2 + $0x8] sm:$0xff]
        %v940 = vld [vmem:[#allocation2 + $0x10] sm:$0xff]
        %944 = vrot.lane.b32.xlu0 %v938, 126
        %v945 = vpop.permute.xlu0 %944
        %946 = vrot.lane.b32.xlu0 %v939, 126
        %v947 = vpop.permute.xlu0 %946
        %948 = vrot.lane.b32.xlu0 %v940, 126
        %v949 = vpop.permute.xlu0 %948
        %vm950 = vcmask 1031168
        %v951 = vsel %vm950, %v945, %v947
        %v952 = vsel %vm950, %v947, %v949
        %956 = vst [vmem:[#allocation3 + $0x30] sm:$0xff] %v951
        %957 = vst [vmem:[#allocation3 + $0x38] sm:$0xff] %v952
        %958 = vst.msk [vmem:[#allocation3 + $0x40] sm:$0xff] %vm915, %v949
        %v959 = vld [vmem:[#allocation2] sm:$0xff]
        %v960 = vld [vmem:[#allocation2 + $0x8] sm:$0xff]
        %v961 = vld [vmem:[#allocation2 + $0x10] sm:$0xff]
        %965 = vrot.lane.b32.xlu0 %v959, 110
        %v966 = vpop.permute.xlu0 %965
        %967 = vrot.lane.b32.xlu0 %v960, 110
        %v968 = vpop.permute.xlu0 %967
        %969 = vrot.lane.b32.xlu0 %v961, 110
        %v970 = vpop.permute.xlu0 %969
        %vm971 = vcmask 900096
        %v972 = vsel %vm971, %v966, %v968
        %v973 = vsel %vm971, %v968, %v970
        %977 = vst [vmem:[#allocation3 + $0x48] sm:$0xff] %v972
        %978 = vst [vmem:[#allocation3 + $0x50] sm:$0xff] %v973
        %979 = vst.msk [vmem:[#allocation3 + $0x58] sm:$0xff] %vm915, %v970
        %v980 = vld [vmem:[#allocation2] sm:$0xff]
        %v981 = vld [vmem:[#allocation2 + $0x8] sm:$0xff]
        %v982 = vld [vmem:[#allocation2 + $0x10] sm:$0xff]
        %986 = vrot.lane.b32.xlu0 %v980, 109
        %v987 = vpop.permute.xlu0 %986
        %988 = vrot.lane.b32.xlu0 %v981, 109
        %v989 = vpop.permute.xlu0 %988
        %990 = vrot.lane.b32.xlu0 %v982, 109
        %v991 = vpop.permute.xlu0 %990
        %vm992 = vcmask 891904
        %v993 = vsel %vm992, %v987, %v989
        %v994 = vsel %vm992, %v989, %v991
        %998 = vst [vmem:[#allocation3 + $0x60] sm:$0xff] %v993
        %999 = vst [vmem:[#allocation3 + $0x68] sm:$0xff] %v994
        %1000 = vst.msk [vmem:[#allocation3 + $0x70] sm:$0xff] %vm915, %v991
        %v1001 = vld [vmem:[#allocation2] sm:$0xff]
        %v1002 = vld [vmem:[#allocation2 + $0x8] sm:$0xff]
        %v1003 = vld [vmem:[#allocation2 + $0x10] sm:$0xff]
        %1007 = vrot.lane.b32.xlu0 %v1001, 108
        %v1008 = vpop.permute.xlu0 %1007
        %1009 = vrot.lane.b32.xlu0 %v1002, 108
        %v1010 = vpop.permute.xlu0 %1009
        %1011 = vrot.lane.b32.xlu0 %v1003, 108
        %v1012 = vpop.permute.xlu0 %1011
        %vm1013 = vcmask 883712
        %v1014 = vsel %vm1013, %v1008, %v1010
        %v1015 = vsel %vm1013, %v1010, %v1012
        %1019 = vst [vmem:[#allocation3 + $0x78] sm:$0xff] %v1014
        %1020 = vst [vmem:[#allocation3 + $0x80] sm:$0xff] %v1015
        %1021 = vst.msk [vmem:[#allocation3 + $0x88] sm:$0xff] %vm915, %v1012
        %v1022 = vld [vmem:[#allocation2] sm:$0xff]
        %v1023 = vld [vmem:[#allocation2 + $0x8] sm:$0xff]
        %v1024 = vld [vmem:[#allocation2 + $0x10] sm:$0xff]
        %1028 = vrot.lane.b32.xlu0 %v1022, 92
        %v1029 = vpop.permute.xlu0 %1028
        %1030 = vrot.lane.b32.xlu0 %v1023, 92
        %v1031 = vpop.permute.xlu0 %1030
        %1032 = vrot.lane.b32.xlu0 %v1024, 92
        %v1033 = vpop.permute.xlu0 %1032
        %vm1034 = vcmask 752640
        %v1035 = vsel %vm1034, %v1029, %v1031
        %v1036 = vsel %vm1034, %v1031, %v1033
        %1040 = vst [vmem:[#allocation3 + $0x90] sm:$0xff] %v1035
        %1041 = vst [vmem:[#allocation3 + $0x98] sm:$0xff] %v1036
        %1042 = vst.msk [vmem:[#allocation3 + $0xa0] sm:$0xff] %vm915, %v1033
        %v1043 = vld [vmem:[#allocation2] sm:$0xff]
        %v1044 = vld [vmem:[#allocation2 + $0x8] sm:$0xff]
        %v1045 = vld [vmem:[#allocation2 + $0x10] sm:$0xff]
        %1049 = vrot.lane.b32.xlu0 %v1043, 91
        %v1050 = vpop.permute.xlu0 %1049
        %1051 = vrot.lane.b32.xlu0 %v1044, 91
        %v1052 = vpop.permute.xlu0 %1051
        %1053 = vrot.lane.b32.xlu0 %v1045, 91
        %v1054 = vpop.permute.xlu0 %1053
        %vm1055 = vcmask 744448
        %v1056 = vsel %vm1055, %v1050, %v1052
        %v1057 = vsel %vm1055, %v1052, %v1054
        %1061 = vst [vmem:[#allocation3 + $0xa8] sm:$0xff] %v1056
        %1062 = vst [vmem:[#allocation3 + $0xb0] sm:$0xff] %v1057
        %1063 = vst.msk [vmem:[#allocation3 + $0xb8] sm:$0xff] %vm915, %v1054
        %v1064 = vld [vmem:[#allocation2] sm:$0xff]
        %v1065 = vld [vmem:[#allocation2 + $0x8] sm:$0xff]
        %v1066 = vld [vmem:[#allocation2 + $0x10] sm:$0xff]
        %1070 = vrot.lane.b32.xlu0 %v1064, 90
        %v1071 = vpop.permute.xlu0 %1070
        %1072 = vrot.lane.b32.xlu0 %v1065, 90
        %v1073 = vpop.permute.xlu0 %1072
        %1074 = vrot.lane.b32.xlu0 %v1066, 90
        %v1075 = vpop.permute.xlu0 %1074
        %vm1076 = vcmask 736256
        %v1077 = vsel %vm1076, %v1071, %v1073
        %v1078 = vsel %vm1076, %v1073, %v1075
        %1082 = vst [vmem:[#allocation3 + $0xc0] sm:$0xff] %v1077
        %1083 = vst [vmem:[#allocation3 + $0xc8] sm:$0xff] %v1078
        %1084 = vst.msk [vmem:[#allocation3 + $0xd0] sm:$0xff] %vm915, %v1075
        %v1085 = vld [vmem:[%s5] sm:$0xff]
        %v1086 = vld [vmem:[#allocation3] sm:$0xff]
        %v1087 = vld [vmem:[#allocation3 + $0x8] sm:$0xff]
        %v1088 = vld [vmem:[#allocation3 + $0x10] sm:$0xff]
        %v1089 = vld [vmem:[#allocation3 + $0x18] sm:$0xff]
        %v1090 = vld [vmem:[#allocation3 + $0x20] sm:$0xff]
        %v1091 = vld [vmem:[#allocation3 + $0x28] sm:$0xff]
        %v1092 = vld [vmem:[#allocation3 + $0x30] sm:$0xff]
        %v1093 = vld [vmem:[#allocation3 + $0x38] sm:$0xff]
        %v1094 = vld [vmem:[#allocation3 + $0x40] sm:$0xff]
        %v1095 = vld [vmem:[#allocation3 + $0x48] sm:$0xff]
        %v1096 = vld [vmem:[#allocation3 + $0x50] sm:$0xff]
        %v1097 = vld [vmem:[#allocation3 + $0x58] sm:$0xff]
        %v1098 = vld [vmem:[#allocation3 + $0x60] sm:$0xff]
        %v1099 = vld [vmem:[#allocation3 + $0x68] sm:$0xff]
        %v1100 = vld [vmem:[#allocation3 + $0x70] sm:$0xff]
        %v1101 = vld [vmem:[#allocation3 + $0x78] sm:$0xff]
        %v1102 = vld [vmem:[#allocation3 + $0x80] sm:$0xff]
        %v1103 = vld [vmem:[#allocation3 + $0x88] sm:$0xff]
        %v1104 = vld [vmem:[#allocation3 + $0x90] sm:$0xff]
        %v1105 = vld [vmem:[#allocation3 + $0x98] sm:$0xff]
        %v1106 = vld [vmem:[#allocation3 + $0xa0] sm:$0xff]
        %v1107 = vld [vmem:[#allocation3 + $0xa8] sm:$0xff]
        %v1108 = vld [vmem:[#allocation3 + $0xb0] sm:$0xff]
        %v1109 = vld [vmem:[#allocation3 + $0xb8] sm:$0xff]
        %v1110 = vld [vmem:[#allocation3 + $0xc0] sm:$0xff]
        %v1111 = vld [vmem:[#allocation3 + $0xc8] sm:$0xff]
        %v1112 = vld [vmem:[#allocation3 + $0xd0] sm:$0xff]
        %vm1113 = vcmask 588800
        %v1115 = vsel %vm1113, %v1085, 0
        %1117 = vmatprep.subr.mxu0 0.0
        %1118 = vmatpush1.msra.mxu0 0.0
        %1119 = vmatprep.subr.mxu0 0.0
        %1120 = vmatpush1.msra.mxu0 0.0
        %1121 = vmatprep.subr.mxu0 0.0
        %1122 = vmatpush1.msra.mxu0 0.0
        %1123 = vmatprep.subr.mxu0 0.0
        %1124 = vmatpush1.msra.mxu0 0.0
        %1125 = vmatprep.subr.mxu0 0.0
        %1126 = vmatpush1.msra.mxu0 0.0
        %1127 = vmatprep.subr.mxu0 0.0
        %1128 = vmatpush1.msra.mxu0 0.0
        %1129 = vmatprep.subr.mxu0 0.0
        %1130 = vmatpush1.msra.mxu0 0.0
        %1131 = vmatprep.subr.mxu0 %v1111
        %1132 = vmatpush1.msra.mxu0 %v1110
        %1133 = vmatprep.subr.mxu0 %v1108
        %1134 = vmatpush1.msra.mxu0 %v1107
        %1135 = vmatprep.subr.mxu0 %v1105
        %1136 = vmatpush1.msra.mxu0 %v1104
        %1137 = vmatprep.subr.mxu0 %v1102
        %1138 = vmatpush1.msra.mxu0 %v1101
        %1139 = vmatprep.subr.mxu0 %v1099
        %1140 = vmatpush1.msra.mxu0 %v1098
        %1141 = vmatprep.subr.mxu0 %v1096
        %1142 = vmatpush1.msra.mxu0 %v1095
        %1143 = vmatprep.subr.mxu0 %v1093
        %1144 = vmatpush1.msra.mxu0 %v1092
        %1145 = vmatprep.subr.mxu0 %v1090
        %1146 = vmatpush1.msra.mxu0 %v1089
        %1147 = vmatprep.subr.mxu0 %v1087
        %1148 = vmatpush1.msra.mxu0 %v1086
        %1149 = vmatprep.subr.mxu0 0.0
        %1150 = vmatpush2.msra.mxu0 0.0
        %1151 = vmatprep.subr.mxu0 0.0
        %1152 = vmatpush2.msra.mxu0 0.0
        %1153 = vmatprep.subr.mxu0 0.0
        %1154 = vmatpush2.msra.mxu0 0.0
        %1155 = vmatprep.subr.mxu0 0.0
        %1156 = vmatpush2.msra.mxu0 0.0
        %1157 = vmatprep.subr.mxu0 0.0
        %1158 = vmatpush2.msra.mxu0 0.0
        %1159 = vmatprep.subr.mxu0 0.0
        %1160 = vmatpush2.msra.mxu0 0.0
        %1161 = vmatprep.subr.mxu0 0.0
        %1162 = vmatpush2.msra.mxu0 0.0
        %1163 = vmatprep.subr.mxu0 0.0
        %1164 = vmatpush2.msra.mxu0 0.0
        %1165 = vmatprep.subr.mxu0 0.0
        %1166 = vmatpush2.msra.mxu0 0.0
        %1167 = vmatprep.subr.mxu0 0.0
        %1168 = vmatpush2.msra.mxu0 0.0
        %1169 = vmatprep.subr.mxu0 0.0
        %1170 = vmatpush2.msra.mxu0 0.0
        %1171 = vmatprep.subr.mxu0 0.0
        %1172 = vmatpush2.msra.mxu0 0.0
        %1173 = vmatprep.subr.mxu0 0.0
        %1174 = vmatpush2.msra.mxu0 0.0
        %1175 = vmatprep.subr.mxu0 0.0
        %1176 = vmatpush2.msra.mxu0 0.0
        %1177 = vmatprep.subr.mxu0 0.0
        %1178 = vmatpush2.msra.mxu0 0.0
        %1179 = vmatprep.subr.mxu0 0.0
        %1180 = vmatpush2.msra.mxu0 0.0
        %1181 = vmatprep.mubr.f32.mxu0 0.0
        %1182 = vmatmul.mubr.f32.gmra.mxu0 %v1115
        %v1183 = vpop.f32.mrf.mxu0
        %v1184 = vadd.f32 0.0, %v1183
        %v1185 = vpop.f32.mrf.mxu0
        %v1186 = vadd.f32 0.0, %v1185
        %1187 = vdwg.mxu0
        %1188 = vmatprep.subr.mxu0 0.0
        %1189 = vmatpush1.msra.mxu0 0.0
        %1190 = vmatprep.subr.mxu0 0.0
        %1191 = vmatpush1.msra.mxu0 0.0
        %1192 = vmatprep.subr.mxu0 0.0
        %1193 = vmatpush1.msra.mxu0 0.0
        %1194 = vmatprep.subr.mxu0 0.0
        %1195 = vmatpush1.msra.mxu0 0.0
        %1196 = vmatprep.subr.mxu0 0.0
        %1197 = vmatpush1.msra.mxu0 0.0
        %1198 = vmatprep.subr.mxu0 0.0
        %1199 = vmatpush1.msra.mxu0 0.0
        %1200 = vmatprep.subr.mxu0 0.0
        %1201 = vmatpush1.msra.mxu0 0.0
        %1202 = vmatprep.subr.mxu0 0.0
        %1203 = vmatpush1.msra.mxu0 %v1112
        %1204 = vmatprep.subr.mxu0 0.0
        %1205 = vmatpush1.msra.mxu0 %v1109
        %1206 = vmatprep.subr.mxu0 0.0
        %1207 = vmatpush1.msra.mxu0 %v1106
        %1208 = vmatprep.subr.mxu0 0.0
        %1209 = vmatpush1.msra.mxu0 %v1103
        %1210 = vmatprep.subr.mxu0 0.0
        %1211 = vmatpush1.msra.mxu0 %v1100
        %1212 = vmatprep.subr.mxu0 0.0
        %1213 = vmatpush1.msra.mxu0 %v1097
        %1214 = vmatprep.subr.mxu0 0.0
        %1215 = vmatpush1.msra.mxu0 %v1094
        %1216 = vmatprep.subr.mxu0 0.0
        %1217 = vmatpush1.msra.mxu0 %v1091
        %1218 = vmatprep.subr.mxu0 0.0
        %1219 = vmatpush1.msra.mxu0 %v1088
        %1220 = vmatprep.subr.mxu0 0.0
        %1221 = vmatpush2.msra.mxu0 0.0
        %1222 = vmatprep.subr.mxu0 0.0
        %1223 = vmatpush2.msra.mxu0 0.0
        %1224 = vmatprep.subr.mxu0 0.0
        %1225 = vmatpush2.msra.mxu0 0.0
        %1226 = vmatprep.subr.mxu0 0.0
        %1227 = vmatpush2.msra.mxu0 0.0
        %1228 = vmatprep.subr.mxu0 0.0
        %1229 = vmatpush2.msra.mxu0 0.0
        %1230 = vmatprep.subr.mxu0 0.0
        %1231 = vmatpush2.msra.mxu0 0.0
        %1232 = vmatprep.subr.mxu0 0.0
        %1233 = vmatpush2.msra.mxu0 0.0
        %1234 = vmatprep.subr.mxu0 0.0
        %1235 = vmatpush2.msra.mxu0 0.0
        %1236 = vmatprep.subr.mxu0 0.0
        %1237 = vmatpush2.msra.mxu0 0.0
        %1238 = vmatprep.subr.mxu0 0.0
        %1239 = vmatpush2.msra.mxu0 0.0
        %1240 = vmatprep.subr.mxu0 0.0
        %1241 = vmatpush2.msra.mxu0 0.0
        %1242 = vmatprep.subr.mxu0 0.0
        %1243 = vmatpush2.msra.mxu0 0.0
        %1244 = vmatprep.subr.mxu0 0.0
        %1245 = vmatpush2.msra.mxu0 0.0
        %1246 = vmatprep.subr.mxu0 0.0
        %1247 = vmatpush2.msra.mxu0 0.0
        %1248 = vmatprep.subr.mxu0 0.0
        %1249 = vmatpush2.msra.mxu0 0.0
        %1250 = vmatprep.subr.mxu0 0.0
        %1251 = vmatpush2.msra.mxu0 0.0
        %1252 = vmatprep.mubr.f32.mxu0 0.0
        %1253 = vmatmul.mubr.f32.gmra.mxu0 %v1115
        %v1254 = vpop.f32.mrf.mxu0
        %v1255 = vadd.f32 0.0, %v1254
        %v1256 = vpop.f32.mrf.mxu0
        %1257 = vdwg.mxu0
        %v1258 = vmax.f32 %v1184, 0.0
        %v1259 = vmax.f32 %v1186, 0.0
        %v1260 = vmax.f32 %v1255, 0.0
        %v1261 = vld [vmem:[#allocation4] sm:$0x7]
        %v1263 = vlaneseq
        %v1264 = vshrl.u32 %v1263, 7
        %v1265 = vsub.s32 0, %v1264
        %v1266 = vrot.slane %v1261, %v1265
        %v1267 = vlaneseq
        %v1268 = vshrl.u32 %v1267, 7
        %v1269 = vsub.s32 1, %v1268
        %v1270 = vrot.slane %v1261, %v1269
        %v1271 = vlaneseq
        %v1272 = vshrl.u32 %v1271, 7
        %v1273 = vsub.s32 2, %v1272
        %v1274 = vrot.slane %v1261, %v1273
        %v1278 = vmul.f32 %v1258, %v1266
        %v1279 = vmul.f32 %v1259, %v1270
        %v1280 = vmul.f32 %v1260, %v1274
        %1284 = vrot.lane.b32.xlu0 %v1278, 19
        %v1285 = vpop.permute.xlu0 %1284
        %1286 = vrot.lane.b32.xlu0 %v1279, 19
        %v1287 = vpop.permute.xlu0 %1286
        %1288 = vrot.lane.b32.xlu0 %v1280, 19
        %v1289 = vpop.permute.xlu0 %1288
        %vm1290 = vcmask 154624
        %v1291 = vsel %vm1290, %v1285, %v1287
        %v1292 = vsel %vm1290, %v1287, %v1289
        %vm1296 = vcmask 1047704
        %1297 = vst.msk [vmem:[#allocation2] sm:$0xff] %vm1296, %v1285
        %1298 = vst [vmem:[#allocation2 + $0x8] sm:$0xff] %v1291
        %vm1299 = vcmask 400384
        %1300 = vst.msk [vmem:[#allocation2 + $0x10] sm:$0xff] %vm1299, %v1292
        %v1301 = vld [vmem:[#allocation2] sm:$0xff]
        %v1302 = vld [vmem:[#allocation2 + $0x8] sm:$0xff]
        %v1303 = vld [vmem:[#allocation2 + $0x10] sm:$0xff]
        %1304 = vst [vmem:[#allocation3] sm:$0xff] %v1301
        %1305 = vst [vmem:[#allocation3 + $0x8] sm:$0xff] %v1302
        %1306 = vst.msk [vmem:[#allocation3 + $0x10] sm:$0xff] %vm915, %v1303
        %v1307 = vld [vmem:[#allocation2] sm:$0xff]
        %v1308 = vld [vmem:[#allocation2 + $0x8] sm:$0xff]
        %v1309 = vld [vmem:[#allocation2 + $0x10] sm:$0xff]
        %1313 = vrot.lane.b32.xlu0 %v1307, 127
        %v1314 = vpop.permute.xlu0 %1313
        %1315 = vrot.lane.b32.xlu0 %v1308, 127
        %v1316 = vpop.permute.xlu0 %1315
        %1317 = vrot.lane.b32.xlu0 %v1309, 127
        %v1318 = vpop.permute.xlu0 %1317
        %v1319 = vsel %vm929, %v1314, %v1316
        %v1320 = vsel %vm929, %v1316, %v1318
        %1324 = vst [vmem:[#allocation3 + $0x18] sm:$0xff] %v1319
        %1325 = vst [vmem:[#allocation3 + $0x20] sm:$0xff] %v1320
        %1326 = vst.msk [vmem:[#allocation3 + $0x28] sm:$0xff] %vm915, %v1318
        %v1327 = vld [vmem:[#allocation2] sm:$0xff]
        %v1328 = vld [vmem:[#allocation2 + $0x8] sm:$0xff]
        %v1329 = vld [vmem:[#allocation2 + $0x10] sm:$0xff]
        %1333 = vrot.lane.b32.xlu0 %v1327, 126
        %v1334 = vpop.permute.xlu0 %1333
        %1335 = vrot.lane.b32.xlu0 %v1328, 126
        %v1336 = vpop.permute.xlu0 %1335
        %1337 = vrot.lane.b32.xlu0 %v1329, 126
        %v1338 = vpop.permute.xlu0 %1337
        %v1339 = vsel %vm950, %v1334, %v1336
        %v1340 = vsel %vm950, %v1336, %v1338
        %1344 = vst [vmem:[#allocation3 + $0x30] sm:$0xff] %v1339
        %1345 = vst [vmem:[#allocation3 + $0x38] sm:$0xff] %v1340
        %1346 = vst.msk [vmem:[#allocation3 + $0x40] sm:$0xff] %vm915, %v1338
        %v1347 = vld [vmem:[#allocation2] sm:$0xff]
        %v1348 = vld [vmem:[#allocation2 + $0x8] sm:$0xff]
        %v1349 = vld [vmem:[#allocation2 + $0x10] sm:$0xff]
        %1353 = vrot.lane.b32.xlu0 %v1347, 110
        %v1354 = vpop.permute.xlu0 %1353
        %1355 = vrot.lane.b32.xlu0 %v1348, 110
        %v1356 = vpop.permute.xlu0 %1355
        %1357 = vrot.lane.b32.xlu0 %v1349, 110
        %v1358 = vpop.permute.xlu0 %1357
        %v1359 = vsel %vm971, %v1354, %v1356
        %v1360 = vsel %vm971, %v1356, %v1358
        %1364 = vst [vmem:[#allocation3 + $0x48] sm:$0xff] %v1359
        %1365 = vst [vmem:[#allocation3 + $0x50] sm:$0xff] %v1360
        %1366 = vst.msk [vmem:[#allocation3 + $0x58] sm:$0xff] %vm915, %v1358
        %v1367 = vld [vmem:[#allocation2] sm:$0xff]
        %v1368 = vld [vmem:[#allocation2 + $0x8] sm:$0xff]
        %v1369 = vld [vmem:[#allocation2 + $0x10] sm:$0xff]
        %1373 = vrot.lane.b32.xlu0 %v1367, 109
        %v1374 = vpop.permute.xlu0 %1373
        %1375 = vrot.lane.b32.xlu0 %v1368, 109
        %v1376 = vpop.permute.xlu0 %1375
        %1377 = vrot.lane.b32.xlu0 %v1369, 109
        %v1378 = vpop.permute.xlu0 %1377
        %v1379 = vsel %vm992, %v1374, %v1376
        %v1380 = vsel %vm992, %v1376, %v1378
        %1384 = vst [vmem:[#allocation3 + $0x60] sm:$0xff] %v1379
        %1385 = vst [vmem:[#allocation3 + $0x68] sm:$0xff] %v1380
        %1386 = vst.msk [vmem:[#allocation3 + $0x70] sm:$0xff] %vm915, %v1378
        %v1387 = vld [vmem:[#allocation2] sm:$0xff]
        %v1388 = vld [vmem:[#allocation2 + $0x8] sm:$0xff]
        %v1389 = vld [vmem:[#allocation2 + $0x10] sm:$0xff]
        %1393 = vrot.lane.b32.xlu0 %v1387, 108
        %v1394 = vpop.permute.xlu0 %1393
        %1395 = vrot.lane.b32.xlu0 %v1388, 108
        %v1396 = vpop.permute.xlu0 %1395
        %1397 = vrot.lane.b32.xlu0 %v1389, 108
        %v1398 = vpop.permute.xlu0 %1397
        %v1399 = vsel %vm1013, %v1394, %v1396
        %v1400 = vsel %vm1013, %v1396, %v1398
        %1404 = vst [vmem:[#allocation3 + $0x78] sm:$0xff] %v1399
        %1405 = vst [vmem:[#allocation3 + $0x80] sm:$0xff] %v1400
        %1406 = vst.msk [vmem:[#allocation3 + $0x88] sm:$0xff] %vm915, %v1398
        %v1407 = vld [vmem:[#allocation2] sm:$0xff]
        %v1408 = vld [vmem:[#allocation2 + $0x8] sm:$0xff]
        %v1409 = vld [vmem:[#allocation2 + $0x10] sm:$0xff]
        %1413 = vrot.lane.b32.xlu0 %v1407, 92
        %v1414 = vpop.permute.xlu0 %1413
        %1415 = vrot.lane.b32.xlu0 %v1408, 92
        %v1416 = vpop.permute.xlu0 %1415
        %1417 = vrot.lane.b32.xlu0 %v1409, 92
        %v1418 = vpop.permute.xlu0 %1417
        %v1419 = vsel %vm1034, %v1414, %v1416
        %v1420 = vsel %vm1034, %v1416, %v1418
        %1424 = vst [vmem:[#allocation3 + $0x90] sm:$0xff] %v1419
        %1425 = vst [vmem:[#allocation3 + $0x98] sm:$0xff] %v1420
        %1426 = vst.msk [vmem:[#allocation3 + $0xa0] sm:$0xff] %vm915, %v1418
        %v1427 = vld [vmem:[#allocation2] sm:$0xff]
        %v1428 = vld [vmem:[#allocation2 + $0x8] sm:$0xff]
        %v1429 = vld [vmem:[#allocation2 + $0x10] sm:$0xff]
        %1433 = vrot.lane.b32.xlu0 %v1427, 91
        %v1434 = vpop.permute.xlu0 %1433
        %1435 = vrot.lane.b32.xlu0 %v1428, 91
        %v1436 = vpop.permute.xlu0 %1435
        %1437 = vrot.lane.b32.xlu0 %v1429, 91
        %v1438 = vpop.permute.xlu0 %1437
        %v1439 = vsel %vm1055, %v1434, %v1436
        %v1440 = vsel %vm1055, %v1436, %v1438
        %1444 = vst [vmem:[#allocation3 + $0xa8] sm:$0xff] %v1439
        %1445 = vst [vmem:[#allocation3 + $0xb0] sm:$0xff] %v1440
        %1446 = vst.msk [vmem:[#allocation3 + $0xb8] sm:$0xff] %vm915, %v1438
        %v1447 = vld [vmem:[#allocation2] sm:$0xff]
        %v1448 = vld [vmem:[#allocation2 + $0x8] sm:$0xff]
        %v1449 = vld [vmem:[#allocation2 + $0x10] sm:$0xff]
        %1453 = vrot.lane.b32.xlu0 %v1447, 90
        %v1454 = vpop.permute.xlu0 %1453
        %1455 = vrot.lane.b32.xlu0 %v1448, 90
        %v1456 = vpop.permute.xlu0 %1455
        %1457 = vrot.lane.b32.xlu0 %v1449, 90
        %v1458 = vpop.permute.xlu0 %1457
        %v1459 = vsel %vm1076, %v1454, %v1456
        %v1460 = vsel %vm1076, %v1456, %v1458
        %1464 = vst [vmem:[#allocation3 + $0xc0] sm:$0xff] %v1459
        %1465 = vst [vmem:[#allocation3 + $0xc8] sm:$0xff] %v1460
        %1466 = vst.msk [vmem:[#allocation3 + $0xd0] sm:$0xff] %vm915, %v1458
        %v1467 = vld [vmem:[%s6] sm:$0xff]
        %v1468 = vld [vmem:[#allocation3] sm:$0xff]
        %v1469 = vld [vmem:[#allocation3 + $0x8] sm:$0xff]
        %v1470 = vld [vmem:[#allocation3 + $0x10] sm:$0xff]
        %v1471 = vld [vmem:[#allocation3 + $0x18] sm:$0xff]
        %v1472 = vld [vmem:[#allocation3 + $0x20] sm:$0xff]
        %v1473 = vld [vmem:[#allocation3 + $0x28] sm:$0xff]
        %v1474 = vld [vmem:[#allocation3 + $0x30] sm:$0xff]
        %v1475 = vld [vmem:[#allocation3 + $0x38] sm:$0xff]
        %v1476 = vld [vmem:[#allocation3 + $0x40] sm:$0xff]
        %v1477 = vld [vmem:[#allocation3 + $0x48] sm:$0xff]
        %v1478 = vld [vmem:[#allocation3 + $0x50] sm:$0xff]
        %v1479 = vld [vmem:[#allocation3 + $0x58] sm:$0xff]
        %v1480 = vld [vmem:[#allocation3 + $0x60] sm:$0xff]
        %v1481 = vld [vmem:[#allocation3 + $0x68] sm:$0xff]
        %v1482 = vld [vmem:[#allocation3 + $0x70] sm:$0xff]
        %v1483 = vld [vmem:[#allocation3 + $0x78] sm:$0xff]
        %v1484 = vld [vmem:[#allocation3 + $0x80] sm:$0xff]
        %v1485 = vld [vmem:[#allocation3 + $0x88] sm:$0xff]
        %v1486 = vld [vmem:[#allocation3 + $0x90] sm:$0xff]
        %v1487 = vld [vmem:[#allocation3 + $0x98] sm:$0xff]
        %v1488 = vld [vmem:[#allocation3 + $0xa0] sm:$0xff]
        %v1489 = vld [vmem:[#allocation3 + $0xa8] sm:$0xff]
        %v1490 = vld [vmem:[#allocation3 + $0xb0] sm:$0xff]
        %v1491 = vld [vmem:[#allocation3 + $0xb8] sm:$0xff]
        %v1492 = vld [vmem:[#allocation3 + $0xc0] sm:$0xff]
        %v1493 = vld [vmem:[#allocation3 + $0xc8] sm:$0xff]
        %v1494 = vld [vmem:[#allocation3 + $0xd0] sm:$0xff]
        %v1496 = vsel %vm1113, %v1467, 0
        %1498 = vmatprep.subr.mxu0 0.0
        %1499 = vmatpush1.msra.mxu0 0.0
        %1500 = vmatprep.subr.mxu0 0.0
        %1501 = vmatpush1.msra.mxu0 0.0
        %1502 = vmatprep.subr.mxu0 0.0
        %1503 = vmatpush1.msra.mxu0 0.0
        %1504 = vmatprep.subr.mxu0 0.0
        %1505 = vmatpush1.msra.mxu0 0.0
        %1506 = vmatprep.subr.mxu0 0.0
        %1507 = vmatpush1.msra.mxu0 0.0
        %1508 = vmatprep.subr.mxu0 0.0
        %1509 = vmatpush1.msra.mxu0 0.0
        %1510 = vmatprep.subr.mxu0 0.0
        %1511 = vmatpush1.msra.mxu0 0.0
        %1512 = vmatprep.subr.mxu0 %v1493
        %1513 = vmatpush1.msra.mxu0 %v1492
        %1514 = vmatprep.subr.mxu0 %v1490
        %1515 = vmatpush1.msra.mxu0 %v1489
        %1516 = vmatprep.subr.mxu0 %v1487
        %1517 = vmatpush1.msra.mxu0 %v1486
        %1518 = vmatprep.subr.mxu0 %v1484
        %1519 = vmatpush1.msra.mxu0 %v1483
        %1520 = vmatprep.subr.mxu0 %v1481
        %1521 = vmatpush1.msra.mxu0 %v1480
        %1522 = vmatprep.subr.mxu0 %v1478
        %1523 = vmatpush1.msra.mxu0 %v1477
        %1524 = vmatprep.subr.mxu0 %v1475
        %1525 = vmatpush1.msra.mxu0 %v1474
        %1526 = vmatprep.subr.mxu0 %v1472
        %1527 = vmatpush1.msra.mxu0 %v1471
        %1528 = vmatprep.subr.mxu0 %v1469
        %1529 = vmatpush1.msra.mxu0 %v1468
        %1530 = vmatprep.subr.mxu0 0.0
        %1531 = vmatpush2.msra.mxu0 0.0
        %1532 = vmatprep.subr.mxu0 0.0
        %1533 = vmatpush2.msra.mxu0 0.0
        %1534 = vmatprep.subr.mxu0 0.0
        %1535 = vmatpush2.msra.mxu0 0.0
        %1536 = vmatprep.subr.mxu0 0.0
        %1537 = vmatpush2.msra.mxu0 0.0
        %1538 = vmatprep.subr.mxu0 0.0
        %1539 = vmatpush2.msra.mxu0 0.0
        %1540 = vmatprep.subr.mxu0 0.0
        %1541 = vmatpush2.msra.mxu0 0.0
        %1542 = vmatprep.subr.mxu0 0.0
        %1543 = vmatpush2.msra.mxu0 0.0
        %1544 = vmatprep.subr.mxu0 0.0
        %1545 = vmatpush2.msra.mxu0 0.0
        %1546 = vmatprep.subr.mxu0 0.0
        %1547 = vmatpush2.msra.mxu0 0.0
        %1548 = vmatprep.subr.mxu0 0.0
        %1549 = vmatpush2.msra.mxu0 0.0
        %1550 = vmatprep.subr.mxu0 0.0
        %1551 = vmatpush2.msra.mxu0 0.0
        %1552 = vmatprep.subr.mxu0 0.0
        %1553 = vmatpush2.msra.mxu0 0.0
        %1554 = vmatprep.subr.mxu0 0.0
        %1555 = vmatpush2.msra.mxu0 0.0
        %1556 = vmatprep.subr.mxu0 0.0
        %1557 = vmatpush2.msra.mxu0 0.0
        %1558 = vmatprep.subr.mxu0 0.0
        %1559 = vmatpush2.msra.mxu0 0.0
        %1560 = vmatprep.subr.mxu0 0.0
        %1561 = vmatpush2.msra.mxu0 0.0
        %1562 = vmatprep.mubr.f32.mxu0 0.0
        %1563 = vmatmul.mubr.f32.gmra.mxu0 %v1496
        %v1564 = vpop.f32.mrf.mxu0
        %v1565 = vadd.f32 0.0, %v1564
        %v1566 = vpop.f32.mrf.mxu0
        %v1567 = vadd.f32 0.0, %v1566
        %1568 = vdwg.mxu0
        %1569 = vmatprep.subr.mxu0 0.0
        %1570 = vmatpush1.msra.mxu0 0.0
        %1571 = vmatprep.subr.mxu0 0.0
        %1572 = vmatpush1.msra.mxu0 0.0
        %1573 = vmatprep.subr.mxu0 0.0
        %1574 = vmatpush1.msra.mxu0 0.0
        %1575 = vmatprep.subr.mxu0 0.0
        %1576 = vmatpush1.msra.mxu0 0.0
        %1577 = vmatprep.subr.mxu0 0.0
        %1578 = vmatpush1.msra.mxu0 0.0
        %1579 = vmatprep.subr.mxu0 0.0
        %1580 = vmatpush1.msra.mxu0 0.0
        %1581 = vmatprep.subr.mxu0 0.0
        %1582 = vmatpush1.msra.mxu0 0.0
        %1583 = vmatprep.subr.mxu0 0.0
        %1584 = vmatpush1.msra.mxu0 %v1494
        %1585 = vmatprep.subr.mxu0 0.0
        %1586 = vmatpush1.msra.mxu0 %v1491
        %1587 = vmatprep.subr.mxu0 0.0
        %1588 = vmatpush1.msra.mxu0 %v1488
        %1589 = vmatprep.subr.mxu0 0.0
        %1590 = vmatpush1.msra.mxu0 %v1485
        %1591 = vmatprep.subr.mxu0 0.0
        %1592 = vmatpush1.msra.mxu0 %v1482
        %1593 = vmatprep.subr.mxu0 0.0
        %1594 = vmatpush1.msra.mxu0 %v1479
        %1595 = vmatprep.subr.mxu0 0.0
        %1596 = vmatpush1.msra.mxu0 %v1476
        %1597 = vmatprep.subr.mxu0 0.0
        %1598 = vmatpush1.msra.mxu0 %v1473
        %1599 = vmatprep.subr.mxu0 0.0
        %1600 = vmatpush1.msra.mxu0 %v1470
        %1601 = vmatprep.subr.mxu0 0.0
        %1602 = vmatpush2.msra.mxu0 0.0
        %1603 = vmatprep.subr.mxu0 0.0
        %1604 = vmatpush2.msra.mxu0 0.0
        %1605 = vmatprep.subr.mxu0 0.0
        %1606 = vmatpush2.msra.mxu0 0.0
        %1607 = vmatprep.subr.mxu0 0.0
        %1608 = vmatpush2.msra.mxu0 0.0
        %1609 = vmatprep.subr.mxu0 0.0
        %1610 = vmatpush2.msra.mxu0 0.0
        %1611 = vmatprep.subr.mxu0 0.0
        %1612 = vmatpush2.msra.mxu0 0.0
        %1613 = vmatprep.subr.mxu0 0.0
        %1614 = vmatpush2.msra.mxu0 0.0
        %1615 = vmatprep.subr.mxu0 0.0
        %1616 = vmatpush2.msra.mxu0 0.0
        %1617 = vmatprep.subr.mxu0 0.0
        %1618 = vmatpush2.msra.mxu0 0.0
        %1619 = vmatprep.subr.mxu0 0.0
        %1620 = vmatpush2.msra.mxu0 0.0
        %1621 = vmatprep.subr.mxu0 0.0
        %1622 = vmatpush2.msra.mxu0 0.0
        %1623 = vmatprep.subr.mxu0 0.0
        %1624 = vmatpush2.msra.mxu0 0.0
        %1625 = vmatprep.subr.mxu0 0.0
        %1626 = vmatpush2.msra.mxu0 0.0
        %1627 = vmatprep.subr.mxu0 0.0
        %1628 = vmatpush2.msra.mxu0 0.0
        %1629 = vmatprep.subr.mxu0 0.0
        %1630 = vmatpush2.msra.mxu0 0.0
        %1631 = vmatprep.subr.mxu0 0.0
        %1632 = vmatpush2.msra.mxu0 0.0
        %1633 = vmatprep.mubr.f32.mxu0 0.0
        %1634 = vmatmul.mubr.f32.gmra.mxu0 %v1496
        %v1635 = vpop.f32.mrf.mxu0
        %v1636 = vadd.f32 0.0, %v1635
        %v1637 = vpop.f32.mrf.mxu0
        %1638 = vdwg.mxu0
        %v1639 = vmax.f32 %v1565, 0.0
        %v1640 = vmax.f32 %v1567, 0.0
        %v1641 = vmax.f32 %v1636, 0.0
        %v1642 = vld [vmem:[#allocation4] sm:$0x7]
        %v1644 = vlaneseq
        %v1645 = vshrl.u32 %v1644, 7
        %v1646 = vsub.s32 0, %v1645
        %v1647 = vrot.slane %v1642, %v1646
        %v1648 = vlaneseq
        %v1649 = vshrl.u32 %v1648, 7
        %v1650 = vsub.s32 1, %v1649
        %v1651 = vrot.slane %v1642, %v1650
        %v1652 = vlaneseq
        %v1653 = vshrl.u32 %v1652, 7
        %v1654 = vsub.s32 2, %v1653
        %v1655 = vrot.slane %v1642, %v1654
        %v1659 = vmul.f32 %v1639, %v1647
        %v1660 = vmul.f32 %v1640, %v1651
        %v1661 = vmul.f32 %v1641, %v1655
        %1665 = vrot.lane.b32.xlu0 %v1659, 19
        %v1666 = vpop.permute.xlu0 %1665
        %1667 = vrot.lane.b32.xlu0 %v1660, 19
        %v1668 = vpop.permute.xlu0 %1667
        %1669 = vrot.lane.b32.xlu0 %v1661, 19
        %v1670 = vpop.permute.xlu0 %1669
        %v1671 = vsel %vm1290, %v1666, %v1668
        %v1672 = vsel %vm1290, %v1668, %v1670
        %1676 = vst.msk [vmem:[#allocation2] sm:$0xff] %vm1296, %v1666
        %1677 = vst [vmem:[#allocation2 + $0x8] sm:$0xff] %v1671
        %1678 = vst.msk [vmem:[#allocation2 + $0x10] sm:$0xff] %vm1299, %v1672
        %v1679 = vld [vmem:[#allocation2] sm:$0xff]
        %v1680 = vld [vmem:[#allocation2 + $0x8] sm:$0xff]
        %v1681 = vld [vmem:[#allocation2 + $0x10] sm:$0xff]
        %1682 = vst [vmem:[#allocation3] sm:$0xff] %v1679
        %1683 = vst [vmem:[#allocation3 + $0x8] sm:$0xff] %v1680
        %1684 = vst.msk [vmem:[#allocation3 + $0x10] sm:$0xff] %vm915, %v1681
        %v1685 = vld [vmem:[#allocation2] sm:$0xff]
        %v1686 = vld [vmem:[#allocation2 + $0x8] sm:$0xff]
        %v1687 = vld [vmem:[#allocation2 + $0x10] sm:$0xff]
        %1691 = vrot.lane.b32.xlu0 %v1685, 127
        %v1692 = vpop.permute.xlu0 %1691
        %1693 = vrot.lane.b32.xlu0 %v1686, 127
        %v1694 = vpop.permute.xlu0 %1693
        %1695 = vrot.lane.b32.xlu0 %v1687, 127
        %v1696 = vpop.permute.xlu0 %1695
        %v1697 = vsel %vm929, %v1692, %v1694
        %v1698 = vsel %vm929, %v1694, %v1696
        %1702 = vst [vmem:[#allocation3 + $0x18] sm:$0xff] %v1697
        %1703 = vst [vmem:[#allocation3 + $0x20] sm:$0xff] %v1698
        %1704 = vst.msk [vmem:[#allocation3 + $0x28] sm:$0xff] %vm915, %v1696
        %v1705 = vld [vmem:[#allocation2] sm:$0xff]
        %v1706 = vld [vmem:[#allocation2 + $0x8] sm:$0xff]
        %v1707 = vld [vmem:[#allocation2 + $0x10] sm:$0xff]
        %1711 = vrot.lane.b32.xlu0 %v1705, 126
        %v1712 = vpop.permute.xlu0 %1711
        %1713 = vrot.lane.b32.xlu0 %v1706, 126
        %v1714 = vpop.permute.xlu0 %1713
        %1715 = vrot.lane.b32.xlu0 %v1707, 126
        %v1716 = vpop.permute.xlu0 %1715
        %v1717 = vsel %vm950, %v1712, %v1714
        %v1718 = vsel %vm950, %v1714, %v1716
        %1722 = vst [vmem:[#allocation3 + $0x30] sm:$0xff] %v1717
        %1723 = vst [vmem:[#allocation3 + $0x38] sm:$0xff] %v1718
        %1724 = vst.msk [vmem:[#allocation3 + $0x40] sm:$0xff] %vm915, %v1716
        %v1725 = vld [vmem:[#allocation2] sm:$0xff]
        %v1726 = vld [vmem:[#allocation2 + $0x8] sm:$0xff]
        %v1727 = vld [vmem:[#allocation2 + $0x10] sm:$0xff]
        %1731 = vrot.lane.b32.xlu0 %v1725, 110
        %v1732 = vpop.permute.xlu0 %1731
        %1733 = vrot.lane.b32.xlu0 %v1726, 110
        %v1734 = vpop.permute.xlu0 %1733
        %1735 = vrot.lane.b32.xlu0 %v1727, 110
        %v1736 = vpop.permute.xlu0 %1735
        %v1737 = vsel %vm971, %v1732, %v1734
        %v1738 = vsel %vm971, %v1734, %v1736
        %1742 = vst [vmem:[#allocation3 + $0x48] sm:$0xff] %v1737
        %1743 = vst [vmem:[#allocation3 + $0x50] sm:$0xff] %v1738
        %1744 = vst.msk [vmem:[#allocation3 + $0x58] sm:$0xff] %vm915, %v1736
        %v1745 = vld [vmem:[#allocation2] sm:$0xff]
        %v1746 = vld [vmem:[#allocation2 + $0x8] sm:$0xff]
        %v1747 = vld [vmem:[#allocation2 + $0x10] sm:$0xff]
        %1751 = vrot.lane.b32.xlu0 %v1745, 109
        %v1752 = vpop.permute.xlu0 %1751
        %1753 = vrot.lane.b32.xlu0 %v1746, 109
        %v1754 = vpop.permute.xlu0 %1753
        %1755 = vrot.lane.b32.xlu0 %v1747, 109
        %v1756 = vpop.permute.xlu0 %1755
        %v1757 = vsel %vm992, %v1752, %v1754
        %v1758 = vsel %vm992, %v1754, %v1756
        %1762 = vst [vmem:[#allocation3 + $0x60] sm:$0xff] %v1757
        %1763 = vst [vmem:[#allocation3 + $0x68] sm:$0xff] %v1758
        %1764 = vst.msk [vmem:[#allocation3 + $0x70] sm:$0xff] %vm915, %v1756
        %v1765 = vld [vmem:[#allocation2] sm:$0xff]
        %v1766 = vld [vmem:[#allocation2 + $0x8] sm:$0xff]
        %v1767 = vld [vmem:[#allocation2 + $0x10] sm:$0xff]
        %1771 = vrot.lane.b32.xlu0 %v1765, 108
        %v1772 = vpop.permute.xlu0 %1771
        %1773 = vrot.lane.b32.xlu0 %v1766, 108
        %v1774 = vpop.permute.xlu0 %1773
        %1775 = vrot.lane.b32.xlu0 %v1767, 108
        %v1776 = vpop.permute.xlu0 %1775
        %v1777 = vsel %vm1013, %v1772, %v1774
        %v1778 = vsel %vm1013, %v1774, %v1776
        %1782 = vst [vmem:[#allocation3 + $0x78] sm:$0xff] %v1777
        %1783 = vst [vmem:[#allocation3 + $0x80] sm:$0xff] %v1778
        %1784 = vst.msk [vmem:[#allocation3 + $0x88] sm:$0xff] %vm915, %v1776
        %v1785 = vld [vmem:[#allocation2] sm:$0xff]
        %v1786 = vld [vmem:[#allocation2 + $0x8] sm:$0xff]
        %v1787 = vld [vmem:[#allocation2 + $0x10] sm:$0xff]
        %1791 = vrot.lane.b32.xlu0 %v1785, 92
        %v1792 = vpop.permute.xlu0 %1791
        %1793 = vrot.lane.b32.xlu0 %v1786, 92
        %v1794 = vpop.permute.xlu0 %1793
        %1795 = vrot.lane.b32.xlu0 %v1787, 92
        %v1796 = vpop.permute.xlu0 %1795
        %v1797 = vsel %vm1034, %v1792, %v1794
        %v1798 = vsel %vm1034, %v1794, %v1796
        %1802 = vst [vmem:[#allocation3 + $0x90] sm:$0xff] %v1797
        %1803 = vst [vmem:[#allocation3 + $0x98] sm:$0xff] %v1798
        %1804 = vst.msk [vmem:[#allocation3 + $0xa0] sm:$0xff] %vm915, %v1796
        %v1805 = vld [vmem:[#allocation2] sm:$0xff]
        %v1806 = vld [vmem:[#allocation2 + $0x8] sm:$0xff]
        %v1807 = vld [vmem:[#allocation2 + $0x10] sm:$0xff]
        %1811 = vrot.lane.b32.xlu0 %v1805, 91
        %v1812 = vpop.permute.xlu0 %1811
        %1813 = vrot.lane.b32.xlu0 %v1806, 91
        %v1814 = vpop.permute.xlu0 %1813
        %1815 = vrot.lane.b32.xlu0 %v1807, 91
        %v1816 = vpop.permute.xlu0 %1815
        %v1817 = vsel %vm1055, %v1812, %v1814
        %v1818 = vsel %vm1055, %v1814, %v1816
        %1822 = vst [vmem:[#allocation3 + $0xa8] sm:$0xff] %v1817
        %1823 = vst [vmem:[#allocation3 + $0xb0] sm:$0xff] %v1818
        %1824 = vst.msk [vmem:[#allocation3 + $0xb8] sm:$0xff] %vm915, %v1816
        %v1825 = vld [vmem:[#allocation2] sm:$0xff]
        %v1826 = vld [vmem:[#allocation2 + $0x8] sm:$0xff]
        %v1827 = vld [vmem:[#allocation2 + $0x10] sm:$0xff]
        %1831 = vrot.lane.b32.xlu0 %v1825, 90
        %v1832 = vpop.permute.xlu0 %1831
        %1833 = vrot.lane.b32.xlu0 %v1826, 90
        %v1834 = vpop.permute.xlu0 %1833
        %1835 = vrot.lane.b32.xlu0 %v1827, 90
        %v1836 = vpop.permute.xlu0 %1835
        %v1837 = vsel %vm1076, %v1832, %v1834
        %v1838 = vsel %vm1076, %v1834, %v1836
        %1842 = vst [vmem:[#allocation3 + $0xc0] sm:$0xff] %v1837
        %1843 = vst [vmem:[#allocation3 + $0xc8] sm:$0xff] %v1838
        %1844 = vst.msk [vmem:[#allocation3 + $0xd0] sm:$0xff] %vm915, %v1836
        %v1845 = vld [vmem:[#allocation7] sm:$0xff]
        %v1846 = vld [vmem:[#allocation3] sm:$0xff]
        %v1847 = vld [vmem:[#allocation3 + $0x8] sm:$0xff]
        %v1848 = vld [vmem:[#allocation3 + $0x10] sm:$0xff]
        %v1849 = vld [vmem:[#allocation3 + $0x18] sm:$0xff]
        %v1850 = vld [vmem:[#allocation3 + $0x20] sm:$0xff]
        %v1851 = vld [vmem:[#allocation3 + $0x28] sm:$0xff]
        %v1852 = vld [vmem:[#allocation3 + $0x30] sm:$0xff]
        %v1853 = vld [vmem:[#allocation3 + $0x38] sm:$0xff]
        %v1854 = vld [vmem:[#allocation3 + $0x40] sm:$0xff]
        %v1855 = vld [vmem:[#allocation3 + $0x48] sm:$0xff]
        %v1856 = vld [vmem:[#allocation3 + $0x50] sm:$0xff]
        %v1857 = vld [vmem:[#allocation3 + $0x58] sm:$0xff]
        %v1858 = vld [vmem:[#allocation3 + $0x60] sm:$0xff]
        %v1859 = vld [vmem:[#allocation3 + $0x68] sm:$0xff]
        %v1860 = vld [vmem:[#allocation3 + $0x70] sm:$0xff]
        %v1861 = vld [vmem:[#allocation3 + $0x78] sm:$0xff]
        %v1862 = vld [vmem:[#allocation3 + $0x80] sm:$0xff]
        %v1863 = vld [vmem:[#allocation3 + $0x88] sm:$0xff]
        %v1864 = vld [vmem:[#allocation3 + $0x90] sm:$0xff]
        %v1865 = vld [vmem:[#allocation3 + $0x98] sm:$0xff]
        %v1866 = vld [vmem:[#allocation3 + $0xa0] sm:$0xff]
        %v1867 = vld [vmem:[#allocation3 + $0xa8] sm:$0xff]
        %v1868 = vld [vmem:[#allocation3 + $0xb0] sm:$0xff]
        %v1869 = vld [vmem:[#allocation3 + $0xb8] sm:$0xff]
        %v1870 = vld [vmem:[#allocation3 + $0xc0] sm:$0xff]
        %v1871 = vld [vmem:[#allocation3 + $0xc8] sm:$0xff]
        %v1872 = vld [vmem:[#allocation3 + $0xd0] sm:$0xff]
        %v1874 = vsel %vm1113, %v1845, 0
        %1876 = vmatprep.subr.mxu0 0.0
        %1877 = vmatpush1.msra.mxu0 0.0
        %1878 = vmatprep.subr.mxu0 0.0
        %1879 = vmatpush1.msra.mxu0 0.0
        %1880 = vmatprep.subr.mxu0 0.0
        %1881 = vmatpush1.msra.mxu0 0.0
        %1882 = vmatprep.subr.mxu0 0.0
        %1883 = vmatpush1.msra.mxu0 0.0
        %1884 = vmatprep.subr.mxu0 0.0
        %1885 = vmatpush1.msra.mxu0 0.0
        %1886 = vmatprep.subr.mxu0 0.0
        %1887 = vmatpush1.msra.mxu0 0.0
        %1888 = vmatprep.subr.mxu0 0.0
        %1889 = vmatpush1.msra.mxu0 0.0
        %1890 = vmatprep.subr.mxu0 %v1871
        %1891 = vmatpush1.msra.mxu0 %v1870
        %1892 = vmatprep.subr.mxu0 %v1868
        %1893 = vmatpush1.msra.mxu0 %v1867
        %1894 = vmatprep.subr.mxu0 %v1865
        %1895 = vmatpush1.msra.mxu0 %v1864
        %1896 = vmatprep.subr.mxu0 %v1862
        %1897 = vmatpush1.msra.mxu0 %v1861
        %1898 = vmatprep.subr.mxu0 %v1859
        %1899 = vmatpush1.msra.mxu0 %v1858
        %1900 = vmatprep.subr.mxu0 %v1856
        %1901 = vmatpush1.msra.mxu0 %v1855
        %1902 = vmatprep.subr.mxu0 %v1853
        %1903 = vmatpush1.msra.mxu0 %v1852
        %1904 = vmatprep.subr.mxu0 %v1850
        %1905 = vmatpush1.msra.mxu0 %v1849
        %1906 = vmatprep.subr.mxu0 %v1847
        %1907 = vmatpush1.msra.mxu0 %v1846
        %1908 = vmatprep.subr.mxu0 0.0
        %1909 = vmatpush2.msra.mxu0 0.0
        %1910 = vmatprep.subr.mxu0 0.0
        %1911 = vmatpush2.msra.mxu0 0.0
        %1912 = vmatprep.subr.mxu0 0.0
        %1913 = vmatpush2.msra.mxu0 0.0
        %1914 = vmatprep.subr.mxu0 0.0
        %1915 = vmatpush2.msra.mxu0 0.0
        %1916 = vmatprep.subr.mxu0 0.0
        %1917 = vmatpush2.msra.mxu0 0.0
        %1918 = vmatprep.subr.mxu0 0.0
        %1919 = vmatpush2.msra.mxu0 0.0
        %1920 = vmatprep.subr.mxu0 0.0
        %1921 = vmatpush2.msra.mxu0 0.0
        %1922 = vmatprep.subr.mxu0 0.0
        %1923 = vmatpush2.msra.mxu0 0.0
        %1924 = vmatprep.subr.mxu0 0.0
        %1925 = vmatpush2.msra.mxu0 0.0
        %1926 = vmatprep.subr.mxu0 0.0
        %1927 = vmatpush2.msra.mxu0 0.0
        %1928 = vmatprep.subr.mxu0 0.0
        %1929 = vmatpush2.msra.mxu0 0.0
        %1930 = vmatprep.subr.mxu0 0.0
        %1931 = vmatpush2.msra.mxu0 0.0
        %1932 = vmatprep.subr.mxu0 0.0
        %1933 = vmatpush2.msra.mxu0 0.0
        %1934 = vmatprep.subr.mxu0 0.0
        %1935 = vmatpush2.msra.mxu0 0.0
        %1936 = vmatprep.subr.mxu0 0.0
        %1937 = vmatpush2.msra.mxu0 0.0
        %1938 = vmatprep.subr.mxu0 0.0
        %1939 = vmatpush2.msra.mxu0 0.0
        %1940 = vmatprep.mubr.f32.mxu0 0.0
        %1941 = vmatmul.mubr.f32.gmra.mxu0 %v1874
        %v1942 = vpop.f32.mrf.mxu0
        %v1943 = vadd.f32 0.0, %v1942
        %v1944 = vpop.f32.mrf.mxu0
        %v1945 = vadd.f32 0.0, %v1944
        %1946 = vdwg.mxu0
        %1947 = vmatprep.subr.mxu0 0.0
        %1948 = vmatpush1.msra.mxu0 0.0
        %1949 = vmatprep.subr.mxu0 0.0
        %1950 = vmatpush1.msra.mxu0 0.0
        %1951 = vmatprep.subr.mxu0 0.0
        %1952 = vmatpush1.msra.mxu0 0.0
        %1953 = vmatprep.subr.mxu0 0.0
        %1954 = vmatpush1.msra.mxu0 0.0
        %1955 = vmatprep.subr.mxu0 0.0
        %1956 = vmatpush1.msra.mxu0 0.0
        %1957 = vmatprep.subr.mxu0 0.0
        %1958 = vmatpush1.msra.mxu0 0.0
        %1959 = vmatprep.subr.mxu0 0.0
        %1960 = vmatpush1.msra.mxu0 0.0
        %1961 = vmatprep.subr.mxu0 0.0
        %1962 = vmatpush1.msra.mxu0 %v1872
        %1963 = vmatprep.subr.mxu0 0.0
        %1964 = vmatpush1.msra.mxu0 %v1869
        %1965 = vmatprep.subr.mxu0 0.0
        %1966 = vmatpush1.msra.mxu0 %v1866
        %1967 = vmatprep.subr.mxu0 0.0
        %1968 = vmatpush1.msra.mxu0 %v1863
        %1969 = vmatprep.subr.mxu0 0.0
        %1970 = vmatpush1.msra.mxu0 %v1860
        %1971 = vmatprep.subr.mxu0 0.0
        %1972 = vmatpush1.msra.mxu0 %v1857
        %1973 = vmatprep.subr.mxu0 0.0
        %1974 = vmatpush1.msra.mxu0 %v1854
        %1975 = vmatprep.subr.mxu0 0.0
        %1976 = vmatpush1.msra.mxu0 %v1851
        %1977 = vmatprep.subr.mxu0 0.0
        %1978 = vmatpush1.msra.mxu0 %v1848
        %1979 = vmatprep.subr.mxu0 0.0
        %1980 = vmatpush2.msra.mxu0 0.0
        %1981 = vmatprep.subr.mxu0 0.0
        %1982 = vmatpush2.msra.mxu0 0.0
        %1983 = vmatprep.subr.mxu0 0.0
        %1984 = vmatpush2.msra.mxu0 0.0
        %1985 = vmatprep.subr.mxu0 0.0
        %1986 = vmatpush2.msra.mxu0 0.0
        %1987 = vmatprep.subr.mxu0 0.0
        %1988 = vmatpush2.msra.mxu0 0.0
        %1989 = vmatprep.subr.mxu0 0.0
        %1990 = vmatpush2.msra.mxu0 0.0
        %1991 = vmatprep.subr.mxu0 0.0
        %1992 = vmatpush2.msra.mxu0 0.0
        %1993 = vmatprep.subr.mxu0 0.0
        %1994 = vmatpush2.msra.mxu0 0.0
        %1995 = vmatprep.subr.mxu0 0.0
        %1996 = vmatpush2.msra.mxu0 0.0
        %1997 = vmatprep.subr.mxu0 0.0
        %1998 = vmatpush2.msra.mxu0 0.0
        %1999 = vmatprep.subr.mxu0 0.0
        %2000 = vmatpush2.msra.mxu0 0.0
        %2001 = vmatprep.subr.mxu0 0.0
        %2002 = vmatpush2.msra.mxu0 0.0
        %2003 = vmatprep.subr.mxu0 0.0
        %2004 = vmatpush2.msra.mxu0 0.0
        %2005 = vmatprep.subr.mxu0 0.0
        %2006 = vmatpush2.msra.mxu0 0.0
        %2007 = vmatprep.subr.mxu0 0.0
        %2008 = vmatpush2.msra.mxu0 0.0
        %2009 = vmatprep.subr.mxu0 0.0
        %2010 = vmatpush2.msra.mxu0 0.0
        %2011 = vmatprep.mubr.f32.mxu0 0.0
        %2012 = vmatmul.mubr.f32.gmra.mxu0 %v1874
        %v2013 = vpop.f32.mrf.mxu0
        %v2014 = vadd.f32 0.0, %v2013
        %v2015 = vpop.f32.mrf.mxu0
        %2016 = vdwg.mxu0
        %v2017 = vmax.f32 %v1943, 0.0
        %v2018 = vmax.f32 %v1945, 0.0
        %v2019 = vmax.f32 %v2014, 0.0
        %vm2020 = vcmask 130048
        %2021 = vst.msk [vmem:[%s339] sm:$0xff] %vm2020, %v2017
        %2023 = vrot.lane.b32.xlu0 %v2017, 126
        %v2024 = vpop.permute.xlu0 %2023
        %vm2026 = vcmask 261248
        %2027 = vst.msk [vmem:[%s339] sm:$0xff] %vm2026, %v2024
        %2028 = vrot.lane.b32.xlu0 %v2017, 124
        %v2029 = vpop.permute.xlu0 %2028
        %vm2031 = vcmask 392448
        %2032 = vst.msk [vmem:[%s339] sm:$0xff] %vm2031, %v2029
        %2033 = vrot.lane.b32.xlu0 %v2017, 122
        %v2034 = vpop.permute.xlu0 %2033
        %vm2036 = vcmask 523648
        %2037 = vst.msk [vmem:[%s339] sm:$0xff] %vm2036, %v2034
        %2038 = vrot.lane.b32.xlu0 %v2017, 120
        %v2039 = vpop.permute.xlu0 %2038
        %vm2041 = vcmask 654848
        %2042 = vst.msk [vmem:[%s339] sm:$0xff] %vm2041, %v2039
        %2043 = vrot.lane.b32.xlu0 %v2017, 118
        %v2044 = vpop.permute.xlu0 %2043
        %vm2046 = vcmask 786048
        %2047 = vst.msk [vmem:[%s339] sm:$0xff] %vm2046, %v2044
        %2048 = vrot.lane.b32.xlu0 %v2017, 116
        %v2049 = vpop.permute.xlu0 %2048
        %vm2051 = vcmask 917248
        %2052 = vst.msk [vmem:[%s339] sm:$0xff] %vm2051, %v2049
        %2054 = vrot.lane.b32.xlu0 %v2017, 114
        %v2055 = vpop.permute.xlu0 %2054
        %2056 = vrot.lane.b32.xlu0 %v2018, 114
        %v2057 = vpop.permute.xlu0 %2056
        %vm2058 = vcmask 932864
        %v2059 = vsel %vm2058, %v2055, %v2057
        %vm2061 = vcmask 1048448
        %2062 = vst.msk [vmem:[%s339] sm:$0xff] %vm2061, %v2059
        %2063 = vrot.lane.b32.xlu0 %v2018, 112
        %v2064 = vpop.permute.xlu0 %2063
        %2066 = vst.msk [vmem:[%s339 + $0x8] sm:$0xff] %vm2020, %v2064
        %2067 = vrot.lane.b32.xlu0 %v2018, 110
        %v2068 = vpop.permute.xlu0 %2067
        %2070 = vst.msk [vmem:[%s339 + $0x8] sm:$0xff] %vm2026, %v2068
        %2071 = vrot.lane.b32.xlu0 %v2018, 108
        %v2072 = vpop.permute.xlu0 %2071
        %2074 = vst.msk [vmem:[%s339 + $0x8] sm:$0xff] %vm2031, %v2072
        %2075 = vrot.lane.b32.xlu0 %v2018, 106
        %v2076 = vpop.permute.xlu0 %2075
        %2078 = vst.msk [vmem:[%s339 + $0x8] sm:$0xff] %vm2036, %v2076
        %2079 = vrot.lane.b32.xlu0 %v2018, 104
        %v2080 = vpop.permute.xlu0 %2079
        %2082 = vst.msk [vmem:[%s339 + $0x8] sm:$0xff] %vm2041, %v2080
        %2083 = vrot.lane.b32.xlu0 %v2018, 102
        %v2084 = vpop.permute.xlu0 %2083
        %2086 = vst.msk [vmem:[%s339 + $0x8] sm:$0xff] %vm2046, %v2084
        %2088 = vrot.lane.b32.xlu0 %v2018, 100
        %v2089 = vpop.permute.xlu0 %2088
        %2090 = vrot.lane.b32.xlu0 %v2019, 100
        %v2091 = vpop.permute.xlu0 %2090
        %vm2092 = vcmask 818176
        %v2093 = vsel %vm2092, %v2089, %v2091
        %2095 = vst.msk [vmem:[%s339 + $0x8] sm:$0xff] %vm2051, %v2093
        %2096 = vrot.lane.b32.xlu0 %v2019, 98
        %v2097 = vpop.permute.xlu0 %2096
        %2099 = vst.msk [vmem:[%s339 + $0x8] sm:$0xff] %vm2061, %v2097
        %s2100 = sand.u32 %s210, 1
        %s2101 = scalar_lea.sflag [#allocation6], %s2100
        %s2102 = sand.u32 %s210, 1
        %s2103 = smul.addr %s2102, 16
        %s2104 = scalar_lea.vmem [#allocation9], %s2103
        // Predicated region
        $region61: #{tpu_custom_call.1} parent=51 // pred_check
          %p2105 = pneg %p220
        $region62: #{tpu_custom_call.1} parent=51 // pred_check_branch
          %2107 = sbr.rel (%p2105) target = $region64
        $region63: #{tpu_custom_call.1} parent=51 // pred_region
          %s2109 = ssub.s32 256, 256
          %2110 = vsyncadd %s2101, %s2109
          %s2111 = smul.addr %s24, 2
          %s2112 = smul.addr %s2111, 128
          %s2113 = scalar_lea.hbm %s8, %s2112
          %s2115 = sshll.u32 %s2104, 4
          %s2116 = int_to_ptr.vmem [resolvable:$true] %s2115
          %2118 = dma.vmem_to_hbm [thread:$0]  %s2116, 256, %s2113, %s2101
        $region64: #{tpu_custom_call.1} parent=51 // pred_fallthru
          _
      $region52: #{tpu_custom_call.1} parent=5 // pred_fallthru
        _
      %p2119 = scmp.le.s32.totalorder 2, %s19
      // Predicated region
      $region65: #{tpu_custom_call.1} parent=5 // pred_check
        %p2120 = pneg %p2119
      $region66: #{tpu_custom_call.1} parent=5 // pred_check_branch
        %2122 = sbr.rel (%p2120) target = $region68
      $region67: #{tpu_custom_call.1} parent=5 // pred_region
        %s2123 = ssub.s32 %s19, 2
        // Predicated region
        $region69: #{tpu_custom_call.1} parent=67 // pred_check
          %p2124 = pneg %p226
        $region70: #{tpu_custom_call.1} parent=67 // pred_check_branch
          %2126 = sbr.rel (%p2124) target = $region72
        $region71: #{tpu_custom_call.1} parent=67 // pred_region
          %s2127 = sand.u32 %s211, 1
          %s2128 = scalar_lea.sflag [#allocation6], %s2127
          %s2129 = sand.u32 %s211, 1
          %s2130 = smul.addr %s2129, 16
          %s2131 = scalar_lea.vmem [#allocation9], %s2130
          %2132 = dma.done %s2128, 256
        $region72: #{tpu_custom_call.1} parent=67 // pred_fallthru
          _
      $region68: #{tpu_custom_call.1} parent=5 // pred_fallthru
        _
    $region6: #{tpu_custom_call.1} parent=1 // loop_footer
      %s23 = sadd.s32 1, %s19
    $region7: #{tpu_custom_call.1} parent=1 // loop_footer_branch
      %18 = sbr.rel target = $region3
    $region8: #{tpu_custom_call.1} parent=1 // loop_exit
      _
    %2133 = vsyncpa [#allocation5], 1
    %s2134 = scalar_lea.sflag [#allocation5], 1
    %2135 = vsyncpa %s2134, 1
    %2136 = vsyncpa [#allocation8], 1
    %2137 = vsyncpa [#allocation6], 1
    %s2138 = scalar_lea.sflag [#allocation6], 1
    %2139 = vsyncpa %s2138, 1

</llo_original>
